<compile_context>
chip_gen: v5e
topology: v5e:2x2
jax: 0.10.0
libtpu: 0.0.40
codegen_flags: <defaults>
</compile_context>

<pallas_src>
import functools

import jax
import jax.numpy as jnp
from jax.experimental import pallas as pl
from jax.experimental.pallas import tpu as pltpu

LANE = 128                        # hidden size is padded to a multiple of this
SUBLANE = 8                       # f32 sublane width: batch padded to this
VMEM_LIMIT = 64 * 1024 * 1024     # raise scoped-VMEM ceiling (defaults 16/32 MiB)


def _round_up(x, m):
    return (x + m - 1) // m * m


# ----------------------------------------------------------------------------
# Kernels
# ----------------------------------------------------------------------------
def matmul_bias_kernel(a_ref, w_ref, b_ref, out_ref):
    """out = a @ w + b for one M-tile (f32 accumulation)."""
    out_ref[...] = (
        jnp.dot(a_ref[...], w_ref[...], preferred_element_type=jnp.float32)
        + b_ref[...]).astype(out_ref.dtype)


def lstm_layer_kernel(x_ref, w_ih_ref, w_hh_ref, b_ref, seq_ref, h_last_ref,
                      h_sc, c_sc, gx_sc, *, tile_t, t_real, unroll, needs_mask):
    """One LSTM layer: fused input projection + recurrence over one T-chunk.

    x_ref     : (tile_t*Bp, I)   bf16  time-major chunk of the layer input
    w_ih_ref  : (I, 4Hp)         bf16  resident, pre-transposed, gates [i|f|o|g]
    w_hh_ref  : (Hp, 4Hp)        bf16  resident, pre-transposed
    b_ref     : (1, 4Hp)         f32   b_ih + b_hh (padded gate cols are zero)
    seq_ref   : (tile_t*Bp, Hp)  bf16  per-step hidden states (output)
    h_last_ref: (Bp, Hp)         f32   hidden state at the last real step (output)
    h_sc/c_sc : (Bp, Hp)         f32   carries across T-chunks
    gx_sc     : (tile_t*Bp, 4Hp) f32   chunk-wide input projection scratch
    """
    chunk = pl.program_id(0)

    @pl.when(chunk == 0)
    def _():
        h_sc[...] = jnp.zeros_like(h_sc)
        c_sc[...] = jnp.zeros_like(c_sc)

    Bp, Hp = h_sc.shape

    # Fused input projection: ONE big MXU matmul per chunk (bias folded in).
    gx_sc[...] = (jnp.dot(x_ref[...], w_ih_ref[...],
                          preferred_element_type=jnp.float32) + b_ref[...])

    # Resident recurrent weight, loaded once per chunk.
    # TODO(synk): for small batch, hold W_hh^T in the MXU across the unrolled
    # chunk (pltpu.matmul_push_rhs / matmul_acc_lhs / matmul_pop).
    w_hh = w_hh_ref[...]
    t0 = chunk * tile_t

    def step(t, carry):
        h_prev, c_prev = carry                                   # f32 (Bp, Hp)
        row = pl.multiple_of(t * Bp, SUBLANE)
        gates = gx_sc[pl.ds(row, Bp), :] + jnp.dot(
            h_prev.astype(w_hh.dtype), w_hh,
            preferred_element_type=jnp.float32)                  # (Bp, 4Hp) f32
        # Packed gate order [i | f | o | g]: one wide sigmoid, one tanh.
        # (f32 gate math; on v6e/v7x these could run in bf16 on the EUP/VPU.)
        sig = jax.nn.sigmoid(gates[:, :3 * Hp])
        i_g = sig[:, 0 * Hp:1 * Hp]
        f_g = sig[:, 1 * Hp:2 * Hp]
        o_g = sig[:, 2 * Hp:3 * Hp]
        g_g = jnp.tanh(gates[:, 3 * Hp:])
        c_new = f_g * c_prev + i_g * g_g
        h_new = o_g * jnp.tanh(c_new)
        if needs_mask:
            # Padded tail timesteps (T not divisible by tile_t): freeze carries.
            keep = ((t0 + t) < t_real).astype(jnp.float32)
            c_new = keep * c_new + (1.0 - keep) * c_prev
            h_new = keep * h_new + (1.0 - keep) * h_prev
        seq_ref[pl.ds(row, Bp), :] = h_new.astype(seq_ref.dtype)
        return h_new, c_new

    h, c = jax.lax.fori_loop(0, tile_t, step, (h_sc[...], c_sc[...]),
                             unroll=unroll)
    h_sc[...] = h
    c_sc[...] = c
    h_last_ref[...] = h            # resident output block: one HBM writeback


# ----------------------------------------------------------------------------
# Wrappers
# ----------------------------------------------------------------------------
def matmul_bias(a, w, b, out_dtype=jnp.float32, tile_m=512):
    """a: (M, K), w: (K, N), b: (1, N) -> (M, N). Tiled & pipelined over M.

    K and N are kept whole per block (K = hidden size fits VMEM at these
    sizes); for very large K add a K grid axis with an f32 VMEM accumulator.
    """
    M, K = a.shape
    N = w.shape[1]
    tm = min(tile_m, _round_up(M, SUBLANE))
    Mp = _round_up(M, tm)
    if Mp != M:
        a = jnp.pad(a, ((0, Mp - M), (0, 0)))
    out = pl.pallas_call(
        matmul_bias_kernel,
        out_shape=jax.ShapeDtypeStruct((Mp, N), out_dtype),
        grid_spec=pltpu.PrefetchScalarGridSpec(
            num_scalar_prefetch=0,
            grid=(Mp // tm,),
            in_specs=[pl.BlockSpec((tm, K), lambda i: (i, 0)),
                      pl.BlockSpec((K, N), lambda i: (0, 0)),
                      pl.BlockSpec((1, N), lambda i: (0, 0))],
            out_specs=pl.BlockSpec((tm, N), lambda i: (i, 0)),
        ),
        compiler_params=pltpu.CompilerParams(
            dimension_semantics=("parallel",),
            vmem_limit_bytes=VMEM_LIMIT),
    )(a, w, b)
    return out[:M] if Mp != M else out


def _pick_tile_t(T, Bp, I, Hp, budget_bytes=8 * 1024 * 1024):
    """Chunk length from a VMEM budget (conservative enough for v7x's 64 MiB)."""
    # Per-timestep bytes of chunk-sized buffers:
    #   x chunk (bf16, double-buffered) + seq out (bf16, double-buffered)
    #   + gx scratch (f32, single buffer)
    per_t = Bp * (2 * I * 2 + 2 * Hp * 2 + 4 * Hp * 4)
    return int(max(1, min(T, budget_bytes // per_t, 64)))


def lstm_layer(x2d, w_ihT, w_hhT, b, *, seq_len, batch_p, tile_t=None, unroll=8):
    """One LSTM layer.  x2d: (T*Bp, I) bf16 -> (seq2d (T*Bp, Hp) bf16,
    h_last (Bp, Hp) f32)."""
    T, Bp = seq_len, batch_p
    I = x2d.shape[-1]
    Hp = w_hhT.shape[0]
    G = 4 * Hp
    if tile_t is None:
        tile_t = _pick_tile_t(T, Bp, I, Hp)
    tile_t = min(tile_t, T)
    num_chunks = -(-T // tile_t)                       # cdiv, no degrade-to-1
    Tp = num_chunks * tile_t
    if Tp != T:
        x2d = jnp.pad(x2d, ((0, (Tp - T) * Bp), (0, 0)))
    unroll_eff = max(1, min(unroll, tile_t))           # decoupled from tile_t

    kernel = functools.partial(lstm_layer_kernel, tile_t=tile_t, t_real=T,
                               unroll=unroll_eff, needs_mask=(Tp != T))

    seq2d, h_last = pl.pallas_call(
        kernel,
        out_shape=(jax.ShapeDtypeStruct((Tp * Bp, Hp), jnp.bfloat16),
                   jax.ShapeDtypeStruct((Bp, Hp), jnp.float32)),
        grid_spec=pltpu.PrefetchScalarGridSpec(
            num_scalar_prefetch=0,
            grid=(num_chunks,),
            in_specs=[
                pl.BlockSpec((tile_t * Bp, I), lambda c: (c, 0)),   # streamed x
                # Resident weight/bias blocks (constant block index).
                # TODO(synk): on v7x single-buffer these via pipeline_mode=
                # pl.Buffered(1) to halve their VMEM footprint.
                pl.BlockSpec((I, G), lambda c: (0, 0)),
                pl.BlockSpec((Hp, G), lambda c: (0, 0)),
                pl.BlockSpec((1, G), lambda c: (0, 0)),
            ],
            out_specs=(
                pl.BlockSpec((tile_t * Bp, Hp), lambda c: (c, 0)),
                pl.BlockSpec((Bp, Hp), lambda c: (0, 0)),
            ),
            scratch_shapes=[
                pltpu.VMEM((Bp, Hp), jnp.float32),             # h carry
                pltpu.VMEM((Bp, Hp), jnp.float32),             # c carry
                pltpu.VMEM((tile_t * Bp, G), jnp.float32),     # gx chunk
            ],
        ),
        # Sequential in time.  TODO(synk): on v7x add a leading parallel
        # batch-split grid axis (per-half carries) to use both TensorCores.
        compiler_params=pltpu.CompilerParams(
            dimension_semantics=("arbitrary",),
            vmem_limit_bytes=VMEM_LIMIT),
    )(x2d, w_ihT, w_hhT, b)

    if Tp != T:
        seq2d = seq2d[:T * Bp]
    return seq2d, h_last


@functools.partial(jax.jit, static_argnames=("tile_t", "unroll"))
def lstm_forward(x, padded_params, tile_t=None, unroll=8):
    """Full module forward: stacked LSTM (zero init state) -> fc(h_n).

    x: (seq_len, batch, input_size) f32
    returns: (num_layers, batch, output_size) f32
    """
    T, B, _ = x.shape
    Bp = _round_up(B, SUBLANE)         # pad batch to the f32 sublane width
    if Bp != B:
        x = jnp.pad(x, ((0, 0), (0, Bp - B), (0, 0)))
    seq2d = x.reshape(T * Bp, -1).astype(jnp.bfloat16)
    h_lasts = []
    # TODO(synk): when T*Bp*Hp*2 bytes fits VMEM, fuse the layer loop into one
    # kernel and keep the sequence resident across layers.
    for (w_ihT, w_hhT, b) in padded_params["lstm"]:
        seq2d, h_last = lstm_layer(seq2d, w_ihT, w_hhT, b,
                                   seq_len=T, batch_p=Bp,
                                   tile_t=tile_t, unroll=unroll)
        h_lasts.append(h_last)         # f32 straight from the carry scratch
    h_n = jnp.stack(h_lasts, axis=0)                    # (L, Bp, Hp) f32
    L, _, Hp = h_n.shape
    # fc in f32 (tiny): keeps the final projection of h_n at full precision.
    fc_out = matmul_bias(h_n.reshape(L * Bp, Hp),
                         padded_params["fc_wT"], padded_params["fc_b"])
    return fc_out.reshape(L, Bp, -1)[:, :B]


# ----------------------------------------------------------------------------
# Parameters.  Logical weights are stored PRE-TRANSPOSED with gate columns
# packed as [i | f | o | g]: W_ih^T (in, 4H), W_hh^T (H, 4H), fc^T (H, O).
# prepare_params() pads H -> Hp (multiple of 128) with zero weights/bias in the
# padded gate columns/rows, so padded hidden units provably stay 0.
# ----------------------------------------------------------------------------
def init_params(key, input_size, hidden_size, output_size, num_layers):
    bound = 1.0 / float(jnp.sqrt(hidden_size))
    lstm_params = []
    for layer in range(num_layers):
        in_sz = input_size if layer == 0 else hidden_size
        key, k1, k2, k3, k4 = jax.random.split(key, 5)
        w_ihT = jax.random.uniform(k1, (in_sz, 4 * hidden_size),
                                   jnp.float32, -bound, bound)
        w_hhT = jax.random.uniform(k2, (hidden_size, 4 * hidden_size),
                                   jnp.float32, -bound, bound)
        b_ih = jax.random.uniform(k3, (4 * hidden_size,),
                                  jnp.float32, -bound, bound)
        b_hh = jax.random.uniform(k4, (4 * hidden_size,),
                                  jnp.float32, -bound, bound)
        lstm_params.append((w_ihT, w_hhT, (b_ih + b_hh).reshape(1, -1)))
    key, k5, k6 = jax.random.split(key, 3)
    fc_wT = jax.random.uniform(k5, (hidden_size, output_size),
                               jnp.float32, -bound, bound)
    fc_b = jax.random.uniform(k6, (output_size,),
                              jnp.float32, -bound, bound).reshape(1, -1)
    return {"lstm": lstm_params, "fc_wT": fc_wT, "fc_b": fc_b}


def _pad_gate_cols(w, H, Hp):
    """(rows, 4H) packed [i|f|o|g] -> (rows, 4Hp), zero-filled per-gate padding."""
    rows = w.shape[0]
    out = jnp.zeros((rows, 4 * Hp), w.dtype)
    for g in range(4):
        out = out.at[:, g * Hp:g * Hp + H].set(w[:, g * H:(g + 1) * H])
    return out


def prepare_params(params):
    """Pad hidden to a multiple of 128 and pre-cast matmul operands to bf16."""
    H = params["lstm"][0][1].shape[0]
    Hp = _round_up(H, LANE)
    lstm_p = []
    for layer, (w_ihT, w_hhT, b) in enumerate(params["lstm"]):
        w_ih = _pad_gate_cols(w_ihT, H, Hp)
        if layer > 0:                    # layer >0 input features are padded hidden
            w_ih = jnp.pad(w_ih, ((0, Hp - H), (0, 0)))
        w_hh = jnp.pad(_pad_gate_cols(w_hhT, H, Hp), ((0, Hp - H), (0, 0)))
        b_p = _pad_gate_cols(b, H, Hp)
        lstm_p.append((w_ih.astype(jnp.bfloat16), w_hh.astype(jnp.bfloat16),
                       b_p.astype(jnp.float32)))
    fc_wT = jnp.pad(params["fc_wT"], ((0, Hp - H), (0, 0)))
    return {"lstm": lstm_p, "fc_wT": fc_wT, "fc_b": params["fc_b"]}


# ----------------------------------------------------------------------------
# Pure-JAX f32 reference (same [i|f|o|g] packing; kernels use bf16 -> loose tol)
# ----------------------------------------------------------------------------
def reference_forward(x, params):
    seq = x
    h_lasts = []
    for (w_ihT, w_hhT, b) in params["lstm"]:
        T, B, _ = seq.shape
        H = w_hhT.shape[0]
        h = jnp.zeros((B, H), jnp.float32)
        c = jnp.zeros((B, H), jnp.float32)
        outs = []
        for t in range(T):
            gates = seq[t] @ w_ihT + h @ w_hhT + b
            i_g = jax.nn.sigmoid(gates[:, 0 * H:1 * H])
            f_g = jax.nn.sigmoid(gates[:, 1 * H:2 * H])
            o_g = jax.nn.sigmoid(gates[:, 2 * H:3 * H])
            g_g = jnp.tanh(gates[:, 3 * H:4 * H])
            c = f_g * c + i_g * g_g
            h = o_g * jnp.tanh(c)
            outs.append(h)
        seq = jnp.stack(outs, axis=0)
        h_lasts.append(h)
    h_n = jnp.stack(h_lasts, axis=0)
    return h_n @ params["fc_wT"] + params["fc_b"]


# ----------------------------------------------------------------------------
if __name__ == "__main__":
    seq_len, batch = 8, 2
    input_size, hidden_size, output_size, num_layers = 16, 32, 10, 2

    key = jax.random.PRNGKey(0)
    kx, kp = jax.random.split(key)
    x = jax.random.normal(kx, (seq_len, batch, input_size), jnp.float32)
    params = init_params(kp, input_size, hidden_size, output_size, num_layers)
    padded = prepare_params(params)

    out = jax.block_until_ready(lstm_forward(x, padded))
    ref = reference_forward(x, params)

    assert out.shape == (num_layers, batch, output_size), out.shape
    err = float(jnp.max(jnp.abs(out - ref)))
    # bf16 matmul operands (f32 accumulation) -> loosened tolerance vs f32 ref.
    assert err < 5e-2, f"max err {err}"

    # Exercise the cdiv + masked-tail path (T=8 not divisible by tile_t=3) and
    # a partial unroll.
    out2 = jax.block_until_ready(lstm_forward(x, padded, tile_t=3, unroll=2))
    err2 = float(jnp.max(jnp.abs(out2 - ref)))
    assert err2 < 5e-2, f"max err (tiled) {err2}"

    print("KERNEL_OK")
</pallas_src>

<mosaic_0001>
module attributes {stable_mosaic.version = 11 : i64} {
  func.func @lstm_layer_kernel(%arg0: i32, %arg1: memref<64x128xbf16, #tpu.memory_space<vmem>>, %arg2: memref<128x512xbf16, #tpu.memory_space<vmem>>, %arg3: memref<128x512xbf16, #tpu.memory_space<vmem>>, %arg4: memref<1x512xf32, #tpu.memory_space<vmem>>, %arg5: memref<64x128xbf16, #tpu.memory_space<vmem>>, %arg6: memref<8x128xf32, #tpu.memory_space<vmem>>, %arg7: memref<8x128xf32, #tpu.memory_space<vmem>>, %arg8: memref<8x128xf32, #tpu.memory_space<vmem>>, %arg9: memref<64x512xf32, #tpu.memory_space<vmem>>) attributes {dimension_semantics = [#tpu.dimension_semantics<arbitrary>], iteration_bounds = array<i64: 1>, scalar_prefetch = 0 : i64, scratch_operands = 3 : i64, tpu.core_type = #tpu.core_type<tc>, window_params = [{transform_indices = @transform_0, window_bounds = array<i64: 64, 128>}, {pipeline_mode = #tpu.pipeline_mode<synchronous>, transform_indices = @transform_1, window_bounds = array<i64: 128, 512>}, {pipeline_mode = #tpu.pipeline_mode<synchronous>, transform_indices = @transform_2, window_bounds = array<i64: 128, 512>}, {pipeline_mode = #tpu.pipeline_mode<synchronous>, transform_indices = @transform_3, window_bounds = array<i64: 1, 512>}, {transform_indices = @transform_4, window_bounds = array<i64: 64, 128>}, {pipeline_mode = #tpu.pipeline_mode<synchronous>, transform_indices = @transform_5, window_bounds = array<i64: 8, 128>}]} {
    %c0_i32 = arith.constant 0 : i32
    %0 = arith.cmpi eq, %arg0, %c0_i32 : i32
    %1 = arith.extui %0 : i1 to i32
    %c0_i32_0 = arith.constant 0 : i32
    %2 = arith.cmpi ne, %1, %c0_i32_0 : i32
    scf.if %2 {
      %cst_61 = arith.constant 0.000000e+00 : f32
      %224 = vector.broadcast %cst_61 : f32 to vector<8x128xf32>
      %c0_62 = arith.constant 0 : index
      %c0_63 = arith.constant 0 : index
      %225 = vector.load %arg7[%c0_62, %c0_63] : memref<8x128xf32, #tpu.memory_space<vmem>>, vector<8x128xf32>
      tpu.vector_store %arg7[%c0_62, %c0_63], %224 {strides = array<i32>} : memref<8x128xf32, #tpu.memory_space<vmem>>, vector<8x128xf32>,
      %cst_64 = arith.constant 0.000000e+00 : f32
      %226 = vector.broadcast %cst_64 : f32 to vector<8x128xf32>
      %c0_65 = arith.constant 0 : index
      %c0_66 = arith.constant 0 : index
      %227 = vector.load %arg8[%c0_65, %c0_66] : memref<8x128xf32, #tpu.memory_space<vmem>>, vector<8x128xf32>
      tpu.vector_store %arg8[%c0_65, %c0_66], %226 {strides = array<i32>} : memref<8x128xf32, #tpu.memory_space<vmem>>, vector<8x128xf32>,
    } else {
    }
    %c0 = arith.constant 0 : index
    %c0_1 = arith.constant 0 : index
    %3 = vector.load %arg1[%c0, %c0_1] : memref<64x128xbf16, #tpu.memory_space<vmem>>, vector<64x128xbf16>
    %c0_2 = arith.constant 0 : index
    %c0_3 = arith.constant 0 : index
    %4 = vector.load %arg2[%c0_2, %c0_3] : memref<128x512xbf16, #tpu.memory_space<vmem>>, vector<128x512xbf16>
    %cst = arith.constant dense<0.000000e+00> : vector<64x512xf32>
    %5 = tpu.matmul %3, %4, %cst {dimension_numbers = #tpu.dot_dimension_numbers<[1], [0], [0], [1], [0, 0, 1, 1], [], []>} : vector<64x128xbf16>, vector<128x512xbf16>, vector<64x512xf32> -> vector<64x512xf32>
    %c0_4 = arith.constant 0 : index
    %c0_5 = arith.constant 0 : index
    %6 = vector.load %arg4[%c0_4, %c0_5] : memref<1x512xf32, #tpu.memory_space<vmem>>, vector<1x512xf32>
    %7 = vector.broadcast %6 : vector<1x512xf32> to vector<64x512xf32>
    %8 = arith.addf %5, %7 : vector<64x512xf32>
    %c0_6 = arith.constant 0 : index
    %c0_7 = arith.constant 0 : index
    %9 = vector.load %arg9[%c0_6, %c0_7] : memref<64x512xf32, #tpu.memory_space<vmem>>, vector<64x512xf32>
    tpu.vector_store %arg9[%c0_6, %c0_7], %8 {strides = array<i32>} : memref<64x512xf32, #tpu.memory_space<vmem>>, vector<64x512xf32>,
    %c0_8 = arith.constant 0 : index
    %c0_9 = arith.constant 0 : index
    %10 = vector.load %arg3[%c0_8, %c0_9] : memref<128x512xbf16, #tpu.memory_space<vmem>>, vector<128x512xbf16>
    %c0_10 = arith.constant 0 : index
    %c0_11 = arith.constant 0 : index
    %11 = vector.load %arg7[%c0_10, %c0_11] : memref<8x128xf32, #tpu.memory_space<vmem>>, vector<8x128xf32>
    %c0_12 = arith.constant 0 : index
    %c0_13 = arith.constant 0 : index
    %12 = vector.load %arg8[%c0_12, %c0_13] : memref<8x128xf32, #tpu.memory_space<vmem>>, vector<8x128xf32>
    %c0_i32_14 = arith.constant 0 : i32
    %c8_i32 = arith.constant 8 : i32
    %13 = arith.muli %c0_i32_14, %c8_i32 : i32
    %14 = tpu.assume_multiple %13, 8 : i32
    %15 = arith.index_cast %14 : i32 to index
    %c0_15 = arith.constant 0 : index
    %16 = vector.load %arg9[%15, %c0_15] : memref<64x512xf32, #tpu.memory_space<vmem>>, vector<8x512xf32>
    %17 = arith.truncf %11 : vector<8x128xf32> to vector<8x128xbf16>
    %cst_16 = arith.constant dense<0.000000e+00> : vector<8x512xf32>
    %18 = tpu.matmul %17, %10, %cst_16 {dimension_numbers = #tpu.dot_dimension_numbers<[1], [0], [0], [1], [0, 0, 1, 1], [], []>} : vector<8x128xbf16>, vector<128x512xbf16>, vector<8x512xf32> -> vector<8x512xf32>
    %19 = arith.addf %16, %18 : vector<8x512xf32>
    %20 = vector.extract_strided_slice %19 {offsets = [0, 0], sizes = [8, 384], strides = [1, 1]} : vector<8x512xf32> to vector<8x384xf32>
    %21 = arith.negf %20 : vector<8x384xf32>
    %22 = math.exp %21 : vector<8x384xf32>
    %cst_17 = arith.constant 1.000000e+00 : f32
    %23 = vector.broadcast %cst_17 : f32 to vector<8x384xf32>
    %24 = arith.addf %23, %22 : vector<8x384xf32>
    %25 = arith.divf %23, %24 : vector<8x384xf32>
    %26 = vector.extract_strided_slice %25 {offsets = [0, 0], sizes = [8, 128], strides = [1, 1]} : vector<8x384xf32> to vector<8x128xf32>
    %27 = vector.extract_strided_slice %25 {offsets = [0, 128], sizes = [8, 128], strides = [1, 1]} : vector<8x384xf32> to vector<8x128xf32>
    %28 = vector.extract_strided_slice %25 {offsets = [0, 256], sizes = [8, 128], strides = [1, 1]} : vector<8x384xf32> to vector<8x128xf32>
    %29 = vector.extract_strided_slice %19 {offsets = [0, 384], sizes = [8, 128], strides = [1, 1]} : vector<8x512xf32> to vector<8x128xf32>
    %30 = math.tanh %29 : vector<8x128xf32>
    %31 = arith.mulf %27, %12 : vector<8x128xf32>
    %32 = arith.mulf %26, %30 : vector<8x128xf32>
    %33 = arith.addf %31, %32 : vector<8x128xf32>
    %34 = math.tanh %33 : vector<8x128xf32>
    %35 = arith.mulf %28, %34 : vector<8x128xf32>
    %36 = arith.truncf %35 : vector<8x128xf32> to vector<8x128xbf16>
    %37 = arith.index_cast %14 : i32 to index
    %c0_18 = arith.constant 0 : index
    %38 = vector.load %arg5[%37, %c0_18] : memref<64x128xbf16, #tpu.memory_space<vmem>>, vector<8x128xbf16>
    tpu.vector_store %arg5[%37, %c0_18], %36 {strides = array<i32>} : memref<64x128xbf16, #tpu.memory_space<vmem>>, vector<8x128xbf16>,
    %c1_i32 = arith.constant 1 : i32
    %c8_i32_19 = arith.constant 8 : i32
    %39 = arith.muli %c1_i32, %c8_i32_19 : i32
    %40 = tpu.assume_multiple %39, 8 : i32
    %41 = arith.index_cast %40 : i32 to index
    %c0_20 = arith.constant 0 : index
    %42 = vector.load %arg9[%41, %c0_20] : memref<64x512xf32, #tpu.memory_space<vmem>>, vector<8x512xf32>
    %43 = arith.truncf %35 : vector<8x128xf32> to vector<8x128xbf16>
    %cst_21 = arith.constant dense<0.000000e+00> : vector<8x512xf32>
    %44 = tpu.matmul %43, %10, %cst_21 {dimension_numbers = #tpu.dot_dimension_numbers<[1], [0], [0], [1], [0, 0, 1, 1], [], []>} : vector<8x128xbf16>, vector<128x512xbf16>, vector<8x512xf32> -> vector<8x512xf32>
    %45 = arith.addf %42, %44 : vector<8x512xf32>
    %46 = vector.extract_strided_slice %45 {offsets = [0, 0], sizes = [8, 384], strides = [1, 1]} : vector<8x512xf32> to vector<8x384xf32>
    %47 = arith.negf %46 : vector<8x384xf32>
    %48 = math.exp %47 : vector<8x384xf32>
    %cst_22 = arith.constant 1.000000e+00 : f32
    %49 = vector.broadcast %cst_22 : f32 to vector<8x384xf32>
    %50 = arith.addf %49, %48 : vector<8x384xf32>
    %51 = arith.divf %49, %50 : vector<8x384xf32>
    %52 = vector.extract_strided_slice %51 {offsets = [0, 0], sizes = [8, 128], strides = [1, 1]} : vector<8x384xf32> to vector<8x128xf32>
    %53 = vector.extract_strided_slice %51 {offsets = [0, 128], sizes = [8, 128], strides = [1, 1]} : vector<8x384xf32> to vector<8x128xf32>
    %54 = vector.extract_strided_slice %51 {offsets = [0, 256], sizes = [8, 128], strides = [1, 1]} : vector<8x384xf32> to vector<8x128xf32>
    %55 = vector.extract_strided_slice %45 {offsets = [0, 384], sizes = [8, 128], strides = [1, 1]} : vector<8x512xf32> to vector<8x128xf32>
    %56 = math.tanh %55 : vector<8x128xf32>
    %57 = arith.mulf %53, %33 : vector<8x128xf32>
    %58 = arith.mulf %52, %56 : vector<8x128xf32>
    %59 = arith.addf %57, %58 : vector<8x128xf32>
    %60 = math.tanh %59 : vector<8x128xf32>
    %61 = arith.mulf %54, %60 : vector<8x128xf32>
    %62 = arith.truncf %61 : vector<8x128xf32> to vector<8x128xbf16>
    %63 = arith.index_cast %40 : i32 to index
    %c0_23 = arith.constant 0 : index
    %64 = vector.load %arg5[%63, %c0_23] : memref<64x128xbf16, #tpu.memory_space<vmem>>, vector<8x128xbf16>
    tpu.vector_store %arg5[%63, %c0_23], %62 {strides = array<i32>} : memref<64x128xbf16, #tpu.memory_space<vmem>>, vector<8x128xbf16>,
    %c2_i32 = arith.constant 2 : i32
    %c8_i32_24 = arith.constant 8 : i32
    %65 = arith.muli %c2_i32, %c8_i32_24 : i32
    %66 = tpu.assume_multiple %65, 8 : i32
    %67 = arith.index_cast %66 : i32 to index
    %c0_25 = arith.constant 0 : index
    %68 = vector.load %arg9[%67, %c0_25] : memref<64x512xf32, #tpu.memory_space<vmem>>, vector<8x512xf32>
    %69 = arith.truncf %61 : vector<8x128xf32> to vector<8x128xbf16>
    %cst_26 = arith.constant dense<0.000000e+00> : vector<8x512xf32>
    %70 = tpu.matmul %69, %10, %cst_26 {dimension_numbers = #tpu.dot_dimension_numbers<[1], [0], [0], [1], [0, 0, 1, 1], [], []>} : vector<8x128xbf16>, vector<128x512xbf16>, vector<8x512xf32> -> vector<8x512xf32>
    %71 = arith.addf %68, %70 : vector<8x512xf32>
    %72 = vector.extract_strided_slice %71 {offsets = [0, 0], sizes = [8, 384], strides = [1, 1]} : vector<8x512xf32> to vector<8x384xf32>
    %73 = arith.negf %72 : vector<8x384xf32>
    %74 = math.exp %73 : vector<8x384xf32>
    %cst_27 = arith.constant 1.000000e+00 : f32
    %75 = vector.broadcast %cst_27 : f32 to vector<8x384xf32>
    %76 = arith.addf %75, %74 : vector<8x384xf32>
    %77 = arith.divf %75, %76 : vector<8x384xf32>
    %78 = vector.extract_strided_slice %77 {offsets = [0, 0], sizes = [8, 128], strides = [1, 1]} : vector<8x384xf32> to vector<8x128xf32>
    %79 = vector.extract_strided_slice %77 {offsets = [0, 128], sizes = [8, 128], strides = [1, 1]} : vector<8x384xf32> to vector<8x128xf32>
    %80 = vector.extract_strided_slice %77 {offsets = [0, 256], sizes = [8, 128], strides = [1, 1]} : vector<8x384xf32> to vector<8x128xf32>
    %81 = vector.extract_strided_slice %71 {offsets = [0, 384], sizes = [8, 128], strides = [1, 1]} : vector<8x512xf32> to vector<8x128xf32>
    %82 = math.tanh %81 : vector<8x128xf32>
    %83 = arith.mulf %79, %59 : vector<8x128xf32>
    %84 = arith.mulf %78, %82 : vector<8x128xf32>
    %85 = arith.addf %83, %84 : vector<8x128xf32>
    %86 = math.tanh %85 : vector<8x128xf32>
    %87 = arith.mulf %80, %86 : vector<8x128xf32>
    %88 = arith.truncf %87 : vector<8x128xf32> to vector<8x128xbf16>
    %89 = arith.index_cast %66 : i32 to index
    %c0_28 = arith.constant 0 : index
    %90 = vector.load %arg5[%89, %c0_28] : memref<64x128xbf16, #tpu.memory_space<vmem>>, vector<8x128xbf16>
    tpu.vector_store %arg5[%89, %c0_28], %88 {strides = array<i32>} : memref<64x128xbf16, #tpu.memory_space<vmem>>, vector<8x128xbf16>,
    %c3_i32 = arith.constant 3 : i32
    %c8_i32_29 = arith.constant 8 : i32
    %91 = arith.muli %c3_i32, %c8_i32_29 : i32
    %92 = tpu.assume_multiple %91, 8 : i32
    %93 = arith.index_cast %92 : i32 to index
    %c0_30 = arith.constant 0 : index
    %94 = vector.load %arg9[%93, %c0_30] : memref<64x512xf32, #tpu.memory_space<vmem>>, vector<8x512xf32>
    %95 = arith.truncf %87 : vector<8x128xf32> to vector<8x128xbf16>
    %cst_31 = arith.constant dense<0.000000e+00> : vector<8x512xf32>
    %96 = tpu.matmul %95, %10, %cst_31 {dimension_numbers = #tpu.dot_dimension_numbers<[1], [0], [0], [1], [0, 0, 1, 1], [], []>} : vector<8x128xbf16>, vector<128x512xbf16>, vector<8x512xf32> -> vector<8x512xf32>
    %97 = arith.addf %94, %96 : vector<8x512xf32>
    %98 = vector.extract_strided_slice %97 {offsets = [0, 0], sizes = [8, 384], strides = [1, 1]} : vector<8x512xf32> to vector<8x384xf32>
    %99 = arith.negf %98 : vector<8x384xf32>
    %100 = math.exp %99 : vector<8x384xf32>
    %cst_32 = arith.constant 1.000000e+00 : f32
    %101 = vector.broadcast %cst_32 : f32 to vector<8x384xf32>
    %102 = arith.addf %101, %100 : vector<8x384xf32>
    %103 = arith.divf %101, %102 : vector<8x384xf32>
    %104 = vector.extract_strided_slice %103 {offsets = [0, 0], sizes = [8, 128], strides = [1, 1]} : vector<8x384xf32> to vector<8x128xf32>
    %105 = vector.extract_strided_slice %103 {offsets = [0, 128], sizes = [8, 128], strides = [1, 1]} : vector<8x384xf32> to vector<8x128xf32>
    %106 = vector.extract_strided_slice %103 {offsets = [0, 256], sizes = [8, 128], strides = [1, 1]} : vector<8x384xf32> to vector<8x128xf32>
    %107 = vector.extract_strided_slice %97 {offsets = [0, 384], sizes = [8, 128], strides = [1, 1]} : vector<8x512xf32> to vector<8x128xf32>
    %108 = math.tanh %107 : vector<8x128xf32>
    %109 = arith.mulf %105, %85 : vector<8x128xf32>
    %110 = arith.mulf %104, %108 : vector<8x128xf32>
    %111 = arith.addf %109, %110 : vector<8x128xf32>
    %112 = math.tanh %111 : vector<8x128xf32>
    %113 = arith.mulf %106, %112 : vector<8x128xf32>
    %114 = arith.truncf %113 : vector<8x128xf32> to vector<8x128xbf16>
    %115 = arith.index_cast %92 : i32 to index
    %c0_33 = arith.constant 0 : index
    %116 = vector.load %arg5[%115, %c0_33] : memref<64x128xbf16, #tpu.memory_space<vmem>>, vector<8x128xbf16>
    tpu.vector_store %arg5[%115, %c0_33], %114 {strides = array<i32>} : memref<64x128xbf16, #tpu.memory_space<vmem>>, vector<8x128xbf16>,
    %c4_i32 = arith.constant 4 : i32
    %c8_i32_34 = arith.constant 8 : i32
    %117 = arith.muli %c4_i32, %c8_i32_34 : i32
    %118 = tpu.assume_multiple %117, 8 : i32
    %119 = arith.index_cast %118 : i32 to index
    %c0_35 = arith.constant 0 : index
    %120 = vector.load %arg9[%119, %c0_35] : memref<64x512xf32, #tpu.memory_space<vmem>>, vector<8x512xf32>
    %121 = arith.truncf %113 : vector<8x128xf32> to vector<8x128xbf16>
    %cst_36 = arith.constant dense<0.000000e+00> : vector<8x512xf32>
    %122 = tpu.matmul %121, %10, %cst_36 {dimension_numbers = #tpu.dot_dimension_numbers<[1], [0], [0], [1], [0, 0, 1, 1], [], []>} : vector<8x128xbf16>, vector<128x512xbf16>, vector<8x512xf32> -> vector<8x512xf32>
    %123 = arith.addf %120, %122 : vector<8x512xf32>
    %124 = vector.extract_strided_slice %123 {offsets = [0, 0], sizes = [8, 384], strides = [1, 1]} : vector<8x512xf32> to vector<8x384xf32>
    %125 = arith.negf %124 : vector<8x384xf32>
    %126 = math.exp %125 : vector<8x384xf32>
    %cst_37 = arith.constant 1.000000e+00 : f32
    %127 = vector.broadcast %cst_37 : f32 to vector<8x384xf32>
    %128 = arith.addf %127, %126 : vector<8x384xf32>
    %129 = arith.divf %127, %128 : vector<8x384xf32>
    %130 = vector.extract_strided_slice %129 {offsets = [0, 0], sizes = [8, 128], strides = [1, 1]} : vector<8x384xf32> to vector<8x128xf32>
    %131 = vector.extract_strided_slice %129 {offsets = [0, 128], sizes = [8, 128], strides = [1, 1]} : vector<8x384xf32> to vector<8x128xf32>
    %132 = vector.extract_strided_slice %129 {offsets = [0, 256], sizes = [8, 128], strides = [1, 1]} : vector<8x384xf32> to vector<8x128xf32>
    %133 = vector.extract_strided_slice %123 {offsets = [0, 384], sizes = [8, 128], strides = [1, 1]} : vector<8x512xf32> to vector<8x128xf32>
    %134 = math.tanh %133 : vector<8x128xf32>
    %135 = arith.mulf %131, %111 : vector<8x128xf32>
    %136 = arith.mulf %130, %134 : vector<8x128xf32>
    %137 = arith.addf %135, %136 : vector<8x128xf32>
    %138 = math.tanh %137 : vector<8x128xf32>
    %139 = arith.mulf %132, %138 : vector<8x128xf32>
    %140 = arith.truncf %139 : vector<8x128xf32> to vector<8x128xbf16>
    %141 = arith.index_cast %118 : i32 to index
    %c0_38 = arith.constant 0 : index
    %142 = vector.load %arg5[%141, %c0_38] : memref<64x128xbf16, #tpu.memory_space<vmem>>, vector<8x128xbf16>
    tpu.vector_store %arg5[%141, %c0_38], %140 {strides = array<i32>} : memref<64x128xbf16, #tpu.memory_space<vmem>>, vector<8x128xbf16>,
    %c5_i32 = arith.constant 5 : i32
    %c8_i32_39 = arith.constant 8 : i32
    %143 = arith.muli %c5_i32, %c8_i32_39 : i32
    %144 = tpu.assume_multiple %143, 8 : i32
    %145 = arith.index_cast %144 : i32 to index
    %c0_40 = arith.constant 0 : index
    %146 = vector.load %arg9[%145, %c0_40] : memref<64x512xf32, #tpu.memory_space<vmem>>, vector<8x512xf32>
    %147 = arith.truncf %139 : vector<8x128xf32> to vector<8x128xbf16>
    %cst_41 = arith.constant dense<0.000000e+00> : vector<8x512xf32>
    %148 = tpu.matmul %147, %10, %cst_41 {dimension_numbers = #tpu.dot_dimension_numbers<[1], [0], [0], [1], [0, 0, 1, 1], [], []>} : vector<8x128xbf16>, vector<128x512xbf16>, vector<8x512xf32> -> vector<8x512xf32>
    %149 = arith.addf %146, %148 : vector<8x512xf32>
    %150 = vector.extract_strided_slice %149 {offsets = [0, 0], sizes = [8, 384], strides = [1, 1]} : vector<8x512xf32> to vector<8x384xf32>
    %151 = arith.negf %150 : vector<8x384xf32>
    %152 = math.exp %151 : vector<8x384xf32>
    %cst_42 = arith.constant 1.000000e+00 : f32
    %153 = vector.broadcast %cst_42 : f32 to vector<8x384xf32>
    %154 = arith.addf %153, %152 : vector<8x384xf32>
    %155 = arith.divf %153, %154 : vector<8x384xf32>
    %156 = vector.extract_strided_slice %155 {offsets = [0, 0], sizes = [8, 128], strides = [1, 1]} : vector<8x384xf32> to vector<8x128xf32>
    %157 = vector.extract_strided_slice %155 {offsets = [0, 128], sizes = [8, 128], strides = [1, 1]} : vector<8x384xf32> to vector<8x128xf32>
    %158 = vector.extract_strided_slice %155 {offsets = [0, 256], sizes = [8, 128], strides = [1, 1]} : vector<8x384xf32> to vector<8x128xf32>
    %159 = vector.extract_strided_slice %149 {offsets = [0, 384], sizes = [8, 128], strides = [1, 1]} : vector<8x512xf32> to vector<8x128xf32>
    %160 = math.tanh %159 : vector<8x128xf32>
    %161 = arith.mulf %157, %137 : vector<8x128xf32>
    %162 = arith.mulf %156, %160 : vector<8x128xf32>
    %163 = arith.addf %161, %162 : vector<8x128xf32>
    %164 = math.tanh %163 : vector<8x128xf32>
    %165 = arith.mulf %158, %164 : vector<8x128xf32>
    %166 = arith.truncf %165 : vector<8x128xf32> to vector<8x128xbf16>
    %167 = arith.index_cast %144 : i32 to index
    %c0_43 = arith.constant 0 : index
    %168 = vector.load %arg5[%167, %c0_43] : memref<64x128xbf16, #tpu.memory_space<vmem>>, vector<8x128xbf16>
    tpu.vector_store %arg5[%167, %c0_43], %166 {strides = array<i32>} : memref<64x128xbf16, #tpu.memory_space<vmem>>, vector<8x128xbf16>,
    %c6_i32 = arith.constant 6 : i32
    %c8_i32_44 = arith.constant 8 : i32
    %169 = arith.muli %c6_i32, %c8_i32_44 : i32
    %170 = tpu.assume_multiple %169, 8 : i32
    %171 = arith.index_cast %170 : i32 to index
    %c0_45 = arith.constant 0 : index
    %172 = vector.load %arg9[%171, %c0_45] : memref<64x512xf32, #tpu.memory_space<vmem>>, vector<8x512xf32>
    %173 = arith.truncf %165 : vector<8x128xf32> to vector<8x128xbf16>
    %cst_46 = arith.constant dense<0.000000e+00> : vector<8x512xf32>
    %174 = tpu.matmul %173, %10, %cst_46 {dimension_numbers = #tpu.dot_dimension_numbers<[1], [0], [0], [1], [0, 0, 1, 1], [], []>} : vector<8x128xbf16>, vector<128x512xbf16>, vector<8x512xf32> -> vector<8x512xf32>
    %175 = arith.addf %172, %174 : vector<8x512xf32>
    %176 = vector.extract_strided_slice %175 {offsets = [0, 0], sizes = [8, 384], strides = [1, 1]} : vector<8x512xf32> to vector<8x384xf32>
    %177 = arith.negf %176 : vector<8x384xf32>
    %178 = math.exp %177 : vector<8x384xf32>
    %cst_47 = arith.constant 1.000000e+00 : f32
    %179 = vector.broadcast %cst_47 : f32 to vector<8x384xf32>
    %180 = arith.addf %179, %178 : vector<8x384xf32>
    %181 = arith.divf %179, %180 : vector<8x384xf32>
    %182 = vector.extract_strided_slice %181 {offsets = [0, 0], sizes = [8, 128], strides = [1, 1]} : vector<8x384xf32> to vector<8x128xf32>
    %183 = vector.extract_strided_slice %181 {offsets = [0, 128], sizes = [8, 128], strides = [1, 1]} : vector<8x384xf32> to vector<8x128xf32>
    %184 = vector.extract_strided_slice %181 {offsets = [0, 256], sizes = [8, 128], strides = [1, 1]} : vector<8x384xf32> to vector<8x128xf32>
    %185 = vector.extract_strided_slice %175 {offsets = [0, 384], sizes = [8, 128], strides = [1, 1]} : vector<8x512xf32> to vector<8x128xf32>
    %186 = math.tanh %185 : vector<8x128xf32>
    %187 = arith.mulf %183, %163 : vector<8x128xf32>
    %188 = arith.mulf %182, %186 : vector<8x128xf32>
    %189 = arith.addf %187, %188 : vector<8x128xf32>
    %190 = math.tanh %189 : vector<8x128xf32>
    %191 = arith.mulf %184, %190 : vector<8x128xf32>
    %192 = arith.truncf %191 : vector<8x128xf32> to vector<8x128xbf16>
    %193 = arith.index_cast %170 : i32 to index
    %c0_48 = arith.constant 0 : index
    %194 = vector.load %arg5[%193, %c0_48] : memref<64x128xbf16, #tpu.memory_space<vmem>>, vector<8x128xbf16>
    tpu.vector_store %arg5[%193, %c0_48], %192 {strides = array<i32>} : memref<64x128xbf16, #tpu.memory_space<vmem>>, vector<8x128xbf16>,
    %c7_i32 = arith.constant 7 : i32
    %c8_i32_49 = arith.constant 8 : i32
    %195 = arith.muli %c7_i32, %c8_i32_49 : i32
    %196 = tpu.assume_multiple %195, 8 : i32
    %197 = arith.index_cast %196 : i32 to index
    %c0_50 = arith.constant 0 : index
    %198 = vector.load %arg9[%197, %c0_50] : memref<64x512xf32, #tpu.memory_space<vmem>>, vector<8x512xf32>
    %199 = arith.truncf %191 : vector<8x128xf32> to vector<8x128xbf16>
    %cst_51 = arith.constant dense<0.000000e+00> : vector<8x512xf32>
    %200 = tpu.matmul %199, %10, %cst_51 {dimension_numbers = #tpu.dot_dimension_numbers<[1], [0], [0], [1], [0, 0, 1, 1], [], []>} : vector<8x128xbf16>, vector<128x512xbf16>, vector<8x512xf32> -> vector<8x512xf32>
    %201 = arith.addf %198, %200 : vector<8x512xf32>
    %202 = vector.extract_strided_slice %201 {offsets = [0, 0], sizes = [8, 384], strides = [1, 1]} : vector<8x512xf32> to vector<8x384xf32>
    %203 = arith.negf %202 : vector<8x384xf32>
    %204 = math.exp %203 : vector<8x384xf32>
    %cst_52 = arith.constant 1.000000e+00 : f32
    %205 = vector.broadcast %cst_52 : f32 to vector<8x384xf32>
    %206 = arith.addf %205, %204 : vector<8x384xf32>
    %207 = arith.divf %205, %206 : vector<8x384xf32>
    %208 = vector.extract_strided_slice %207 {offsets = [0, 0], sizes = [8, 128], strides = [1, 1]} : vector<8x384xf32> to vector<8x128xf32>
    %209 = vector.extract_strided_slice %207 {offsets = [0, 128], sizes = [8, 128], strides = [1, 1]} : vector<8x384xf32> to vector<8x128xf32>
    %210 = vector.extract_strided_slice %207 {offsets = [0, 256], sizes = [8, 128], strides = [1, 1]} : vector<8x384xf32> to vector<8x128xf32>
    %211 = vector.extract_strided_slice %201 {offsets = [0, 384], sizes = [8, 128], strides = [1, 1]} : vector<8x512xf32> to vector<8x128xf32>
    %212 = math.tanh %211 : vector<8x128xf32>
    %213 = arith.mulf %209, %189 : vector<8x128xf32>
    %214 = arith.mulf %208, %212 : vector<8x128xf32>
    %215 = arith.addf %213, %214 : vector<8x128xf32>
    %216 = math.tanh %215 : vector<8x128xf32>
    %217 = arith.mulf %210, %216 : vector<8x128xf32>
    %218 = arith.truncf %217 : vector<8x128xf32> to vector<8x128xbf16>
    %219 = arith.index_cast %196 : i32 to index
    %c0_53 = arith.constant 0 : index
    %220 = vector.load %arg5[%219, %c0_53] : memref<64x128xbf16, #tpu.memory_space<vmem>>, vector<8x128xbf16>
    tpu.vector_store %arg5[%219, %c0_53], %218 {strides = array<i32>} : memref<64x128xbf16, #tpu.memory_space<vmem>>, vector<8x128xbf16>,
    %c8_i32_54 = arith.constant 8 : i32
    %c0_55 = arith.constant 0 : index
    %c0_56 = arith.constant 0 : index
    %221 = vector.load %arg7[%c0_55, %c0_56] : memref<8x128xf32, #tpu.memory_space<vmem>>, vector<8x128xf32>
    tpu.vector_store %arg7[%c0_55, %c0_56], %217 {strides = array<i32>} : memref<8x128xf32, #tpu.memory_space<vmem>>, vector<8x128xf32>,
    %c0_57 = arith.constant 0 : index
    %c0_58 = arith.constant 0 : index
    %222 = vector.load %arg8[%c0_57, %c0_58] : memref<8x128xf32, #tpu.memory_space<vmem>>, vector<8x128xf32>
    tpu.vector_store %arg8[%c0_57, %c0_58], %215 {strides = array<i32>} : memref<8x128xf32, #tpu.memory_space<vmem>>, vector<8x128xf32>,
    %c0_59 = arith.constant 0 : index
    %c0_60 = arith.constant 0 : index
    %223 = vector.load %arg6[%c0_59, %c0_60] : memref<8x128xf32, #tpu.memory_space<vmem>>, vector<8x128xf32>
    tpu.vector_store %arg6[%c0_59, %c0_60], %217 {strides = array<i32>} : memref<8x128xf32, #tpu.memory_space<vmem>>, vector<8x128xf32>,
    return
  }
  func.func @transform_0(%arg0: i32) -> (i32, i32) {
    %c0_i32 = arith.constant 0 : i32
    %c0_i32_0 = arith.constant 0 : i32
    return %arg0, %c0_i32 : i32, i32
  }
  func.func @transform_1(%arg0: i32) -> (i32, i32) {
    %c0_i32 = arith.constant 0 : i32
    %c0_i32_0 = arith.constant 0 : i32
    %c0_i32_1 = arith.constant 0 : i32
    return %c0_i32, %c0_i32_0 : i32, i32
  }
  func.func @transform_2(%arg0: i32) -> (i32, i32) {
    %c0_i32 = arith.constant 0 : i32
    %c0_i32_0 = arith.constant 0 : i32
    %c0_i32_1 = arith.constant 0 : i32
    return %c0_i32, %c0_i32_0 : i32, i32
  }
  func.func @transform_3(%arg0: i32) -> (i32, i32) {
    %c0_i32 = arith.constant 0 : i32
    %c0_i32_0 = arith.constant 0 : i32
    %c0_i32_1 = arith.constant 0 : i32
    return %c0_i32, %c0_i32_0 : i32, i32
  }
  func.func @transform_4(%arg0: i32) -> (i32, i32) {
    %c0_i32 = arith.constant 0 : i32
    %c0_i32_0 = arith.constant 0 : i32
    return %arg0, %c0_i32 : i32, i32
  }
  func.func @transform_5(%arg0: i32) -> (i32, i32) {
    %c0_i32 = arith.constant 0 : i32
    %c0_i32_0 = arith.constant 0 : i32
    %c0_i32_1 = arith.constant 0 : i32
    return %c0_i32, %c0_i32_0 : i32, i32
  }
}

module attributes {stable_mosaic.version = 11 : i64} {
  func.func @lstm_layer_kernel(%arg0: i32, %arg1: memref<64x16xbf16, #tpu.memory_space<vmem>>, %arg2: memref<16x512xbf16, #tpu.memory_space<vmem>>, %arg3: memref<128x512xbf16, #tpu.memory_space<vmem>>, %arg4: memref<1x512xf32, #tpu.memory_space<vmem>>, %arg5: memref<64x128xbf16, #tpu.memory_space<vmem>>, %arg6: memref<8x128xf32, #tpu.memory_space<vmem>>, %arg7: memref<8x128xf32, #tpu.memory_space<vmem>>, %arg8: memref<8x128xf32, #tpu.memory_space<vmem>>, %arg9: memref<64x512xf32, #tpu.memory_space<vmem>>) attributes {dimension_semantics = [#tpu.dimension_semantics<arbitrary>], iteration_bounds = array<i64: 1>, scalar_prefetch = 0 : i64, scratch_operands = 3 : i64, tpu.core_type = #tpu.core_type<tc>, window_params = [{transform_indices = @transform_0, window_bounds = array<i64: 64, 16>}, {pipeline_mode = #tpu.pipeline_mode<synchronous>, transform_indices = @transform_1, window_bounds = array<i64: 16, 512>}, {pipeline_mode = #tpu.pipeline_mode<synchronous>, transform_indices = @transform_2, window_bounds = array<i64: 128, 512>}, {pipeline_mode = #tpu.pipeline_mode<synchronous>, transform_indices = @transform_3, window_bounds = array<i64: 1, 512>}, {transform_indices = @transform_4, window_bounds = array<i64: 64, 128>}, {pipeline_mode = #tpu.pipeline_mode<synchronous>, transform_indices = @transform_5, window_bounds = array<i64: 8, 128>}]} {
    %c0_i32 = arith.constant 0 : i32
    %0 = arith.cmpi eq, %arg0, %c0_i32 : i32
    %1 = arith.extui %0 : i1 to i32
    %c0_i32_0 = arith.constant 0 : i32
    %2 = arith.cmpi ne, %1, %c0_i32_0 : i32
    scf.if %2 {
      %cst_61 = arith.constant 0.000000e+00 : f32
      %224 = vector.broadcast %cst_61 : f32 to vector<8x128xf32>
      %c0_62 = arith.constant 0 : index
      %c0_63 = arith.constant 0 : index
      %225 = vector.load %arg7[%c0_62, %c0_63] : memref<8x128xf32, #tpu.memory_space<vmem>>, vector<8x128xf32>
      tpu.vector_store %arg7[%c0_62, %c0_63], %224 {strides = array<i32>} : memref<8x128xf32, #tpu.memory_space<vmem>>, vector<8x128xf32>,
      %cst_64 = arith.constant 0.000000e+00 : f32
      %226 = vector.broadcast %cst_64 : f32 to vector<8x128xf32>
      %c0_65 = arith.constant 0 : index
      %c0_66 = arith.constant 0 : index
      %227 = vector.load %arg8[%c0_65, %c0_66] : memref<8x128xf32, #tpu.memory_space<vmem>>, vector<8x128xf32>
      tpu.vector_store %arg8[%c0_65, %c0_66], %226 {strides = array<i32>} : memref<8x128xf32, #tpu.memory_space<vmem>>, vector<8x128xf32>,
    } else {
    }
    %c0 = arith.constant 0 : index
    %c0_1 = arith.constant 0 : index
    %3 = vector.load %arg1[%c0, %c0_1] : memref<64x16xbf16, #tpu.memory_space<vmem>>, vector<64x16xbf16>
    %c0_2 = arith.constant 0 : index
    %c0_3 = arith.constant 0 : index
    %4 = vector.load %arg2[%c0_2, %c0_3] : memref<16x512xbf16, #tpu.memory_space<vmem>>, vector<16x512xbf16>
    %cst = arith.constant dense<0.000000e+00> : vector<64x512xf32>
    %5 = tpu.matmul %3, %4, %cst {dimension_numbers = #tpu.dot_dimension_numbers<[1], [0], [0], [1], [0, 0, 1, 1], [], []>} : vector<64x16xbf16>, vector<16x512xbf16>, vector<64x512xf32> -> vector<64x512xf32>
    %c0_4 = arith.constant 0 : index
    %c0_5 = arith.constant 0 : index
    %6 = vector.load %arg4[%c0_4, %c0_5] : memref<1x512xf32, #tpu.memory_space<vmem>>, vector<1x512xf32>
    %7 = vector.broadcast %6 : vector<1x512xf32> to vector<64x512xf32>
    %8 = arith.addf %5, %7 : vector<64x512xf32>
    %c0_6 = arith.constant 0 : index
    %c0_7 = arith.constant 0 : index
    %9 = vector.load %arg9[%c0_6, %c0_7] : memref<64x512xf32, #tpu.memory_space<vmem>>, vector<64x512xf32>
    tpu.vector_store %arg9[%c0_6, %c0_7], %8 {strides = array<i32>} : memref<64x512xf32, #tpu.memory_space<vmem>>, vector<64x512xf32>,
    %c0_8 = arith.constant 0 : index
    %c0_9 = arith.constant 0 : index
    %10 = vector.load %arg3[%c0_8, %c0_9] : memref<128x512xbf16, #tpu.memory_space<vmem>>, vector<128x512xbf16>
    %c0_10 = arith.constant 0 : index
    %c0_11 = arith.constant 0 : index
    %11 = vector.load %arg7[%c0_10, %c0_11] : memref<8x128xf32, #tpu.memory_space<vmem>>, vector<8x128xf32>
    %c0_12 = arith.constant 0 : index
    %c0_13 = arith.constant 0 : index
    %12 = vector.load %arg8[%c0_12, %c0_13] : memref<8x128xf32, #tpu.memory_space<vmem>>, vector<8x128xf32>
    %c0_i32_14 = arith.constant 0 : i32
    %c8_i32 = arith.constant 8 : i32
    %13 = arith.muli %c0_i32_14, %c8_i32 : i32
    %14 = tpu.assume_multiple %13, 8 : i32
    %15 = arith.index_cast %14 : i32 to index
    %c0_15 = arith.constant 0 : index
    %16 = vector.load %arg9[%15, %c0_15] : memref<64x512xf32, #tpu.memory_space<vmem>>, vector<8x512xf32>
    %17 = arith.truncf %11 : vector<8x128xf32> to vector<8x128xbf16>
    %cst_16 = arith.constant dense<0.000000e+00> : vector<8x512xf32>
    %18 = tpu.matmul %17, %10, %cst_16 {dimension_numbers = #tpu.dot_dimension_numbers<[1], [0], [0], [1], [0, 0, 1, 1], [], []>} : vector<8x128xbf16>, vector<128x512xbf16>, vector<8x512xf32> -> vector<8x512xf32>
    %19 = arith.addf %16, %18 : vector<8x512xf32>
    %20 = vector.extract_strided_slice %19 {offsets = [0, 0], sizes = [8, 384], strides = [1, 1]} : vector<8x512xf32> to vector<8x384xf32>
    %21 = arith.negf %20 : vector<8x384xf32>
    %22 = math.exp %21 : vector<8x384xf32>
    %cst_17 = arith.constant 1.000000e+00 : f32
    %23 = vector.broadcast %cst_17 : f32 to vector<8x384xf32>
    %24 = arith.addf %23, %22 : vector<8x384xf32>
    %25 = arith.divf %23, %24 : vector<8x384xf32>
    %26 = vector.extract_strided_slice %25 {offsets = [0, 0], sizes = [8, 128], strides = [1, 1]} : vector<8x384xf32> to vector<8x128xf32>
    %27 = vector.extract_strided_slice %25 {offsets = [0, 128], sizes = [8, 128], strides = [1, 1]} : vector<8x384xf32> to vector<8x128xf32>
    %28 = vector.extract_strided_slice %25 {offsets = [0, 256], sizes = [8, 128], strides = [1, 1]} : vector<8x384xf32> to vector<8x128xf32>
    %29 = vector.extract_strided_slice %19 {offsets = [0, 384], sizes = [8, 128], strides = [1, 1]} : vector<8x512xf32> to vector<8x128xf32>
    %30 = math.tanh %29 : vector<8x128xf32>
    %31 = arith.mulf %27, %12 : vector<8x128xf32>
    %32 = arith.mulf %26, %30 : vector<8x128xf32>
    %33 = arith.addf %31, %32 : vector<8x128xf32>
    %34 = math.tanh %33 : vector<8x128xf32>
    %35 = arith.mulf %28, %34 : vector<8x128xf32>
    %36 = arith.truncf %35 : vector<8x128xf32> to vector<8x128xbf16>
    %37 = arith.index_cast %14 : i32 to index
    %c0_18 = arith.constant 0 : index
    %38 = vector.load %arg5[%37, %c0_18] : memref<64x128xbf16, #tpu.memory_space<vmem>>, vector<8x128xbf16>
    tpu.vector_store %arg5[%37, %c0_18], %36 {strides = array<i32>} : memref<64x128xbf16, #tpu.memory_space<vmem>>, vector<8x128xbf16>,
    %c1_i32 = arith.constant 1 : i32
    %c8_i32_19 = arith.constant 8 : i32
    %39 = arith.muli %c1_i32, %c8_i32_19 : i32
    %40 = tpu.assume_multiple %39, 8 : i32
    %41 = arith.index_cast %40 : i32 to index
    %c0_20 = arith.constant 0 : index
    %42 = vector.load %arg9[%41, %c0_20] : memref<64x512xf32, #tpu.memory_space<vmem>>, vector<8x512xf32>
    %43 = arith.truncf %35 : vector<8x128xf32> to vector<8x128xbf16>
    %cst_21 = arith.constant dense<0.000000e+00> : vector<8x512xf32>
    %44 = tpu.matmul %43, %10, %cst_21 {dimension_numbers = #tpu.dot_dimension_numbers<[1], [0], [0], [1], [0, 0, 1, 1], [], []>} : vector<8x128xbf16>, vector<128x512xbf16>, vector<8x512xf32> -> vector<8x512xf32>
    %45 = arith.addf %42, %44 : vector<8x512xf32>
    %46 = vector.extract_strided_slice %45 {offsets = [0, 0], sizes = [8, 384], strides = [1, 1]} : vector<8x512xf32> to vector<8x384xf32>
    %47 = arith.negf %46 : vector<8x384xf32>
    %48 = math.exp %47 : vector<8x384xf32>
    %cst_22 = arith.constant 1.000000e+00 : f32
    %49 = vector.broadcast %cst_22 : f32 to vector<8x384xf32>
    %50 = arith.addf %49, %48 : vector<8x384xf32>
    %51 = arith.divf %49, %50 : vector<8x384xf32>
    %52 = vector.extract_strided_slice %51 {offsets = [0, 0], sizes = [8, 128], strides = [1, 1]} : vector<8x384xf32> to vector<8x128xf32>
    %53 = vector.extract_strided_slice %51 {offsets = [0, 128], sizes = [8, 128], strides = [1, 1]} : vector<8x384xf32> to vector<8x128xf32>
    %54 = vector.extract_strided_slice %51 {offsets = [0, 256], sizes = [8, 128], strides = [1, 1]} : vector<8x384xf32> to vector<8x128xf32>
    %55 = vector.extract_strided_slice %45 {offsets = [0, 384], sizes = [8, 128], strides = [1, 1]} : vector<8x512xf32> to vector<8x128xf32>
    %56 = math.tanh %55 : vector<8x128xf32>
    %57 = arith.mulf %53, %33 : vector<8x128xf32>
    %58 = arith.mulf %52, %56 : vector<8x128xf32>
    %59 = arith.addf %57, %58 : vector<8x128xf32>
    %60 = math.tanh %59 : vector<8x128xf32>
    %61 = arith.mulf %54, %60 : vector<8x128xf32>
    %62 = arith.truncf %61 : vector<8x128xf32> to vector<8x128xbf16>
    %63 = arith.index_cast %40 : i32 to index
    %c0_23 = arith.constant 0 : index
    %64 = vector.load %arg5[%63, %c0_23] : memref<64x128xbf16, #tpu.memory_space<vmem>>, vector<8x128xbf16>
    tpu.vector_store %arg5[%63, %c0_23], %62 {strides = array<i32>} : memref<64x128xbf16, #tpu.memory_space<vmem>>, vector<8x128xbf16>,
    %c2_i32 = arith.constant 2 : i32
    %c8_i32_24 = arith.constant 8 : i32
    %65 = arith.muli %c2_i32, %c8_i32_24 : i32
    %66 = tpu.assume_multiple %65, 8 : i32
    %67 = arith.index_cast %66 : i32 to index
    %c0_25 = arith.constant 0 : index
    %68 = vector.load %arg9[%67, %c0_25] : memref<64x512xf32, #tpu.memory_space<vmem>>, vector<8x512xf32>
    %69 = arith.truncf %61 : vector<8x128xf32> to vector<8x128xbf16>
    %cst_26 = arith.constant dense<0.000000e+00> : vector<8x512xf32>
    %70 = tpu.matmul %69, %10, %cst_26 {dimension_numbers = #tpu.dot_dimension_numbers<[1], [0], [0], [1], [0, 0, 1, 1], [], []>} : vector<8x128xbf16>, vector<128x512xbf16>, vector<8x512xf32> -> vector<8x512xf32>
    %71 = arith.addf %68, %70 : vector<8x512xf32>
    %72 = vector.extract_strided_slice %71 {offsets = [0, 0], sizes = [8, 384], strides = [1, 1]} : vector<8x512xf32> to vector<8x384xf32>
    %73 = arith.negf %72 : vector<8x384xf32>
    %74 = math.exp %73 : vector<8x384xf32>
    %cst_27 = arith.constant 1.000000e+00 : f32
    %75 = vector.broadcast %cst_27 : f32 to vector<8x384xf32>
    %76 = arith.addf %75, %74 : vector<8x384xf32>
    %77 = arith.divf %75, %76 : vector<8x384xf32>
    %78 = vector.extract_strided_slice %77 {offsets = [0, 0], sizes = [8, 128], strides = [1, 1]} : vector<8x384xf32> to vector<8x128xf32>
    %79 = vector.extract_strided_slice %77 {offsets = [0, 128], sizes = [8, 128], strides = [1, 1]} : vector<8x384xf32> to vector<8x128xf32>
    %80 = vector.extract_strided_slice %77 {offsets = [0, 256], sizes = [8, 128], strides = [1, 1]} : vector<8x384xf32> to vector<8x128xf32>
    %81 = vector.extract_strided_slice %71 {offsets = [0, 384], sizes = [8, 128], strides = [1, 1]} : vector<8x512xf32> to vector<8x128xf32>
    %82 = math.tanh %81 : vector<8x128xf32>
    %83 = arith.mulf %79, %59 : vector<8x128xf32>
    %84 = arith.mulf %78, %82 : vector<8x128xf32>
    %85 = arith.addf %83, %84 : vector<8x128xf32>
    %86 = math.tanh %85 : vector<8x128xf32>
    %87 = arith.mulf %80, %86 : vector<8x128xf32>
    %88 = arith.truncf %87 : vector<8x128xf32> to vector<8x128xbf16>
    %89 = arith.index_cast %66 : i32 to index
    %c0_28 = arith.constant 0 : index
    %90 = vector.load %arg5[%89, %c0_28] : memref<64x128xbf16, #tpu.memory_space<vmem>>, vector<8x128xbf16>
    tpu.vector_store %arg5[%89, %c0_28], %88 {strides = array<i32>} : memref<64x128xbf16, #tpu.memory_space<vmem>>, vector<8x128xbf16>,
    %c3_i32 = arith.constant 3 : i32
    %c8_i32_29 = arith.constant 8 : i32
    %91 = arith.muli %c3_i32, %c8_i32_29 : i32
    %92 = tpu.assume_multiple %91, 8 : i32
    %93 = arith.index_cast %92 : i32 to index
    %c0_30 = arith.constant 0 : index
    %94 = vector.load %arg9[%93, %c0_30] : memref<64x512xf32, #tpu.memory_space<vmem>>, vector<8x512xf32>
    %95 = arith.truncf %87 : vector<8x128xf32> to vector<8x128xbf16>
    %cst_31 = arith.constant dense<0.000000e+00> : vector<8x512xf32>
    %96 = tpu.matmul %95, %10, %cst_31 {dimension_numbers = #tpu.dot_dimension_numbers<[1], [0], [0], [1], [0, 0, 1, 1], [], []>} : vector<8x128xbf16>, vector<128x512xbf16>, vector<8x512xf32> -> vector<8x512xf32>
    %97 = arith.addf %94, %96 : vector<8x512xf32>
    %98 = vector.extract_strided_slice %97 {offsets = [0, 0], sizes = [8, 384], strides = [1, 1]} : vector<8x512xf32> to vector<8x384xf32>
    %99 = arith.negf %98 : vector<8x384xf32>
    %100 = math.exp %99 : vector<8x384xf32>
    %cst_32 = arith.constant 1.000000e+00 : f32
    %101 = vector.broadcast %cst_32 : f32 to vector<8x384xf32>
    %102 = arith.addf %101, %100 : vector<8x384xf32>
    %103 = arith.divf %101, %102 : vector<8x384xf32>
    %104 = vector.extract_strided_slice %103 {offsets = [0, 0], sizes = [8, 128], strides = [1, 1]} : vector<8x384xf32> to vector<8x128xf32>
    %105 = vector.extract_strided_slice %103 {offsets = [0, 128], sizes = [8, 128], strides = [1, 1]} : vector<8x384xf32> to vector<8x128xf32>
    %106 = vector.extract_strided_slice %103 {offsets = [0, 256], sizes = [8, 128], strides = [1, 1]} : vector<8x384xf32> to vector<8x128xf32>
    %107 = vector.extract_strided_slice %97 {offsets = [0, 384], sizes = [8, 128], strides = [1, 1]} : vector<8x512xf32> to vector<8x128xf32>
    %108 = math.tanh %107 : vector<8x128xf32>
    %109 = arith.mulf %105, %85 : vector<8x128xf32>
    %110 = arith.mulf %104, %108 : vector<8x128xf32>
    %111 = arith.addf %109, %110 : vector<8x128xf32>
    %112 = math.tanh %111 : vector<8x128xf32>
    %113 = arith.mulf %106, %112 : vector<8x128xf32>
    %114 = arith.truncf %113 : vector<8x128xf32> to vector<8x128xbf16>
    %115 = arith.index_cast %92 : i32 to index
    %c0_33 = arith.constant 0 : index
    %116 = vector.load %arg5[%115, %c0_33] : memref<64x128xbf16, #tpu.memory_space<vmem>>, vector<8x128xbf16>
    tpu.vector_store %arg5[%115, %c0_33], %114 {strides = array<i32>} : memref<64x128xbf16, #tpu.memory_space<vmem>>, vector<8x128xbf16>,
    %c4_i32 = arith.constant 4 : i32
    %c8_i32_34 = arith.constant 8 : i32
    %117 = arith.muli %c4_i32, %c8_i32_34 : i32
    %118 = tpu.assume_multiple %117, 8 : i32
    %119 = arith.index_cast %118 : i32 to index
    %c0_35 = arith.constant 0 : index
    %120 = vector.load %arg9[%119, %c0_35] : memref<64x512xf32, #tpu.memory_space<vmem>>, vector<8x512xf32>
    %121 = arith.truncf %113 : vector<8x128xf32> to vector<8x128xbf16>
    %cst_36 = arith.constant dense<0.000000e+00> : vector<8x512xf32>
    %122 = tpu.matmul %121, %10, %cst_36 {dimension_numbers = #tpu.dot_dimension_numbers<[1], [0], [0], [1], [0, 0, 1, 1], [], []>} : vector<8x128xbf16>, vector<128x512xbf16>, vector<8x512xf32> -> vector<8x512xf32>
    %123 = arith.addf %120, %122 : vector<8x512xf32>
    %124 = vector.extract_strided_slice %123 {offsets = [0, 0], sizes = [8, 384], strides = [1, 1]} : vector<8x512xf32> to vector<8x384xf32>
    %125 = arith.negf %124 : vector<8x384xf32>
    %126 = math.exp %125 : vector<8x384xf32>
    %cst_37 = arith.constant 1.000000e+00 : f32
    %127 = vector.broadcast %cst_37 : f32 to vector<8x384xf32>
    %128 = arith.addf %127, %126 : vector<8x384xf32>
    %129 = arith.divf %127, %128 : vector<8x384xf32>
    %130 = vector.extract_strided_slice %129 {offsets = [0, 0], sizes = [8, 128], strides = [1, 1]} : vector<8x384xf32> to vector<8x128xf32>
    %131 = vector.extract_strided_slice %129 {offsets = [0, 128], sizes = [8, 128], strides = [1, 1]} : vector<8x384xf32> to vector<8x128xf32>
    %132 = vector.extract_strided_slice %129 {offsets = [0, 256], sizes = [8, 128], strides = [1, 1]} : vector<8x384xf32> to vector<8x128xf32>
    %133 = vector.extract_strided_slice %123 {offsets = [0, 384], sizes = [8, 128], strides = [1, 1]} : vector<8x512xf32> to vector<8x128xf32>
    %134 = math.tanh %133 : vector<8x128xf32>
    %135 = arith.mulf %131, %111 : vector<8x128xf32>
    %136 = arith.mulf %130, %134 : vector<8x128xf32>
    %137 = arith.addf %135, %136 : vector<8x128xf32>
    %138 = math.tanh %137 : vector<8x128xf32>
    %139 = arith.mulf %132, %138 : vector<8x128xf32>
    %140 = arith.truncf %139 : vector<8x128xf32> to vector<8x128xbf16>
    %141 = arith.index_cast %118 : i32 to index
    %c0_38 = arith.constant 0 : index
    %142 = vector.load %arg5[%141, %c0_38] : memref<64x128xbf16, #tpu.memory_space<vmem>>, vector<8x128xbf16>
    tpu.vector_store %arg5[%141, %c0_38], %140 {strides = array<i32>} : memref<64x128xbf16, #tpu.memory_space<vmem>>, vector<8x128xbf16>,
    %c5_i32 = arith.constant 5 : i32
    %c8_i32_39 = arith.constant 8 : i32
    %143 = arith.muli %c5_i32, %c8_i32_39 : i32
    %144 = tpu.assume_multiple %143, 8 : i32
    %145 = arith.index_cast %144 : i32 to index
    %c0_40 = arith.constant 0 : index
    %146 = vector.load %arg9[%145, %c0_40] : memref<64x512xf32, #tpu.memory_space<vmem>>, vector<8x512xf32>
    %147 = arith.truncf %139 : vector<8x128xf32> to vector<8x128xbf16>
    %cst_41 = arith.constant dense<0.000000e+00> : vector<8x512xf32>
    %148 = tpu.matmul %147, %10, %cst_41 {dimension_numbers = #tpu.dot_dimension_numbers<[1], [0], [0], [1], [0, 0, 1, 1], [], []>} : vector<8x128xbf16>, vector<128x512xbf16>, vector<8x512xf32> -> vector<8x512xf32>
    %149 = arith.addf %146, %148 : vector<8x512xf32>
    %150 = vector.extract_strided_slice %149 {offsets = [0, 0], sizes = [8, 384], strides = [1, 1]} : vector<8x512xf32> to vector<8x384xf32>
    %151 = arith.negf %150 : vector<8x384xf32>
    %152 = math.exp %151 : vector<8x384xf32>
    %cst_42 = arith.constant 1.000000e+00 : f32
    %153 = vector.broadcast %cst_42 : f32 to vector<8x384xf32>
    %154 = arith.addf %153, %152 : vector<8x384xf32>
    %155 = arith.divf %153, %154 : vector<8x384xf32>
    %156 = vector.extract_strided_slice %155 {offsets = [0, 0], sizes = [8, 128], strides = [1, 1]} : vector<8x384xf32> to vector<8x128xf32>
    %157 = vector.extract_strided_slice %155 {offsets = [0, 128], sizes = [8, 128], strides = [1, 1]} : vector<8x384xf32> to vector<8x128xf32>
    %158 = vector.extract_strided_slice %155 {offsets = [0, 256], sizes = [8, 128], strides = [1, 1]} : vector<8x384xf32> to vector<8x128xf32>
    %159 = vector.extract_strided_slice %149 {offsets = [0, 384], sizes = [8, 128], strides = [1, 1]} : vector<8x512xf32> to vector<8x128xf32>
    %160 = math.tanh %159 : vector<8x128xf32>
    %161 = arith.mulf %157, %137 : vector<8x128xf32>
    %162 = arith.mulf %156, %160 : vector<8x128xf32>
    %163 = arith.addf %161, %162 : vector<8x128xf32>
    %164 = math.tanh %163 : vector<8x128xf32>
    %165 = arith.mulf %158, %164 : vector<8x128xf32>
    %166 = arith.truncf %165 : vector<8x128xf32> to vector<8x128xbf16>
    %167 = arith.index_cast %144 : i32 to index
    %c0_43 = arith.constant 0 : index
    %168 = vector.load %arg5[%167, %c0_43] : memref<64x128xbf16, #tpu.memory_space<vmem>>, vector<8x128xbf16>
    tpu.vector_store %arg5[%167, %c0_43], %166 {strides = array<i32>} : memref<64x128xbf16, #tpu.memory_space<vmem>>, vector<8x128xbf16>,
    %c6_i32 = arith.constant 6 : i32
    %c8_i32_44 = arith.constant 8 : i32
    %169 = arith.muli %c6_i32, %c8_i32_44 : i32
    %170 = tpu.assume_multiple %169, 8 : i32
    %171 = arith.index_cast %170 : i32 to index
    %c0_45 = arith.constant 0 : index
    %172 = vector.load %arg9[%171, %c0_45] : memref<64x512xf32, #tpu.memory_space<vmem>>, vector<8x512xf32>
    %173 = arith.truncf %165 : vector<8x128xf32> to vector<8x128xbf16>
    %cst_46 = arith.constant dense<0.000000e+00> : vector<8x512xf32>
    %174 = tpu.matmul %173, %10, %cst_46 {dimension_numbers = #tpu.dot_dimension_numbers<[1], [0], [0], [1], [0, 0, 1, 1], [], []>} : vector<8x128xbf16>, vector<128x512xbf16>, vector<8x512xf32> -> vector<8x512xf32>
    %175 = arith.addf %172, %174 : vector<8x512xf32>
    %176 = vector.extract_strided_slice %175 {offsets = [0, 0], sizes = [8, 384], strides = [1, 1]} : vector<8x512xf32> to vector<8x384xf32>
    %177 = arith.negf %176 : vector<8x384xf32>
    %178 = math.exp %177 : vector<8x384xf32>
    %cst_47 = arith.constant 1.000000e+00 : f32
    %179 = vector.broadcast %cst_47 : f32 to vector<8x384xf32>
    %180 = arith.addf %179, %178 : vector<8x384xf32>
    %181 = arith.divf %179, %180 : vector<8x384xf32>
    %182 = vector.extract_strided_slice %181 {offsets = [0, 0], sizes = [8, 128], strides = [1, 1]} : vector<8x384xf32> to vector<8x128xf32>
    %183 = vector.extract_strided_slice %181 {offsets = [0, 128], sizes = [8, 128], strides = [1, 1]} : vector<8x384xf32> to vector<8x128xf32>
    %184 = vector.extract_strided_slice %181 {offsets = [0, 256], sizes = [8, 128], strides = [1, 1]} : vector<8x384xf32> to vector<8x128xf32>
    %185 = vector.extract_strided_slice %175 {offsets = [0, 384], sizes = [8, 128], strides = [1, 1]} : vector<8x512xf32> to vector<8x128xf32>
    %186 = math.tanh %185 : vector<8x128xf32>
    %187 = arith.mulf %183, %163 : vector<8x128xf32>
    %188 = arith.mulf %182, %186 : vector<8x128xf32>
    %189 = arith.addf %187, %188 : vector<8x128xf32>
    %190 = math.tanh %189 : vector<8x128xf32>
    %191 = arith.mulf %184, %190 : vector<8x128xf32>
    %192 = arith.truncf %191 : vector<8x128xf32> to vector<8x128xbf16>
    %193 = arith.index_cast %170 : i32 to index
    %c0_48 = arith.constant 0 : index
    %194 = vector.load %arg5[%193, %c0_48] : memref<64x128xbf16, #tpu.memory_space<vmem>>, vector<8x128xbf16>
    tpu.vector_store %arg5[%193, %c0_48], %192 {strides = array<i32>} : memref<64x128xbf16, #tpu.memory_space<vmem>>, vector<8x128xbf16>,
    %c7_i32 = arith.constant 7 : i32
    %c8_i32_49 = arith.constant 8 : i32
    %195 = arith.muli %c7_i32, %c8_i32_49 : i32
    %196 = tpu.assume_multiple %195, 8 : i32
    %197 = arith.index_cast %196 : i32 to index
    %c0_50 = arith.constant 0 : index
    %198 = vector.load %arg9[%197, %c0_50] : memref<64x512xf32, #tpu.memory_space<vmem>>, vector<8x512xf32>
    %199 = arith.truncf %191 : vector<8x128xf32> to vector<8x128xbf16>
    %cst_51 = arith.constant dense<0.000000e+00> : vector<8x512xf32>
    %200 = tpu.matmul %199, %10, %cst_51 {dimension_numbers = #tpu.dot_dimension_numbers<[1], [0], [0], [1], [0, 0, 1, 1], [], []>} : vector<8x128xbf16>, vector<128x512xbf16>, vector<8x512xf32> -> vector<8x512xf32>
    %201 = arith.addf %198, %200 : vector<8x512xf32>
    %202 = vector.extract_strided_slice %201 {offsets = [0, 0], sizes = [8, 384], strides = [1, 1]} : vector<8x512xf32> to vector<8x384xf32>
    %203 = arith.negf %202 : vector<8x384xf32>
    %204 = math.exp %203 : vector<8x384xf32>
    %cst_52 = arith.constant 1.000000e+00 : f32
    %205 = vector.broadcast %cst_52 : f32 to vector<8x384xf32>
    %206 = arith.addf %205, %204 : vector<8x384xf32>
    %207 = arith.divf %205, %206 : vector<8x384xf32>
    %208 = vector.extract_strided_slice %207 {offsets = [0, 0], sizes = [8, 128], strides = [1, 1]} : vector<8x384xf32> to vector<8x128xf32>
    %209 = vector.extract_strided_slice %207 {offsets = [0, 128], sizes = [8, 128], strides = [1, 1]} : vector<8x384xf32> to vector<8x128xf32>
    %210 = vector.extract_strided_slice %207 {offsets = [0, 256], sizes = [8, 128], strides = [1, 1]} : vector<8x384xf32> to vector<8x128xf32>
    %211 = vector.extract_strided_slice %201 {offsets = [0, 384], sizes = [8, 128], strides = [1, 1]} : vector<8x512xf32> to vector<8x128xf32>
    %212 = math.tanh %211 : vector<8x128xf32>
    %213 = arith.mulf %209, %189 : vector<8x128xf32>
    %214 = arith.mulf %208, %212 : vector<8x128xf32>
    %215 = arith.addf %213, %214 : vector<8x128xf32>
    %216 = math.tanh %215 : vector<8x128xf32>
    %217 = arith.mulf %210, %216 : vector<8x128xf32>
    %218 = arith.truncf %217 : vector<8x128xf32> to vector<8x128xbf16>
    %219 = arith.index_cast %196 : i32 to index
    %c0_53 = arith.constant 0 : index
    %220 = vector.load %arg5[%219, %c0_53] : memref<64x128xbf16, #tpu.memory_space<vmem>>, vector<8x128xbf16>
    tpu.vector_store %arg5[%219, %c0_53], %218 {strides = array<i32>} : memref<64x128xbf16, #tpu.memory_space<vmem>>, vector<8x128xbf16>,
    %c8_i32_54 = arith.constant 8 : i32
    %c0_55 = arith.constant 0 : index
    %c0_56 = arith.constant 0 : index
    %221 = vector.load %arg7[%c0_55, %c0_56] : memref<8x128xf32, #tpu.memory_space<vmem>>, vector<8x128xf32>
    tpu.vector_store %arg7[%c0_55, %c0_56], %217 {strides = array<i32>} : memref<8x128xf32, #tpu.memory_space<vmem>>, vector<8x128xf32>,
    %c0_57 = arith.constant 0 : index
    %c0_58 = arith.constant 0 : index
    %222 = vector.load %arg8[%c0_57, %c0_58] : memref<8x128xf32, #tpu.memory_space<vmem>>, vector<8x128xf32>
    tpu.vector_store %arg8[%c0_57, %c0_58], %215 {strides = array<i32>} : memref<8x128xf32, #tpu.memory_space<vmem>>, vector<8x128xf32>,
    %c0_59 = arith.constant 0 : index
    %c0_60 = arith.constant 0 : index
    %223 = vector.load %arg6[%c0_59, %c0_60] : memref<8x128xf32, #tpu.memory_space<vmem>>, vector<8x128xf32>
    tpu.vector_store %arg6[%c0_59, %c0_60], %217 {strides = array<i32>} : memref<8x128xf32, #tpu.memory_space<vmem>>, vector<8x128xf32>,
    return
  }
  func.func @transform_0(%arg0: i32) -> (i32, i32) {
    %c0_i32 = arith.constant 0 : i32
    %c0_i32_0 = arith.constant 0 : i32
    return %arg0, %c0_i32 : i32, i32
  }
  func.func @transform_1(%arg0: i32) -> (i32, i32) {
    %c0_i32 = arith.constant 0 : i32
    %c0_i32_0 = arith.constant 0 : i32
    %c0_i32_1 = arith.constant 0 : i32
    return %c0_i32, %c0_i32_0 : i32, i32
  }
  func.func @transform_2(%arg0: i32) -> (i32, i32) {
    %c0_i32 = arith.constant 0 : i32
    %c0_i32_0 = arith.constant 0 : i32
    %c0_i32_1 = arith.constant 0 : i32
    return %c0_i32, %c0_i32_0 : i32, i32
  }
  func.func @transform_3(%arg0: i32) -> (i32, i32) {
    %c0_i32 = arith.constant 0 : i32
    %c0_i32_0 = arith.constant 0 : i32
    %c0_i32_1 = arith.constant 0 : i32
    return %c0_i32, %c0_i32_0 : i32, i32
  }
  func.func @transform_4(%arg0: i32) -> (i32, i32) {
    %c0_i32 = arith.constant 0 : i32
    %c0_i32_0 = arith.constant 0 : i32
    return %arg0, %c0_i32 : i32, i32
  }
  func.func @transform_5(%arg0: i32) -> (i32, i32) {
    %c0_i32 = arith.constant 0 : i32
    %c0_i32_0 = arith.constant 0 : i32
    %c0_i32_1 = arith.constant 0 : i32
    return %c0_i32, %c0_i32_0 : i32, i32
  }
}

module attributes {stable_mosaic.version = 11 : i64} {
  func.func @matmul_bias_kernel(%arg0: i32, %arg1: memref<16x128xf32, #tpu.memory_space<vmem>>, %arg2: memref<128x10xf32, #tpu.memory_space<vmem>>, %arg3: memref<1x10xf32, #tpu.memory_space<vmem>>, %arg4: memref<16x10xf32, #tpu.memory_space<vmem>>) attributes {dimension_semantics = [#tpu.dimension_semantics<parallel>], iteration_bounds = array<i64: 1>, scalar_prefetch = 0 : i64, scratch_operands = 0 : i64, tpu.core_type = #tpu.core_type<tc>, window_params = [{transform_indices = @transform_0, window_bounds = array<i64: 16, 128>}, {pipeline_mode = #tpu.pipeline_mode<synchronous>, transform_indices = @transform_1, window_bounds = array<i64: 128, 10>}, {pipeline_mode = #tpu.pipeline_mode<synchronous>, transform_indices = @transform_2, window_bounds = array<i64: 1, 10>}, {transform_indices = @transform_3, window_bounds = array<i64: 16, 10>}]} {
    %c0 = arith.constant 0 : index
    %c0_0 = arith.constant 0 : index
    %0 = vector.load %arg1[%c0, %c0_0] : memref<16x128xf32, #tpu.memory_space<vmem>>, vector<16x128xf32>
    %c0_1 = arith.constant 0 : index
    %c0_2 = arith.constant 0 : index
    %1 = vector.load %arg2[%c0_1, %c0_2] : memref<128x10xf32, #tpu.memory_space<vmem>>, vector<128x10xf32>
    %cst = arith.constant dense<0.000000e+00> : vector<16x10xf32>
    %2 = tpu.matmul %0, %1, %cst {dimension_numbers = #tpu.dot_dimension_numbers<[1], [0], [0], [1], [0, 0, 1, 1], [], []>} : vector<16x128xf32>, vector<128x10xf32>, vector<16x10xf32> -> vector<16x10xf32>
    %c0_3 = arith.constant 0 : index
    %c0_4 = arith.constant 0 : index
    %3 = vector.load %arg3[%c0_3, %c0_4] : memref<1x10xf32, #tpu.memory_space<vmem>>, vector<1x10xf32>
    %4 = vector.broadcast %3 : vector<1x10xf32> to vector<16x10xf32>
    %5 = arith.addf %2, %4 : vector<16x10xf32>
    %c0_5 = arith.constant 0 : index
    %c0_6 = arith.constant 0 : index
    %6 = vector.load %arg4[%c0_5, %c0_6] : memref<16x10xf32, #tpu.memory_space<vmem>>, vector<16x10xf32>
    tpu.vector_store %arg4[%c0_5, %c0_6], %5 {strides = array<i32>} : memref<16x10xf32, #tpu.memory_space<vmem>>, vector<16x10xf32>,
    return
  }
  func.func @transform_0(%arg0: i32) -> (i32, i32) {
    %c0_i32 = arith.constant 0 : i32
    %c0_i32_0 = arith.constant 0 : i32
    return %arg0, %c0_i32 : i32, i32
  }
  func.func @transform_1(%arg0: i32) -> (i32, i32) {
    %c0_i32 = arith.constant 0 : i32
    %c0_i32_0 = arith.constant 0 : i32
    %c0_i32_1 = arith.constant 0 : i32
    return %c0_i32, %c0_i32_0 : i32, i32
  }
  func.func @transform_2(%arg0: i32) -> (i32, i32) {
    %c0_i32 = arith.constant 0 : i32
    %c0_i32_0 = arith.constant 0 : i32
    %c0_i32_1 = arith.constant 0 : i32
    return %c0_i32, %c0_i32_0 : i32, i32
  }
  func.func @transform_3(%arg0: i32) -> (i32, i32) {
    %c0_i32 = arith.constant 0 : i32
    %c0_i32_0 = arith.constant 0 : i32
    return %arg0, %c0_i32 : i32, i32
  }
}

</mosaic_0001>

<llo_original>
// kernel: lstm_forward.5
$region0: #{lstm_forward.5}
  #allocation0 [shape = 'u32[]', space=smem, size = 0x4, offset = 0x4, fixed_abs, tag = 'smem constant byte address 0x4 - core index']
  #allocation1 [shape = 'u32[72,128]{1,0:T(1,128)}', space=vmem, size = 0x9000, scoped, tag = 'internal scratch']
  %s0 = inlined_call_operand.vmem [shape: f32[16,128], index: 0, kind: input, shape index: {}]
  %s1 = inlined_call_operand.vmem [shape: f32[128,10], index: 1, kind: input, shape index: {}]
  %s2 = inlined_call_operand.vmem [shape: f32[1,10], index: 2, kind: input, shape index: {}]
  %s3 = inlined_call_operand.vmem [shape: f32[16,10], index: 3, kind: output, shape index: {}]
  %s4 = sld [smem:[#allocation0]]
  $region22: #{lstm_forward.5} parent=0
    _
  %s6 = ssub.s32 1, %s4
  %s7 = scalar_select 0, %s6, %s4
  // Predicated region
  $region2: #{lstm_forward.5} parent=0 // pred_check
    _
  $region3: #{lstm_forward.5} parent=0 // pred_check_branch
    %9 = sbr.rel (0) target = $region5
  $region4: #{lstm_forward.5} parent=0 // pred_region
    _
  $region5: #{lstm_forward.5} parent=0 // pred_fallthru
    _
  // Predicated region
  $region6: #{lstm_forward.5} parent=0 // pred_check
    _
  $region7: #{lstm_forward.5} parent=0 // pred_check_branch
    %11 = sbr.rel (0) target = $region9
  $region8: #{lstm_forward.5} parent=0 // pred_region
    _
  $region9: #{lstm_forward.5} parent=0 // pred_fallthru
    _
  // Predicated region
  $region10: #{lstm_forward.5} parent=0 // pred_check
    _
  $region11: #{lstm_forward.5} parent=0 // pred_check_branch
    %13 = sbr.rel (0) target = $region13
  $region12: #{lstm_forward.5} parent=0 // pred_region
    _
  $region13: #{lstm_forward.5} parent=0 // pred_fallthru
    _
  %v14 = vld [vmem:[%s0] sm:$0xff]
  %v15 = vld [vmem:[%s0 + $0x8] sm:$0xff]
  %v16 = vld [vmem:[%s1] sm:$0xff]
  %v17 = vld [vmem:[%s1 + $0x8] sm:$0xff]
  %v18 = vld [vmem:[%s1 + $0x10] sm:$0xff]
  %v19 = vld [vmem:[%s1 + $0x18] sm:$0xff]
  %v20 = vld [vmem:[%s1 + $0x20] sm:$0xff]
  %v21 = vld [vmem:[%s1 + $0x28] sm:$0xff]
  %v22 = vld [vmem:[%s1 + $0x30] sm:$0xff]
  %v23 = vld [vmem:[%s1 + $0x38] sm:$0xff]
  %v24 = vld [vmem:[%s1 + $0x40] sm:$0xff]
  %v25 = vld [vmem:[%s1 + $0x48] sm:$0xff]
  %v26 = vld [vmem:[%s1 + $0x50] sm:$0xff]
  %v27 = vld [vmem:[%s1 + $0x58] sm:$0xff]
  %v28 = vld [vmem:[%s1 + $0x60] sm:$0xff]
  %v29 = vld [vmem:[%s1 + $0x68] sm:$0xff]
  %v30 = vld [vmem:[%s1 + $0x70] sm:$0xff]
  %v31 = vld [vmem:[%s1 + $0x78] sm:$0xff]
  %v32 = vld [vmem:[%s2] sm:$0x1]
  %v34 = vperm.slane %v32, 0
  %36 = vmatpush.msra.mxu0 %v31
  %37 = vmatpush.msra.mxu0 %v30
  %38 = vmatpush.msra.mxu0 %v29
  %39 = vmatpush.msra.mxu0 %v28
  %40 = vmatpush.msra.mxu0 %v27
  %41 = vmatpush.msra.mxu0 %v26
  %42 = vmatpush.msra.mxu0 %v25
  %43 = vmatpush.msra.mxu0 %v24
  %44 = vmatpush.msra.mxu0 %v23
  %45 = vmatpush.msra.mxu0 %v22
  %46 = vmatpush.msra.mxu0 %v21
  %47 = vmatpush.msra.mxu0 %v20
  %48 = vmatpush.msra.mxu0 %v19
  %49 = vmatpush.msra.mxu0 %v18
  %50 = vmatpush.msra.mxu0 %v17
  %51 = vmatpush.msra.mxu0 %v16
  %52 = vmatmul.f32.gmra.mxu0 %v14
  %v53 = vpop.f32.mrf.mxu0
  %v54 = vadd.f32 %v34, %v53
  %55 = vmatmul.f32.gmra.mxu0 %v15
  %v56 = vpop.f32.mrf.mxu0
  %v57 = vadd.f32 %v34, %v56
  %58 = vdwg.mxu0
  %vm59 = vcmask 80896
  %60 = vst.msk [vmem:[%s3] sm:$0xff] %vm59, %v54
  %61 = vst.msk [vmem:[%s3 + $0x8] sm:$0xff] %vm59, %v57
  // Predicated region
  $region14: #{lstm_forward.5} parent=0 // pred_check
    _
  $region15: #{lstm_forward.5} parent=0 // pred_check_branch
    %63 = sbr.rel (0) target = $region17
  $region16: #{lstm_forward.5} parent=0 // pred_region
    _
  $region17: #{lstm_forward.5} parent=0 // pred_fallthru
    _
  // Predicated region
  $region18: #{lstm_forward.5} parent=0 // pred_check
    _
  $region19: #{lstm_forward.5} parent=0 // pred_check_branch
    %65 = sbr.rel (0) target = $region21
  $region20: #{lstm_forward.5} parent=0 // pred_region
    _
  $region21: #{lstm_forward.5} parent=0 // pred_fallthru
    _

// kernel: lstm_forward.3
$region0: #{lstm_forward.3}
  #allocation0 [shape = 'u32[]', space=smem, size = 0x4, offset = 0x4, fixed_abs, tag = 'smem constant byte address 0x4 - core index']
  #allocation1 [shape = 'u32[72,128]{1,0:T(1,128)}', space=vmem, size = 0x9000, scoped, tag = 'internal scratch']
  #allocation2 [shape = 'f32[8,128]{1,0:T(8,128)}', space=vmem, size = 0x1000, scoped, tag = 'scratch operand']
  #allocation3 [shape = 'f32[8,128]{1,0:T(8,128)}', space=vmem, size = 0x1000, scoped, tag = 'scratch operand']
  #allocation4 [shape = 'f32[64,512]{1,0:T(8,128)}', space=vmem, size = 0x20000, scoped, tag = 'scratch operand']
  %s0 = inlined_call_operand.vmem [shape: bf16[64,16], index: 0, kind: input, shape index: {}]
  %s1 = inlined_call_operand.vmem [shape: bf16[16,512], index: 1, kind: input, shape index: {}]
  %s2 = inlined_call_operand.hbm [shape: bf16[128,512], index: 2, kind: input, shape index: {}]
  %s3 = inlined_call_operand.vmem [shape: f32[1,512], index: 3, kind: input, shape index: {}]
  %s4 = inlined_call_operand.vmem [shape: bf16[64,128], index: 4, kind: output, shape index: {0}]
  %s5 = inlined_call_operand.vmem [shape: f32[8,128], index: 5, kind: output, shape index: {1}]
  %6 = xla_tuple %s4, %s5
  %s7 = sld [smem:[#allocation0]]
  $region42: #{lstm_forward.3} parent=0
    _
  %s9 = ssub.s32 1, %s7
  %s10 = scalar_select 0, %s9, %s7
  $region1: #{lstm_forward.3} parent=0
    #allocation5 [shape = 'u8[131072]{0}', space=vmem, size = 0x20000, scoped, tag = 'input window, operand 2, single buffered']
    #allocation6 [shape = 's32[1]{0}', space=sflag, size = 0x4, scoped, tag = 'scoped memory for lstm_forward.3']
    %11 = vsyncpa [#allocation6], 0
    // Predicated region
    $region2: #{lstm_forward.3} parent=1 // pred_check
      _
    $region3: #{lstm_forward.3} parent=1 // pred_check_branch
      %13 = sbr.rel (0) target = $region5
    $region4: #{lstm_forward.3} parent=1 // pred_region
      _
    $region5: #{lstm_forward.3} parent=1 // pred_fallthru
      _
    // Predicated region
    $region6: #{lstm_forward.3} parent=1 // pred_check
      _
    $region7: #{lstm_forward.3} parent=1 // pred_check_branch
      %15 = sbr.rel (0) target = $region9
    $region8: #{lstm_forward.3} parent=1 // pred_region
      _
    $region9: #{lstm_forward.3} parent=1 // pred_fallthru
      _
    // Predicated region
    $region10: #{lstm_forward.3} parent=1 // pred_check
      _
    $region11: #{lstm_forward.3} parent=1 // pred_check_branch
      %17 = sbr.rel (0) target = $region13
    $region12: #{lstm_forward.3} parent=1 // pred_region
      %19 = vsyncadd [#allocation6], 0
      %s20 = sshll.u32 %s2, 4
      %s21 = int_to_ptr.hbm [resolvable:$true] %s20
      %s22 = sshll.u32 [#allocation5], 4
      %s23 = int_to_ptr.vmem [resolvable:$true] %s22
      %28 = dma.hbm_to_vmem [thread:$0]  %s21, 4096, %s23, [#allocation6], 256, 256, 16
    $region13: #{lstm_forward.3} parent=1 // pred_fallthru
      _
    // Predicated region
    $region14: #{lstm_forward.3} parent=1 // pred_check
      _
    $region15: #{lstm_forward.3} parent=1 // pred_check_branch
      %30 = sbr.rel (0) target = $region17
    $region16: #{lstm_forward.3} parent=1 // pred_region
      _
    $region17: #{lstm_forward.3} parent=1 // pred_fallthru
      _
    // Predicated region
    $region18: #{lstm_forward.3} parent=1 // pred_check
      _
    $region19: #{lstm_forward.3} parent=1 // pred_check_branch
      %32 = sbr.rel (0) target = $region21
    $region20: #{lstm_forward.3} parent=1 // pred_region
      %34 = dma.done [#allocation6], 4096
    $region21: #{lstm_forward.3} parent=1 // pred_fallthru
      _
    %p36 = scmp.eq.s32.totalorder 0, 0
    // Predicated region
    $region22: #{lstm_forward.3} parent=1 // pred_check
      %p37 = pneg %p36
    $region23: #{lstm_forward.3} parent=1 // pred_check_branch
      %39 = sbr.rel (%p37) target = $region25
    $region24: #{lstm_forward.3} parent=1 // pred_region
      %40 = vst [vmem:[#allocation2] sm:$0xff] 0.0
      %41 = vst [vmem:[#allocation3] sm:$0xff] 0.0
    $region25: #{lstm_forward.3} parent=1 // pred_fallthru
      _
    %v42 = vld [vmem:[%s0] sm:$0xf]
    %v43 = vld [vmem:[%s0 + $0x4] sm:$0xf]
    %v44 = vld [vmem:[%s0 + $0x8] sm:$0xf]
    %v45 = vld [vmem:[%s0 + $0xc] sm:$0xf]
    %v46 = vld [vmem:[%s0 + $0x10] sm:$0xf]
    %v47 = vld [vmem:[%s0 + $0x14] sm:$0xf]
    %v48 = vld [vmem:[%s0 + $0x18] sm:$0xf]
    %v49 = vld [vmem:[%s0 + $0x1c] sm:$0xf]
    %v50 = vld [vmem:[%s1] sm:$0xff]
    %v51 = vld [vmem:[%s1 + $0x8] sm:$0xff]
    %v52 = vld [vmem:[%s1 + $0x10] sm:$0xff]
    %v53 = vld [vmem:[%s1 + $0x18] sm:$0xff]
    %v54 = vld [vmem:[%s3] sm:$0xf]
    %v56 = vperm.slane %v54, 0
    %v57 = vperm.slane %v54, 1
    %v58 = vperm.slane %v54, 2
    %v59 = vperm.slane %v54, 3
    %v72 = vunpack.c.l.b16 %v42
    %v73 = vunpack.c.l.b16 %v43
    %v74 = vunpack.c.l.b16 %v44
    %v75 = vunpack.c.l.b16 %v45
    %v76 = vunpack.c.l.b16 %v46
    %v77 = vunpack.c.l.b16 %v47
    %v78 = vunpack.c.l.b16 %v48
    %v79 = vunpack.c.l.b16 %v49
    %v80 = vpack.c.b16 %v73, %v72
    %v81 = vpack.c.b16 %v75, %v74
    %v82 = vpack.c.b16 %v77, %v76
    %v83 = vpack.c.b16 %v79, %v78
    %v88 = vunpack.c.l.b16 %v50
    %v89 = vunpack.c.h.b16 %v50
    %v90 = vunpack.c.l.b16 %v51
    %v91 = vunpack.c.h.b16 %v51
    %v92 = vunpack.c.l.b16 %v52
    %v93 = vunpack.c.h.b16 %v52
    %v94 = vunpack.c.l.b16 %v53
    %v95 = vunpack.c.h.b16 %v53
    %v96 = vpack.c.b16 %v92, %v88
    %v97 = vpack.c.b16 %v93, %v89
    %v98 = vpack.c.b16 %v94, %v90
    %v99 = vpack.c.b16 %v95, %v91
    %vm104 = vcmask 130048
    %v106 = vsel %vm104, %v80, 0
    %v109 = vsel %vm104, %v81, 0
    %v112 = vsel %vm104, %v82, 0
    %v115 = vsel %vm104, %v83, 0
    %117 = vmatpush.bf16.msra.mxu0 0
    %118 = vmatpush.bf16.msra.mxu0 0
    %119 = vmatpush.bf16.msra.mxu0 0
    %120 = vmatpush.bf16.msra.mxu0 0
    %121 = vmatpush.bf16.msra.mxu0 0
    %122 = vmatpush.bf16.msra.mxu0 0
    %123 = vmatpush.bf16.msra.mxu0 0
    %124 = vmatpush.bf16.msra.mxu0 %v96
    %125 = vmatmul.bf16.gmra.mxu0 %v106
    %v126 = vpop.f32.mrf.mxu0
    %v127 = vadd.f32 %v56, %v126
    %v128 = vpop.f32.mrf.mxu0
    %v129 = vadd.f32 %v56, %v128
    %130 = vmatmul.bf16.gmra.mxu0 %v109
    %v131 = vpop.f32.mrf.mxu0
    %v132 = vadd.f32 %v56, %v131
    %v133 = vpop.f32.mrf.mxu0
    %v134 = vadd.f32 %v56, %v133
    %135 = vmatmul.bf16.gmra.mxu0 %v112
    %v136 = vpop.f32.mrf.mxu0
    %v137 = vadd.f32 %v56, %v136
    %v138 = vpop.f32.mrf.mxu0
    %v139 = vadd.f32 %v56, %v138
    %140 = vmatmul.bf16.gmra.mxu0 %v115
    %v141 = vpop.f32.mrf.mxu0
    %v142 = vadd.f32 %v56, %v141
    %v143 = vpop.f32.mrf.mxu0
    %v144 = vadd.f32 %v56, %v143
    %145 = vdwg.mxu0
    %146 = vmatpush.bf16.msra.mxu0 0
    %147 = vmatpush.bf16.msra.mxu0 0
    %148 = vmatpush.bf16.msra.mxu0 0
    %149 = vmatpush.bf16.msra.mxu0 0
    %150 = vmatpush.bf16.msra.mxu0 0
    %151 = vmatpush.bf16.msra.mxu0 0
    %152 = vmatpush.bf16.msra.mxu0 0
    %153 = vmatpush.bf16.msra.mxu0 %v97
    %154 = vmatmul.bf16.gmra.mxu0 %v106
    %v155 = vpop.f32.mrf.mxu0
    %v156 = vadd.f32 %v57, %v155
    %v157 = vpop.f32.mrf.mxu0
    %v158 = vadd.f32 %v57, %v157
    %159 = vmatmul.bf16.gmra.mxu0 %v109
    %v160 = vpop.f32.mrf.mxu0
    %v161 = vadd.f32 %v57, %v160
    %v162 = vpop.f32.mrf.mxu0
    %v163 = vadd.f32 %v57, %v162
    %164 = vmatmul.bf16.gmra.mxu0 %v112
    %v165 = vpop.f32.mrf.mxu0
    %v166 = vadd.f32 %v57, %v165
    %v167 = vpop.f32.mrf.mxu0
    %v168 = vadd.f32 %v57, %v167
    %169 = vmatmul.bf16.gmra.mxu0 %v115
    %v170 = vpop.f32.mrf.mxu0
    %v171 = vadd.f32 %v57, %v170
    %v172 = vpop.f32.mrf.mxu0
    %v173 = vadd.f32 %v57, %v172
    %174 = vdwg.mxu0
    %175 = vmatpush.bf16.msra.mxu0 0
    %176 = vmatpush.bf16.msra.mxu0 0
    %177 = vmatpush.bf16.msra.mxu0 0
    %178 = vmatpush.bf16.msra.mxu0 0
    %179 = vmatpush.bf16.msra.mxu0 0
    %180 = vmatpush.bf16.msra.mxu0 0
    %181 = vmatpush.bf16.msra.mxu0 0
    %182 = vmatpush.bf16.msra.mxu0 %v98
    %183 = vmatmul.bf16.gmra.mxu0 %v106
    %v184 = vpop.f32.mrf.mxu0
    %v185 = vadd.f32 %v58, %v184
    %v186 = vpop.f32.mrf.mxu0
    %v187 = vadd.f32 %v58, %v186
    %188 = vmatmul.bf16.gmra.mxu0 %v109
    %v189 = vpop.f32.mrf.mxu0
    %v190 = vadd.f32 %v58, %v189
    %v191 = vpop.f32.mrf.mxu0
    %v192 = vadd.f32 %v58, %v191
    %193 = vmatmul.bf16.gmra.mxu0 %v112
    %v194 = vpop.f32.mrf.mxu0
    %v195 = vadd.f32 %v58, %v194
    %v196 = vpop.f32.mrf.mxu0
    %v197 = vadd.f32 %v58, %v196
    %198 = vmatmul.bf16.gmra.mxu0 %v115
    %v199 = vpop.f32.mrf.mxu0
    %v200 = vadd.f32 %v58, %v199
    %v201 = vpop.f32.mrf.mxu0
    %v202 = vadd.f32 %v58, %v201
    %203 = vdwg.mxu0
    %204 = vmatpush.bf16.msra.mxu0 0
    %205 = vmatpush.bf16.msra.mxu0 0
    %206 = vmatpush.bf16.msra.mxu0 0
    %207 = vmatpush.bf16.msra.mxu0 0
    %208 = vmatpush.bf16.msra.mxu0 0
    %209 = vmatpush.bf16.msra.mxu0 0
    %210 = vmatpush.bf16.msra.mxu0 0
    %211 = vmatpush.bf16.msra.mxu0 %v99
    %212 = vmatmul.bf16.gmra.mxu0 %v106
    %v213 = vpop.f32.mrf.mxu0
    %v214 = vadd.f32 %v59, %v213
    %v215 = vpop.f32.mrf.mxu0
    %v216 = vadd.f32 %v59, %v215
    %217 = vmatmul.bf16.gmra.mxu0 %v109
    %v218 = vpop.f32.mrf.mxu0
    %v219 = vadd.f32 %v59, %v218
    %v220 = vpop.f32.mrf.mxu0
    %v221 = vadd.f32 %v59, %v220
    %222 = vmatmul.bf16.gmra.mxu0 %v112
    %v223 = vpop.f32.mrf.mxu0
    %v224 = vadd.f32 %v59, %v223
    %v225 = vpop.f32.mrf.mxu0
    %v226 = vadd.f32 %v59, %v225
    %227 = vmatmul.bf16.gmra.mxu0 %v115
    %v228 = vpop.f32.mrf.mxu0
    %v229 = vadd.f32 %v59, %v228
    %v230 = vpop.f32.mrf.mxu0
    %v231 = vadd.f32 %v59, %v230
    %232 = vdwg.mxu0
    %233 = vst [vmem:[#allocation4] sm:$0xff] %v127
    %234 = vst [vmem:[#allocation4 + $0x8] sm:$0xff] %v156
    %235 = vst [vmem:[#allocation4 + $0x10] sm:$0xff] %v185
    %236 = vst [vmem:[#allocation4 + $0x18] sm:$0xff] %v214
    %237 = vst [vmem:[#allocation4 + $0x20] sm:$0xff] %v129
    %238 = vst [vmem:[#allocation4 + $0x28] sm:$0xff] %v158
    %239 = vst [vmem:[#allocation4 + $0x30] sm:$0xff] %v187
    %240 = vst [vmem:[#allocation4 + $0x38] sm:$0xff] %v216
    %241 = vst [vmem:[#allocation4 + $0x40] sm:$0xff] %v132
    %242 = vst [vmem:[#allocation4 + $0x48] sm:$0xff] %v161
    %243 = vst [vmem:[#allocation4 + $0x50] sm:$0xff] %v190
    %244 = vst [vmem:[#allocation4 + $0x58] sm:$0xff] %v219
    %245 = vst [vmem:[#allocation4 + $0x60] sm:$0xff] %v134
    %246 = vst [vmem:[#allocation4 + $0x68] sm:$0xff] %v163
    %247 = vst [vmem:[#allocation4 + $0x70] sm:$0xff] %v192
    %248 = vst [vmem:[#allocation4 + $0x78] sm:$0xff] %v221
    %249 = vst [vmem:[#allocation4 + $0x80] sm:$0xff] %v137
    %250 = vst [vmem:[#allocation4 + $0x88] sm:$0xff] %v166
    %251 = vst [vmem:[#allocation4 + $0x90] sm:$0xff] %v195
    %252 = vst [vmem:[#allocation4 + $0x98] sm:$0xff] %v224
    %253 = vst [vmem:[#allocation4 + $0xa0] sm:$0xff] %v139
    %254 = vst [vmem:[#allocation4 + $0xa8] sm:$0xff] %v168
    %255 = vst [vmem:[#allocation4 + $0xb0] sm:$0xff] %v197
    %256 = vst [vmem:[#allocation4 + $0xb8] sm:$0xff] %v226
    %257 = vst [vmem:[#allocation4 + $0xc0] sm:$0xff] %v142
    %258 = vst [vmem:[#allocation4 + $0xc8] sm:$0xff] %v171
    %259 = vst [vmem:[#allocation4 + $0xd0] sm:$0xff] %v200
    %260 = vst [vmem:[#allocation4 + $0xd8] sm:$0xff] %v229
    %261 = vst [vmem:[#allocation4 + $0xe0] sm:$0xff] %v144
    %262 = vst [vmem:[#allocation4 + $0xe8] sm:$0xff] %v173
    %263 = vst [vmem:[#allocation4 + $0xf0] sm:$0xff] %v202
    %264 = vst [vmem:[#allocation4 + $0xf8] sm:$0xff] %v231
    %v265 = vld [vmem:[#allocation5] sm:$0xff]
    %v266 = vld [vmem:[#allocation5 + $0x8] sm:$0xff]
    %v267 = vld [vmem:[#allocation5 + $0x10] sm:$0xff]
    %v268 = vld [vmem:[#allocation5 + $0x18] sm:$0xff]
    %v269 = vld [vmem:[#allocation5 + $0x20] sm:$0xff]
    %v270 = vld [vmem:[#allocation5 + $0x28] sm:$0xff]
    %v271 = vld [vmem:[#allocation5 + $0x30] sm:$0xff]
    %v272 = vld [vmem:[#allocation5 + $0x38] sm:$0xff]
    %v273 = vld [vmem:[#allocation5 + $0x40] sm:$0xff]
    %v274 = vld [vmem:[#allocation5 + $0x48] sm:$0xff]
    %v275 = vld [vmem:[#allocation5 + $0x50] sm:$0xff]
    %v276 = vld [vmem:[#allocation5 + $0x58] sm:$0xff]
    %v277 = vld [vmem:[#allocation5 + $0x60] sm:$0xff]
    %v278 = vld [vmem:[#allocation5 + $0x68] sm:$0xff]
    %v279 = vld [vmem:[#allocation5 + $0x70] sm:$0xff]
    %v280 = vld [vmem:[#allocation5 + $0x78] sm:$0xff]
    %v281 = vld [vmem:[#allocation5 + $0x80] sm:$0xff]
    %v282 = vld [vmem:[#allocation5 + $0x88] sm:$0xff]
    %v283 = vld [vmem:[#allocation5 + $0x90] sm:$0xff]
    %v284 = vld [vmem:[#allocation5 + $0x98] sm:$0xff]
    %v285 = vld [vmem:[#allocation5 + $0xa0] sm:$0xff]
    %v286 = vld [vmem:[#allocation5 + $0xa8] sm:$0xff]
    %v287 = vld [vmem:[#allocation5 + $0xb0] sm:$0xff]
    %v288 = vld [vmem:[#allocation5 + $0xb8] sm:$0xff]
    %v289 = vld [vmem:[#allocation5 + $0xc0] sm:$0xff]
    %v290 = vld [vmem:[#allocation5 + $0xc8] sm:$0xff]
    %v291 = vld [vmem:[#allocation5 + $0xd0] sm:$0xff]
    %v292 = vld [vmem:[#allocation5 + $0xd8] sm:$0xff]
    %v293 = vld [vmem:[#allocation5 + $0xe0] sm:$0xff]
    %v294 = vld [vmem:[#allocation5 + $0xe8] sm:$0xff]
    %v295 = vld [vmem:[#allocation5 + $0xf0] sm:$0xff]
    %v296 = vld [vmem:[#allocation5 + $0xf8] sm:$0xff]
    %v297 = vld [vmem:[#allocation2] sm:$0xff]
    %v298 = vld [vmem:[#allocation3] sm:$0xff]
    %s299 = smul.u32 0, 4
    %s300 = smul.addr %s299, 8
    %s301 = scalar_lea.vmem [#allocation4], %s300
    %v302 = vld [vmem:[%s301] sm:$0xff]
    %v303 = vld [vmem:[%s301 + $0x8] sm:$0xff]
    %v304 = vld [vmem:[%s301 + $0x10] sm:$0xff]
    %v305 = vld [vmem:[%s301 + $0x18] sm:$0xff]
    %v306 = vpack.c.bf16 %v297, %v297
    %v339 = vunpack.c.l.b16 %v265
    %v340 = vunpack.c.h.b16 %v265
    %v341 = vunpack.c.l.b16 %v266
    %v342 = vunpack.c.h.b16 %v266
    %v343 = vunpack.c.l.b16 %v267
    %v344 = vunpack.c.h.b16 %v267
    %v345 = vunpack.c.l.b16 %v268
    %v346 = vunpack.c.h.b16 %v268
    %v347 = vunpack.c.l.b16 %v269
    %v348 = vunpack.c.h.b16 %v269
    %v349 = vunpack.c.l.b16 %v270
    %v350 = vunpack.c.h.b16 %v270
    %v351 = vunpack.c.l.b16 %v271
    %v352 = vunpack.c.h.b16 %v271
    %v353 = vunpack.c.l.b16 %v272
    %v354 = vunpack.c.h.b16 %v272
    %v355 = vunpack.c.l.b16 %v273
    %v356 = vunpack.c.h.b16 %v273
    %v357 = vunpack.c.l.b16 %v274
    %v358 = vunpack.c.h.b16 %v274
    %v359 = vunpack.c.l.b16 %v275
    %v360 = vunpack.c.h.b16 %v275
    %v361 = vunpack.c.l.b16 %v276
    %v362 = vunpack.c.h.b16 %v276
    %v363 = vunpack.c.l.b16 %v277
    %v364 = vunpack.c.h.b16 %v277
    %v365 = vunpack.c.l.b16 %v278
    %v366 = vunpack.c.h.b16 %v278
    %v367 = vunpack.c.l.b16 %v279
    %v368 = vunpack.c.h.b16 %v279
    %v369 = vunpack.c.l.b16 %v280
    %v370 = vunpack.c.h.b16 %v280
    %v371 = vunpack.c.l.b16 %v281
    %v372 = vunpack.c.h.b16 %v281
    %v373 = vunpack.c.l.b16 %v282
    %v374 = vunpack.c.h.b16 %v282
    %v375 = vunpack.c.l.b16 %v283
    %v376 = vunpack.c.h.b16 %v283
    %v377 = vunpack.c.l.b16 %v284
    %v378 = vunpack.c.h.b16 %v284
    %v379 = vunpack.c.l.b16 %v285
    %v380 = vunpack.c.h.b16 %v285
    %v381 = vunpack.c.l.b16 %v286
    %v382 = vunpack.c.h.b16 %v286
    %v383 = vunpack.c.l.b16 %v287
    %v384 = vunpack.c.h.b16 %v287
    %v385 = vunpack.c.l.b16 %v288
    %v386 = vunpack.c.h.b16 %v288
    %v387 = vunpack.c.l.b16 %v289
    %v388 = vunpack.c.h.b16 %v289
    %v389 = vunpack.c.l.b16 %v290
    %v390 = vunpack.c.h.b16 %v290
    %v391 = vunpack.c.l.b16 %v291
    %v392 = vunpack.c.h.b16 %v291
    %v393 = vunpack.c.l.b16 %v292
    %v394 = vunpack.c.h.b16 %v292
    %v395 = vunpack.c.l.b16 %v293
    %v396 = vunpack.c.h.b16 %v293
    %v397 = vunpack.c.l.b16 %v294
    %v398 = vunpack.c.h.b16 %v294
    %v399 = vunpack.c.l.b16 %v295
    %v400 = vunpack.c.h.b16 %v295
    %v401 = vunpack.c.l.b16 %v296
    %v402 = vunpack.c.h.b16 %v296
    %v403 = vpack.c.b16 %v343, %v339
    %v404 = vpack.c.b16 %v344, %v340
    %v405 = vpack.c.b16 %v345, %v341
    %v406 = vpack.c.b16 %v346, %v342
    %v407 = vpack.c.b16 %v351, %v347
    %v408 = vpack.c.b16 %v352, %v348
    %v409 = vpack.c.b16 %v353, %v349
    %v410 = vpack.c.b16 %v354, %v350
    %v411 = vpack.c.b16 %v359, %v355
    %v412 = vpack.c.b16 %v360, %v356
    %v413 = vpack.c.b16 %v361, %v357
    %v414 = vpack.c.b16 %v362, %v358
    %v415 = vpack.c.b16 %v367, %v363
    %v416 = vpack.c.b16 %v368, %v364
    %v417 = vpack.c.b16 %v369, %v365
    %v418 = vpack.c.b16 %v370, %v366
    %v419 = vpack.c.b16 %v375, %v371
    %v420 = vpack.c.b16 %v376, %v372
    %v421 = vpack.c.b16 %v377, %v373
    %v422 = vpack.c.b16 %v378, %v374
    %v423 = vpack.c.b16 %v383, %v379
    %v424 = vpack.c.b16 %v384, %v380
    %v425 = vpack.c.b16 %v385, %v381
    %v426 = vpack.c.b16 %v386, %v382
    %v427 = vpack.c.b16 %v391, %v387
    %v428 = vpack.c.b16 %v392, %v388
    %v429 = vpack.c.b16 %v393, %v389
    %v430 = vpack.c.b16 %v394, %v390
    %v431 = vpack.c.b16 %v399, %v395
    %v432 = vpack.c.b16 %v400, %v396
    %v433 = vpack.c.b16 %v401, %v397
    %v434 = vpack.c.b16 %v402, %v398
    %467 = vmatpush.bf16.msra.mxu0 %v431
    %468 = vmatpush.bf16.msra.mxu0 %v427
    %469 = vmatpush.bf16.msra.mxu0 %v423
    %470 = vmatpush.bf16.msra.mxu0 %v419
    %471 = vmatpush.bf16.msra.mxu0 %v415
    %472 = vmatpush.bf16.msra.mxu0 %v411
    %473 = vmatpush.bf16.msra.mxu0 %v407
    %474 = vmatpush.bf16.msra.mxu0 %v403
    %475 = vmatmul.bf16.gmra.mxu0 %v306
    %v476 = vpop.f32.mrf.mxu0
    %v477 = vadd.f32 0.0, %v476
    %v478 = vpop.f32.mrf.mxu0
    %479 = vdwg.mxu0
    %480 = vmatpush.bf16.msra.mxu0 %v432
    %481 = vmatpush.bf16.msra.mxu0 %v428
    %482 = vmatpush.bf16.msra.mxu0 %v424
    %483 = vmatpush.bf16.msra.mxu0 %v420
    %484 = vmatpush.bf16.msra.mxu0 %v416
    %485 = vmatpush.bf16.msra.mxu0 %v412
    %486 = vmatpush.bf16.msra.mxu0 %v408
    %487 = vmatpush.bf16.msra.mxu0 %v404
    %488 = vmatmul.bf16.gmra.mxu0 %v306
    %v489 = vpop.f32.mrf.mxu0
    %v490 = vadd.f32 0.0, %v489
    %v491 = vpop.f32.mrf.mxu0
    %492 = vdwg.mxu0
    %493 = vmatpush.bf16.msra.mxu0 %v433
    %494 = vmatpush.bf16.msra.mxu0 %v429
    %495 = vmatpush.bf16.msra.mxu0 %v425
    %496 = vmatpush.bf16.msra.mxu0 %v421
    %497 = vmatpush.bf16.msra.mxu0 %v417
    %498 = vmatpush.bf16.msra.mxu0 %v413
    %499 = vmatpush.bf16.msra.mxu0 %v409
    %500 = vmatpush.bf16.msra.mxu0 %v405
    %501 = vmatmul.bf16.gmra.mxu0 %v306
    %v502 = vpop.f32.mrf.mxu0
    %v503 = vadd.f32 0.0, %v502
    %v504 = vpop.f32.mrf.mxu0
    %505 = vdwg.mxu0
    %506 = vmatpush.bf16.msra.mxu0 %v434
    %507 = vmatpush.bf16.msra.mxu0 %v430
    %508 = vmatpush.bf16.msra.mxu0 %v426
    %509 = vmatpush.bf16.msra.mxu0 %v422
    %510 = vmatpush.bf16.msra.mxu0 %v418
    %511 = vmatpush.bf16.msra.mxu0 %v414
    %512 = vmatpush.bf16.msra.mxu0 %v410
    %513 = vmatpush.bf16.msra.mxu0 %v406
    %514 = vmatmul.bf16.gmra.mxu0 %v306
    %v515 = vpop.f32.mrf.mxu0
    %v516 = vadd.f32 0.0, %v515
    %v517 = vpop.f32.mrf.mxu0
    %518 = vdwg.mxu0
    %v519 = vadd.f32 %v302, %v477
    %v520 = vadd.f32 %v303, %v490
    %v521 = vadd.f32 %v304, %v503
    %v522 = vadd.f32 %v305, %v516
    %v523 = vxor.u32 %v519, 2147483648
    %v524 = vxor.u32 %v520, 2147483648
    %v525 = vxor.u32 %v521, 2147483648
    %v526 = vmul.f32 %v523, 1.442695
    %v527 = vpow.pop %v526
    %v528 = vmul.f32 %v524, 1.442695
    %v529 = vpow.pop %v528
    %v530 = vmul.f32 %v525, 1.442695
    %v531 = vpow.pop %v530
    %v532 = vadd.f32 %v527, 1.0
    %v533 = vadd.f32 %v529, 1.0
    %v534 = vadd.f32 %v531, 1.0
    %v535 = vrcp.pop %v532
    %v536 = vmul.f32 %v532, %v535
    %v537 = vsub.f32 1.0, %v536
    %v538 = vmul.f32 %v535, %v537
    %v539 = vadd.f32 %v535, %v538
    %vm540 = vweird.f32 %v532
    %vm541 = vweird.f32 %v535
    %vm542 = vmor %vm540, %vm541
    %v543 = vsel %vm542, %v535, %v539
    %v544 = vand.u32 2147483647, %v532
    %vm545 = vcmp.eq.f32.partialorder %v544, 8.507059e+37
    %v546 = vand.u32 %v532, 2147483648
    %v547 = vor.u32 1.1754944e-38, %v546
    %v548 = vsel %vm545, %v547, %v543
    %v549 = vmul.f32 1.0, %v548
    %v550 = vrcp.pop %v533
    %v551 = vmul.f32 %v533, %v550
    %v552 = vsub.f32 1.0, %v551
    %v553 = vmul.f32 %v550, %v552
    %v554 = vadd.f32 %v550, %v553
    %vm555 = vweird.f32 %v533
    %vm556 = vweird.f32 %v550
    %vm557 = vmor %vm555, %vm556
    %v558 = vsel %vm557, %v550, %v554
    %v559 = vand.u32 2147483647, %v533
    %vm560 = vcmp.eq.f32.partialorder %v559, 8.507059e+37
    %v561 = vand.u32 %v533, 2147483648
    %v562 = vor.u32 1.1754944e-38, %v561
    %v563 = vsel %vm560, %v562, %v558
    %v564 = vmul.f32 1.0, %v563
    %v565 = vrcp.pop %v534
    %v566 = vmul.f32 %v534, %v565
    %v567 = vsub.f32 1.0, %v566
    %v568 = vmul.f32 %v565, %v567
    %v569 = vadd.f32 %v565, %v568
    %vm570 = vweird.f32 %v534
    %vm571 = vweird.f32 %v565
    %vm572 = vmor %vm570, %vm571
    %v573 = vsel %vm572, %v565, %v569
    %v574 = vand.u32 2147483647, %v534
    %vm575 = vcmp.eq.f32.partialorder %v574, 8.507059e+37
    %v576 = vand.u32 %v534, 2147483648
    %v577 = vor.u32 1.1754944e-38, %v576
    %v578 = vsel %vm575, %v577, %v573
    %v579 = vmul.f32 1.0, %v578
    %v580 = vtanh.pop %v522
    %v581 = vmul.f32 %v564, %v298
    %v582 = vmul.f32 %v549, %v580
    %v583 = vadd.f32 %v581, %v582
    %v584 = vtanh.pop %v583
    %v585 = vmul.f32 %v579, %v584
    %v586 = vpack.c.bf16 %v585, %v585
    %587 = vst [vmem:[%s4] sm:$0xf] %v586
    %s588 = smul.u32 1, 4
    %s589 = smul.addr %s588, 8
    %s590 = scalar_lea.vmem [#allocation4], %s589
    %v591 = vld [vmem:[%s590] sm:$0xff]
    %v592 = vld [vmem:[%s590 + $0x8] sm:$0xff]
    %v593 = vld [vmem:[%s590 + $0x10] sm:$0xff]
    %v594 = vld [vmem:[%s590 + $0x18] sm:$0xff]
    %595 = vmatpush.bf16.msra.mxu0 %v431
    %596 = vmatpush.bf16.msra.mxu0 %v427
    %597 = vmatpush.bf16.msra.mxu0 %v423
    %598 = vmatpush.bf16.msra.mxu0 %v419
    %599 = vmatpush.bf16.msra.mxu0 %v415
    %600 = vmatpush.bf16.msra.mxu0 %v411
    %601 = vmatpush.bf16.msra.mxu0 %v407
    %602 = vmatpush.bf16.msra.mxu0 %v403
    %603 = vmatmul.bf16.gmra.mxu0 %v586
    %v604 = vpop.f32.mrf.mxu0
    %v605 = vadd.f32 0.0, %v604
    %v606 = vpop.f32.mrf.mxu0
    %607 = vdwg.mxu0
    %608 = vmatpush.bf16.msra.mxu0 %v432
    %609 = vmatpush.bf16.msra.mxu0 %v428
    %610 = vmatpush.bf16.msra.mxu0 %v424
    %611 = vmatpush.bf16.msra.mxu0 %v420
    %612 = vmatpush.bf16.msra.mxu0 %v416
    %613 = vmatpush.bf16.msra.mxu0 %v412
    %614 = vmatpush.bf16.msra.mxu0 %v408
    %615 = vmatpush.bf16.msra.mxu0 %v404
    %616 = vmatmul.bf16.gmra.mxu0 %v586
    %v617 = vpop.f32.mrf.mxu0
    %v618 = vadd.f32 0.0, %v617
    %v619 = vpop.f32.mrf.mxu0
    %620 = vdwg.mxu0
    %621 = vmatpush.bf16.msra.mxu0 %v433
    %622 = vmatpush.bf16.msra.mxu0 %v429
    %623 = vmatpush.bf16.msra.mxu0 %v425
    %624 = vmatpush.bf16.msra.mxu0 %v421
    %625 = vmatpush.bf16.msra.mxu0 %v417
    %626 = vmatpush.bf16.msra.mxu0 %v413
    %627 = vmatpush.bf16.msra.mxu0 %v409
    %628 = vmatpush.bf16.msra.mxu0 %v405
    %629 = vmatmul.bf16.gmra.mxu0 %v586
    %v630 = vpop.f32.mrf.mxu0
    %v631 = vadd.f32 0.0, %v630
    %v632 = vpop.f32.mrf.mxu0
    %633 = vdwg.mxu0
    %634 = vmatpush.bf16.msra.mxu0 %v434
    %635 = vmatpush.bf16.msra.mxu0 %v430
    %636 = vmatpush.bf16.msra.mxu0 %v426
    %637 = vmatpush.bf16.msra.mxu0 %v422
    %638 = vmatpush.bf16.msra.mxu0 %v418
    %639 = vmatpush.bf16.msra.mxu0 %v414
    %640 = vmatpush.bf16.msra.mxu0 %v410
    %641 = vmatpush.bf16.msra.mxu0 %v406
    %642 = vmatmul.bf16.gmra.mxu0 %v586
    %v643 = vpop.f32.mrf.mxu0
    %v644 = vadd.f32 0.0, %v643
    %v645 = vpop.f32.mrf.mxu0
    %646 = vdwg.mxu0
    %v647 = vadd.f32 %v591, %v605
    %v648 = vadd.f32 %v592, %v618
    %v649 = vadd.f32 %v593, %v631
    %v650 = vadd.f32 %v594, %v644
    %v651 = vxor.u32 %v647, 2147483648
    %v652 = vxor.u32 %v648, 2147483648
    %v653 = vxor.u32 %v649, 2147483648
    %v654 = vmul.f32 %v651, 1.442695
    %v655 = vpow.pop %v654
    %v656 = vmul.f32 %v652, 1.442695
    %v657 = vpow.pop %v656
    %v658 = vmul.f32 %v653, 1.442695
    %v659 = vpow.pop %v658
    %v660 = vadd.f32 %v655, 1.0
    %v661 = vadd.f32 %v657, 1.0
    %v662 = vadd.f32 %v659, 1.0
    %v663 = vrcp.pop %v660
    %v664 = vmul.f32 %v660, %v663
    %v665 = vsub.f32 1.0, %v664
    %v666 = vmul.f32 %v663, %v665
    %v667 = vadd.f32 %v663, %v666
    %vm668 = vweird.f32 %v660
    %vm669 = vweird.f32 %v663
    %vm670 = vmor %vm668, %vm669
    %v671 = vsel %vm670, %v663, %v667
    %v672 = vand.u32 2147483647, %v660
    %vm673 = vcmp.eq.f32.partialorder %v672, 8.507059e+37
    %v674 = vand.u32 %v660, 2147483648
    %v675 = vor.u32 1.1754944e-38, %v674
    %v676 = vsel %vm673, %v675, %v671
    %v677 = vmul.f32 1.0, %v676
    %v678 = vrcp.pop %v661
    %v679 = vmul.f32 %v661, %v678
    %v680 = vsub.f32 1.0, %v679
    %v681 = vmul.f32 %v678, %v680
    %v682 = vadd.f32 %v678, %v681
    %vm683 = vweird.f32 %v661
    %vm684 = vweird.f32 %v678
    %vm685 = vmor %vm683, %vm684
    %v686 = vsel %vm685, %v678, %v682
    %v687 = vand.u32 2147483647, %v661
    %vm688 = vcmp.eq.f32.partialorder %v687, 8.507059e+37
    %v689 = vand.u32 %v661, 2147483648
    %v690 = vor.u32 1.1754944e-38, %v689
    %v691 = vsel %vm688, %v690, %v686
    %v692 = vmul.f32 1.0, %v691
    %v693 = vrcp.pop %v662
    %v694 = vmul.f32 %v662, %v693
    %v695 = vsub.f32 1.0, %v694
    %v696 = vmul.f32 %v693, %v695
    %v697 = vadd.f32 %v693, %v696
    %vm698 = vweird.f32 %v662
    %vm699 = vweird.f32 %v693
    %vm700 = vmor %vm698, %vm699
    %v701 = vsel %vm700, %v693, %v697
    %v702 = vand.u32 2147483647, %v662
    %vm703 = vcmp.eq.f32.partialorder %v702, 8.507059e+37
    %v704 = vand.u32 %v662, 2147483648
    %v705 = vor.u32 1.1754944e-38, %v704
    %v706 = vsel %vm703, %v705, %v701
    %v707 = vmul.f32 1.0, %v706
    %v708 = vtanh.pop %v650
    %v709 = vmul.f32 %v692, %v583
    %v710 = vmul.f32 %v677, %v708
    %v711 = vadd.f32 %v709, %v710
    %v712 = vtanh.pop %v711
    %v713 = vmul.f32 %v707, %v712
    %v714 = vpack.c.bf16 %v713, %v713
    %s715 = scalar_lea.vmem %s4, 4
    %716 = vst [vmem:[%s715] sm:$0xf] %v714
    %s717 = smul.u32 2, 4
    %s718 = smul.addr %s717, 8
    %s719 = scalar_lea.vmem [#allocation4], %s718
    %v720 = vld [vmem:[%s719] sm:$0xff]
    %v721 = vld [vmem:[%s719 + $0x8] sm:$0xff]
    %v722 = vld [vmem:[%s719 + $0x10] sm:$0xff]
    %v723 = vld [vmem:[%s719 + $0x18] sm:$0xff]
    %724 = vmatpush.bf16.msra.mxu0 %v431
    %725 = vmatpush.bf16.msra.mxu0 %v427
    %726 = vmatpush.bf16.msra.mxu0 %v423
    %727 = vmatpush.bf16.msra.mxu0 %v419
    %728 = vmatpush.bf16.msra.mxu0 %v415
    %729 = vmatpush.bf16.msra.mxu0 %v411
    %730 = vmatpush.bf16.msra.mxu0 %v407
    %731 = vmatpush.bf16.msra.mxu0 %v403
    %732 = vmatmul.bf16.gmra.mxu0 %v714
    %v733 = vpop.f32.mrf.mxu0
    %v734 = vadd.f32 0.0, %v733
    %v735 = vpop.f32.mrf.mxu0
    %736 = vdwg.mxu0
    %737 = vmatpush.bf16.msra.mxu0 %v432
    %738 = vmatpush.bf16.msra.mxu0 %v428
    %739 = vmatpush.bf16.msra.mxu0 %v424
    %740 = vmatpush.bf16.msra.mxu0 %v420
    %741 = vmatpush.bf16.msra.mxu0 %v416
    %742 = vmatpush.bf16.msra.mxu0 %v412
    %743 = vmatpush.bf16.msra.mxu0 %v408
    %744 = vmatpush.bf16.msra.mxu0 %v404
    %745 = vmatmul.bf16.gmra.mxu0 %v714
    %v746 = vpop.f32.mrf.mxu0
    %v747 = vadd.f32 0.0, %v746
    %v748 = vpop.f32.mrf.mxu0
    %749 = vdwg.mxu0
    %750 = vmatpush.bf16.msra.mxu0 %v433
    %751 = vmatpush.bf16.msra.mxu0 %v429
    %752 = vmatpush.bf16.msra.mxu0 %v425
    %753 = vmatpush.bf16.msra.mxu0 %v421
    %754 = vmatpush.bf16.msra.mxu0 %v417
    %755 = vmatpush.bf16.msra.mxu0 %v413
    %756 = vmatpush.bf16.msra.mxu0 %v409
    %757 = vmatpush.bf16.msra.mxu0 %v405
    %758 = vmatmul.bf16.gmra.mxu0 %v714
    %v759 = vpop.f32.mrf.mxu0
    %v760 = vadd.f32 0.0, %v759
    %v761 = vpop.f32.mrf.mxu0
    %762 = vdwg.mxu0
    %763 = vmatpush.bf16.msra.mxu0 %v434
    %764 = vmatpush.bf16.msra.mxu0 %v430
    %765 = vmatpush.bf16.msra.mxu0 %v426
    %766 = vmatpush.bf16.msra.mxu0 %v422
    %767 = vmatpush.bf16.msra.mxu0 %v418
    %768 = vmatpush.bf16.msra.mxu0 %v414
    %769 = vmatpush.bf16.msra.mxu0 %v410
    %770 = vmatpush.bf16.msra.mxu0 %v406
    %771 = vmatmul.bf16.gmra.mxu0 %v714
    %v772 = vpop.f32.mrf.mxu0
    %v773 = vadd.f32 0.0, %v772
    %v774 = vpop.f32.mrf.mxu0
    %775 = vdwg.mxu0
    %v776 = vadd.f32 %v720, %v734
    %v777 = vadd.f32 %v721, %v747
    %v778 = vadd.f32 %v722, %v760
    %v779 = vadd.f32 %v723, %v773
    %v780 = vxor.u32 %v776, 2147483648
    %v781 = vxor.u32 %v777, 2147483648
    %v782 = vxor.u32 %v778, 2147483648
    %v783 = vmul.f32 %v780, 1.442695
    %v784 = vpow.pop %v783
    %v785 = vmul.f32 %v781, 1.442695
    %v786 = vpow.pop %v785
    %v787 = vmul.f32 %v782, 1.442695
    %v788 = vpow.pop %v787
    %v789 = vadd.f32 %v784, 1.0
    %v790 = vadd.f32 %v786, 1.0
    %v791 = vadd.f32 %v788, 1.0
    %v792 = vrcp.pop %v789
    %v793 = vmul.f32 %v789, %v792
    %v794 = vsub.f32 1.0, %v793
    %v795 = vmul.f32 %v792, %v794
    %v796 = vadd.f32 %v792, %v795
    %vm797 = vweird.f32 %v789
    %vm798 = vweird.f32 %v792
    %vm799 = vmor %vm797, %vm798
    %v800 = vsel %vm799, %v792, %v796
    %v801 = vand.u32 2147483647, %v789
    %vm802 = vcmp.eq.f32.partialorder %v801, 8.507059e+37
    %v803 = vand.u32 %v789, 2147483648
    %v804 = vor.u32 1.1754944e-38, %v803
    %v805 = vsel %vm802, %v804, %v800
    %v806 = vmul.f32 1.0, %v805
    %v807 = vrcp.pop %v790
    %v808 = vmul.f32 %v790, %v807
    %v809 = vsub.f32 1.0, %v808
    %v810 = vmul.f32 %v807, %v809
    %v811 = vadd.f32 %v807, %v810
    %vm812 = vweird.f32 %v790
    %vm813 = vweird.f32 %v807
    %vm814 = vmor %vm812, %vm813
    %v815 = vsel %vm814, %v807, %v811
    %v816 = vand.u32 2147483647, %v790
    %vm817 = vcmp.eq.f32.partialorder %v816, 8.507059e+37
    %v818 = vand.u32 %v790, 2147483648
    %v819 = vor.u32 1.1754944e-38, %v818
    %v820 = vsel %vm817, %v819, %v815
    %v821 = vmul.f32 1.0, %v820
    %v822 = vrcp.pop %v791
    %v823 = vmul.f32 %v791, %v822
    %v824 = vsub.f32 1.0, %v823
    %v825 = vmul.f32 %v822, %v824
    %v826 = vadd.f32 %v822, %v825
    %vm827 = vweird.f32 %v791
    %vm828 = vweird.f32 %v822
    %vm829 = vmor %vm827, %vm828
    %v830 = vsel %vm829, %v822, %v826
    %v831 = vand.u32 2147483647, %v791
    %vm832 = vcmp.eq.f32.partialorder %v831, 8.507059e+37
    %v833 = vand.u32 %v791, 2147483648
    %v834 = vor.u32 1.1754944e-38, %v833
    %v835 = vsel %vm832, %v834, %v830
    %v836 = vmul.f32 1.0, %v835
    %v837 = vtanh.pop %v779
    %v838 = vmul.f32 %v821, %v711
    %v839 = vmul.f32 %v806, %v837
    %v840 = vadd.f32 %v838, %v839
    %v841 = vtanh.pop %v840
    %v842 = vmul.f32 %v836, %v841
    %v843 = vpack.c.bf16 %v842, %v842
    %s844 = scalar_lea.vmem %s4, 8
    %845 = vst [vmem:[%s844] sm:$0xf] %v843
    %s846 = smul.u32 3, 4
    %s847 = smul.addr %s846, 8
    %s848 = scalar_lea.vmem [#allocation4], %s847
    %v849 = vld [vmem:[%s848] sm:$0xff]
    %v850 = vld [vmem:[%s848 + $0x8] sm:$0xff]
    %v851 = vld [vmem:[%s848 + $0x10] sm:$0xff]
    %v852 = vld [vmem:[%s848 + $0x18] sm:$0xff]
    %853 = vmatpush.bf16.msra.mxu0 %v431
    %854 = vmatpush.bf16.msra.mxu0 %v427
    %855 = vmatpush.bf16.msra.mxu0 %v423
    %856 = vmatpush.bf16.msra.mxu0 %v419
    %857 = vmatpush.bf16.msra.mxu0 %v415
    %858 = vmatpush.bf16.msra.mxu0 %v411
    %859 = vmatpush.bf16.msra.mxu0 %v407
    %860 = vmatpush.bf16.msra.mxu0 %v403
    %861 = vmatmul.bf16.gmra.mxu0 %v843
    %v862 = vpop.f32.mrf.mxu0
    %v863 = vadd.f32 0.0, %v862
    %v864 = vpop.f32.mrf.mxu0
    %865 = vdwg.mxu0
    %866 = vmatpush.bf16.msra.mxu0 %v432
    %867 = vmatpush.bf16.msra.mxu0 %v428
    %868 = vmatpush.bf16.msra.mxu0 %v424
    %869 = vmatpush.bf16.msra.mxu0 %v420
    %870 = vmatpush.bf16.msra.mxu0 %v416
    %871 = vmatpush.bf16.msra.mxu0 %v412
    %872 = vmatpush.bf16.msra.mxu0 %v408
    %873 = vmatpush.bf16.msra.mxu0 %v404
    %874 = vmatmul.bf16.gmra.mxu0 %v843
    %v875 = vpop.f32.mrf.mxu0
    %v876 = vadd.f32 0.0, %v875
    %v877 = vpop.f32.mrf.mxu0
    %878 = vdwg.mxu0
    %879 = vmatpush.bf16.msra.mxu0 %v433
    %880 = vmatpush.bf16.msra.mxu0 %v429
    %881 = vmatpush.bf16.msra.mxu0 %v425
    %882 = vmatpush.bf16.msra.mxu0 %v421
    %883 = vmatpush.bf16.msra.mxu0 %v417
    %884 = vmatpush.bf16.msra.mxu0 %v413
    %885 = vmatpush.bf16.msra.mxu0 %v409
    %886 = vmatpush.bf16.msra.mxu0 %v405
    %887 = vmatmul.bf16.gmra.mxu0 %v843
    %v888 = vpop.f32.mrf.mxu0
    %v889 = vadd.f32 0.0, %v888
    %v890 = vpop.f32.mrf.mxu0
    %891 = vdwg.mxu0
    %892 = vmatpush.bf16.msra.mxu0 %v434
    %893 = vmatpush.bf16.msra.mxu0 %v430
    %894 = vmatpush.bf16.msra.mxu0 %v426
    %895 = vmatpush.bf16.msra.mxu0 %v422
    %896 = vmatpush.bf16.msra.mxu0 %v418
    %897 = vmatpush.bf16.msra.mxu0 %v414
    %898 = vmatpush.bf16.msra.mxu0 %v410
    %899 = vmatpush.bf16.msra.mxu0 %v406
    %900 = vmatmul.bf16.gmra.mxu0 %v843
    %v901 = vpop.f32.mrf.mxu0
    %v902 = vadd.f32 0.0, %v901
    %v903 = vpop.f32.mrf.mxu0
    %904 = vdwg.mxu0
    %v905 = vadd.f32 %v849, %v863
    %v906 = vadd.f32 %v850, %v876
    %v907 = vadd.f32 %v851, %v889
    %v908 = vadd.f32 %v852, %v902
    %v909 = vxor.u32 %v905, 2147483648
    %v910 = vxor.u32 %v906, 2147483648
    %v911 = vxor.u32 %v907, 2147483648
    %v912 = vmul.f32 %v909, 1.442695
    %v913 = vpow.pop %v912
    %v914 = vmul.f32 %v910, 1.442695
    %v915 = vpow.pop %v914
    %v916 = vmul.f32 %v911, 1.442695
    %v917 = vpow.pop %v916
    %v918 = vadd.f32 %v913, 1.0
    %v919 = vadd.f32 %v915, 1.0
    %v920 = vadd.f32 %v917, 1.0
    %v921 = vrcp.pop %v918
    %v922 = vmul.f32 %v918, %v921
    %v923 = vsub.f32 1.0, %v922
    %v924 = vmul.f32 %v921, %v923
    %v925 = vadd.f32 %v921, %v924
    %vm926 = vweird.f32 %v918
    %vm927 = vweird.f32 %v921
    %vm928 = vmor %vm926, %vm927
    %v929 = vsel %vm928, %v921, %v925
    %v930 = vand.u32 2147483647, %v918
    %vm931 = vcmp.eq.f32.partialorder %v930, 8.507059e+37
    %v932 = vand.u32 %v918, 2147483648
    %v933 = vor.u32 1.1754944e-38, %v932
    %v934 = vsel %vm931, %v933, %v929
    %v935 = vmul.f32 1.0, %v934
    %v936 = vrcp.pop %v919
    %v937 = vmul.f32 %v919, %v936
    %v938 = vsub.f32 1.0, %v937
    %v939 = vmul.f32 %v936, %v938
    %v940 = vadd.f32 %v936, %v939
    %vm941 = vweird.f32 %v919
    %vm942 = vweird.f32 %v936
    %vm943 = vmor %vm941, %vm942
    %v944 = vsel %vm943, %v936, %v940
    %v945 = vand.u32 2147483647, %v919
    %vm946 = vcmp.eq.f32.partialorder %v945, 8.507059e+37
    %v947 = vand.u32 %v919, 2147483648
    %v948 = vor.u32 1.1754944e-38, %v947
    %v949 = vsel %vm946, %v948, %v944
    %v950 = vmul.f32 1.0, %v949
    %v951 = vrcp.pop %v920
    %v952 = vmul.f32 %v920, %v951
    %v953 = vsub.f32 1.0, %v952
    %v954 = vmul.f32 %v951, %v953
    %v955 = vadd.f32 %v951, %v954
    %vm956 = vweird.f32 %v920
    %vm957 = vweird.f32 %v951
    %vm958 = vmor %vm956, %vm957
    %v959 = vsel %vm958, %v951, %v955
    %v960 = vand.u32 2147483647, %v920
    %vm961 = vcmp.eq.f32.partialorder %v960, 8.507059e+37
    %v962 = vand.u32 %v920, 2147483648
    %v963 = vor.u32 1.1754944e-38, %v962
    %v964 = vsel %vm961, %v963, %v959
    %v965 = vmul.f32 1.0, %v964
    %v966 = vtanh.pop %v908
    %v967 = vmul.f32 %v950, %v840
    %v968 = vmul.f32 %v935, %v966
    %v969 = vadd.f32 %v967, %v968
    %v970 = vtanh.pop %v969
    %v971 = vmul.f32 %v965, %v970
    %v972 = vpack.c.bf16 %v971, %v971
    %s973 = scalar_lea.vmem %s4, 12
    %974 = vst [vmem:[%s973] sm:$0xf] %v972
    %s975 = smul.u32 4, 4
    %s976 = smul.addr %s975, 8
    %s977 = scalar_lea.vmem [#allocation4], %s976
    %v978 = vld [vmem:[%s977] sm:$0xff]
    %v979 = vld [vmem:[%s977 + $0x8] sm:$0xff]
    %v980 = vld [vmem:[%s977 + $0x10] sm:$0xff]
    %v981 = vld [vmem:[%s977 + $0x18] sm:$0xff]
    %982 = vmatpush.bf16.msra.mxu0 %v431
    %983 = vmatpush.bf16.msra.mxu0 %v427
    %984 = vmatpush.bf16.msra.mxu0 %v423
    %985 = vmatpush.bf16.msra.mxu0 %v419
    %986 = vmatpush.bf16.msra.mxu0 %v415
    %987 = vmatpush.bf16.msra.mxu0 %v411
    %988 = vmatpush.bf16.msra.mxu0 %v407
    %989 = vmatpush.bf16.msra.mxu0 %v403
    %990 = vmatmul.bf16.gmra.mxu0 %v972
    %v991 = vpop.f32.mrf.mxu0
    %v992 = vadd.f32 0.0, %v991
    %v993 = vpop.f32.mrf.mxu0
    %994 = vdwg.mxu0
    %995 = vmatpush.bf16.msra.mxu0 %v432
    %996 = vmatpush.bf16.msra.mxu0 %v428
    %997 = vmatpush.bf16.msra.mxu0 %v424
    %998 = vmatpush.bf16.msra.mxu0 %v420
    %999 = vmatpush.bf16.msra.mxu0 %v416
    %1000 = vmatpush.bf16.msra.mxu0 %v412
    %1001 = vmatpush.bf16.msra.mxu0 %v408
    %1002 = vmatpush.bf16.msra.mxu0 %v404
    %1003 = vmatmul.bf16.gmra.mxu0 %v972
    %v1004 = vpop.f32.mrf.mxu0
    %v1005 = vadd.f32 0.0, %v1004
    %v1006 = vpop.f32.mrf.mxu0
    %1007 = vdwg.mxu0
    %1008 = vmatpush.bf16.msra.mxu0 %v433
    %1009 = vmatpush.bf16.msra.mxu0 %v429
    %1010 = vmatpush.bf16.msra.mxu0 %v425
    %1011 = vmatpush.bf16.msra.mxu0 %v421
    %1012 = vmatpush.bf16.msra.mxu0 %v417
    %1013 = vmatpush.bf16.msra.mxu0 %v413
    %1014 = vmatpush.bf16.msra.mxu0 %v409
    %1015 = vmatpush.bf16.msra.mxu0 %v405
    %1016 = vmatmul.bf16.gmra.mxu0 %v972
    %v1017 = vpop.f32.mrf.mxu0
    %v1018 = vadd.f32 0.0, %v1017
    %v1019 = vpop.f32.mrf.mxu0
    %1020 = vdwg.mxu0
    %1021 = vmatpush.bf16.msra.mxu0 %v434
    %1022 = vmatpush.bf16.msra.mxu0 %v430
    %1023 = vmatpush.bf16.msra.mxu0 %v426
    %1024 = vmatpush.bf16.msra.mxu0 %v422
    %1025 = vmatpush.bf16.msra.mxu0 %v418
    %1026 = vmatpush.bf16.msra.mxu0 %v414
    %1027 = vmatpush.bf16.msra.mxu0 %v410
    %1028 = vmatpush.bf16.msra.mxu0 %v406
    %1029 = vmatmul.bf16.gmra.mxu0 %v972
    %v1030 = vpop.f32.mrf.mxu0
    %v1031 = vadd.f32 0.0, %v1030
    %v1032 = vpop.f32.mrf.mxu0
    %1033 = vdwg.mxu0
    %v1034 = vadd.f32 %v978, %v992
    %v1035 = vadd.f32 %v979, %v1005
    %v1036 = vadd.f32 %v980, %v1018
    %v1037 = vadd.f32 %v981, %v1031
    %v1038 = vxor.u32 %v1034, 2147483648
    %v1039 = vxor.u32 %v1035, 2147483648
    %v1040 = vxor.u32 %v1036, 2147483648
    %v1041 = vmul.f32 %v1038, 1.442695
    %v1042 = vpow.pop %v1041
    %v1043 = vmul.f32 %v1039, 1.442695
    %v1044 = vpow.pop %v1043
    %v1045 = vmul.f32 %v1040, 1.442695
    %v1046 = vpow.pop %v1045
    %v1047 = vadd.f32 %v1042, 1.0
    %v1048 = vadd.f32 %v1044, 1.0
    %v1049 = vadd.f32 %v1046, 1.0
    %v1050 = vrcp.pop %v1047
    %v1051 = vmul.f32 %v1047, %v1050
    %v1052 = vsub.f32 1.0, %v1051
    %v1053 = vmul.f32 %v1050, %v1052
    %v1054 = vadd.f32 %v1050, %v1053
    %vm1055 = vweird.f32 %v1047
    %vm1056 = vweird.f32 %v1050
    %vm1057 = vmor %vm1055, %vm1056
    %v1058 = vsel %vm1057, %v1050, %v1054
    %v1059 = vand.u32 2147483647, %v1047
    %vm1060 = vcmp.eq.f32.partialorder %v1059, 8.507059e+37
    %v1061 = vand.u32 %v1047, 2147483648
    %v1062 = vor.u32 1.1754944e-38, %v1061
    %v1063 = vsel %vm1060, %v1062, %v1058
    %v1064 = vmul.f32 1.0, %v1063
    %v1065 = vrcp.pop %v1048
    %v1066 = vmul.f32 %v1048, %v1065
    %v1067 = vsub.f32 1.0, %v1066
    %v1068 = vmul.f32 %v1065, %v1067
    %v1069 = vadd.f32 %v1065, %v1068
    %vm1070 = vweird.f32 %v1048
    %vm1071 = vweird.f32 %v1065
    %vm1072 = vmor %vm1070, %vm1071
    %v1073 = vsel %vm1072, %v1065, %v1069
    %v1074 = vand.u32 2147483647, %v1048
    %vm1075 = vcmp.eq.f32.partialorder %v1074, 8.507059e+37
    %v1076 = vand.u32 %v1048, 2147483648
    %v1077 = vor.u32 1.1754944e-38, %v1076
    %v1078 = vsel %vm1075, %v1077, %v1073
    %v1079 = vmul.f32 1.0, %v1078
    %v1080 = vrcp.pop %v1049
    %v1081 = vmul.f32 %v1049, %v1080
    %v1082 = vsub.f32 1.0, %v1081
    %v1083 = vmul.f32 %v1080, %v1082
    %v1084 = vadd.f32 %v1080, %v1083
    %vm1085 = vweird.f32 %v1049
    %vm1086 = vweird.f32 %v1080
    %vm1087 = vmor %vm1085, %vm1086
    %v1088 = vsel %vm1087, %v1080, %v1084
    %v1089 = vand.u32 2147483647, %v1049
    %vm1090 = vcmp.eq.f32.partialorder %v1089, 8.507059e+37
    %v1091 = vand.u32 %v1049, 2147483648
    %v1092 = vor.u32 1.1754944e-38, %v1091
    %v1093 = vsel %vm1090, %v1092, %v1088
    %v1094 = vmul.f32 1.0, %v1093
    %v1095 = vtanh.pop %v1037
    %v1096 = vmul.f32 %v1079, %v969
    %v1097 = vmul.f32 %v1064, %v1095
    %v1098 = vadd.f32 %v1096, %v1097
    %v1099 = vtanh.pop %v1098
    %v1100 = vmul.f32 %v1094, %v1099
    %v1101 = vpack.c.bf16 %v1100, %v1100
    %s1102 = scalar_lea.vmem %s4, 16
    %1103 = vst [vmem:[%s1102] sm:$0xf] %v1101
    %s1104 = smul.u32 5, 4
    %s1105 = smul.addr %s1104, 8
    %s1106 = scalar_lea.vmem [#allocation4], %s1105
    %v1107 = vld [vmem:[%s1106] sm:$0xff]
    %v1108 = vld [vmem:[%s1106 + $0x8] sm:$0xff]
    %v1109 = vld [vmem:[%s1106 + $0x10] sm:$0xff]
    %v1110 = vld [vmem:[%s1106 + $0x18] sm:$0xff]
    %1111 = vmatpush.bf16.msra.mxu0 %v431
    %1112 = vmatpush.bf16.msra.mxu0 %v427
    %1113 = vmatpush.bf16.msra.mxu0 %v423
    %1114 = vmatpush.bf16.msra.mxu0 %v419
    %1115 = vmatpush.bf16.msra.mxu0 %v415
    %1116 = vmatpush.bf16.msra.mxu0 %v411
    %1117 = vmatpush.bf16.msra.mxu0 %v407
    %1118 = vmatpush.bf16.msra.mxu0 %v403
    %1119 = vmatmul.bf16.gmra.mxu0 %v1101
    %v1120 = vpop.f32.mrf.mxu0
    %v1121 = vadd.f32 0.0, %v1120
    %v1122 = vpop.f32.mrf.mxu0
    %1123 = vdwg.mxu0
    %1124 = vmatpush.bf16.msra.mxu0 %v432
    %1125 = vmatpush.bf16.msra.mxu0 %v428
    %1126 = vmatpush.bf16.msra.mxu0 %v424
    %1127 = vmatpush.bf16.msra.mxu0 %v420
    %1128 = vmatpush.bf16.msra.mxu0 %v416
    %1129 = vmatpush.bf16.msra.mxu0 %v412
    %1130 = vmatpush.bf16.msra.mxu0 %v408
    %1131 = vmatpush.bf16.msra.mxu0 %v404
    %1132 = vmatmul.bf16.gmra.mxu0 %v1101
    %v1133 = vpop.f32.mrf.mxu0
    %v1134 = vadd.f32 0.0, %v1133
    %v1135 = vpop.f32.mrf.mxu0
    %1136 = vdwg.mxu0
    %1137 = vmatpush.bf16.msra.mxu0 %v433
    %1138 = vmatpush.bf16.msra.mxu0 %v429
    %1139 = vmatpush.bf16.msra.mxu0 %v425
    %1140 = vmatpush.bf16.msra.mxu0 %v421
    %1141 = vmatpush.bf16.msra.mxu0 %v417
    %1142 = vmatpush.bf16.msra.mxu0 %v413
    %1143 = vmatpush.bf16.msra.mxu0 %v409
    %1144 = vmatpush.bf16.msra.mxu0 %v405
    %1145 = vmatmul.bf16.gmra.mxu0 %v1101
    %v1146 = vpop.f32.mrf.mxu0
    %v1147 = vadd.f32 0.0, %v1146
    %v1148 = vpop.f32.mrf.mxu0
    %1149 = vdwg.mxu0
    %1150 = vmatpush.bf16.msra.mxu0 %v434
    %1151 = vmatpush.bf16.msra.mxu0 %v430
    %1152 = vmatpush.bf16.msra.mxu0 %v426
    %1153 = vmatpush.bf16.msra.mxu0 %v422
    %1154 = vmatpush.bf16.msra.mxu0 %v418
    %1155 = vmatpush.bf16.msra.mxu0 %v414
    %1156 = vmatpush.bf16.msra.mxu0 %v410
    %1157 = vmatpush.bf16.msra.mxu0 %v406
    %1158 = vmatmul.bf16.gmra.mxu0 %v1101
    %v1159 = vpop.f32.mrf.mxu0
    %v1160 = vadd.f32 0.0, %v1159
    %v1161 = vpop.f32.mrf.mxu0
    %1162 = vdwg.mxu0
    %v1163 = vadd.f32 %v1107, %v1121
    %v1164 = vadd.f32 %v1108, %v1134
    %v1165 = vadd.f32 %v1109, %v1147
    %v1166 = vadd.f32 %v1110, %v1160
    %v1167 = vxor.u32 %v1163, 2147483648
    %v1168 = vxor.u32 %v1164, 2147483648
    %v1169 = vxor.u32 %v1165, 2147483648
    %v1170 = vmul.f32 %v1167, 1.442695
    %v1171 = vpow.pop %v1170
    %v1172 = vmul.f32 %v1168, 1.442695
    %v1173 = vpow.pop %v1172
    %v1174 = vmul.f32 %v1169, 1.442695
    %v1175 = vpow.pop %v1174
    %v1176 = vadd.f32 %v1171, 1.0
    %v1177 = vadd.f32 %v1173, 1.0
    %v1178 = vadd.f32 %v1175, 1.0
    %v1179 = vrcp.pop %v1176
    %v1180 = vmul.f32 %v1176, %v1179
    %v1181 = vsub.f32 1.0, %v1180
    %v1182 = vmul.f32 %v1179, %v1181
    %v1183 = vadd.f32 %v1179, %v1182
    %vm1184 = vweird.f32 %v1176
    %vm1185 = vweird.f32 %v1179
    %vm1186 = vmor %vm1184, %vm1185
    %v1187 = vsel %vm1186, %v1179, %v1183
    %v1188 = vand.u32 2147483647, %v1176
    %vm1189 = vcmp.eq.f32.partialorder %v1188, 8.507059e+37
    %v1190 = vand.u32 %v1176, 2147483648
    %v1191 = vor.u32 1.1754944e-38, %v1190
    %v1192 = vsel %vm1189, %v1191, %v1187
    %v1193 = vmul.f32 1.0, %v1192
    %v1194 = vrcp.pop %v1177
    %v1195 = vmul.f32 %v1177, %v1194
    %v1196 = vsub.f32 1.0, %v1195
    %v1197 = vmul.f32 %v1194, %v1196
    %v1198 = vadd.f32 %v1194, %v1197
    %vm1199 = vweird.f32 %v1177
    %vm1200 = vweird.f32 %v1194
    %vm1201 = vmor %vm1199, %vm1200
    %v1202 = vsel %vm1201, %v1194, %v1198
    %v1203 = vand.u32 2147483647, %v1177
    %vm1204 = vcmp.eq.f32.partialorder %v1203, 8.507059e+37
    %v1205 = vand.u32 %v1177, 2147483648
    %v1206 = vor.u32 1.1754944e-38, %v1205
    %v1207 = vsel %vm1204, %v1206, %v1202
    %v1208 = vmul.f32 1.0, %v1207
    %v1209 = vrcp.pop %v1178
    %v1210 = vmul.f32 %v1178, %v1209
    %v1211 = vsub.f32 1.0, %v1210
    %v1212 = vmul.f32 %v1209, %v1211
    %v1213 = vadd.f32 %v1209, %v1212
    %vm1214 = vweird.f32 %v1178
    %vm1215 = vweird.f32 %v1209
    %vm1216 = vmor %vm1214, %vm1215
    %v1217 = vsel %vm1216, %v1209, %v1213
    %v1218 = vand.u32 2147483647, %v1178
    %vm1219 = vcmp.eq.f32.partialorder %v1218, 8.507059e+37
    %v1220 = vand.u32 %v1178, 2147483648
    %v1221 = vor.u32 1.1754944e-38, %v1220
    %v1222 = vsel %vm1219, %v1221, %v1217
    %v1223 = vmul.f32 1.0, %v1222
    %v1224 = vtanh.pop %v1166
    %v1225 = vmul.f32 %v1208, %v1098
    %v1226 = vmul.f32 %v1193, %v1224
    %v1227 = vadd.f32 %v1225, %v1226
    %v1228 = vtanh.pop %v1227
    %v1229 = vmul.f32 %v1223, %v1228
    %v1230 = vpack.c.bf16 %v1229, %v1229
    %s1231 = scalar_lea.vmem %s4, 20
    %1232 = vst [vmem:[%s1231] sm:$0xf] %v1230
    %s1233 = smul.u32 6, 4
    %s1234 = smul.addr %s1233, 8
    %s1235 = scalar_lea.vmem [#allocation4], %s1234
    %v1236 = vld [vmem:[%s1235] sm:$0xff]
    %v1237 = vld [vmem:[%s1235 + $0x8] sm:$0xff]
    %v1238 = vld [vmem:[%s1235 + $0x10] sm:$0xff]
    %v1239 = vld [vmem:[%s1235 + $0x18] sm:$0xff]
    %1240 = vmatpush.bf16.msra.mxu0 %v431
    %1241 = vmatpush.bf16.msra.mxu0 %v427
    %1242 = vmatpush.bf16.msra.mxu0 %v423
    %1243 = vmatpush.bf16.msra.mxu0 %v419
    %1244 = vmatpush.bf16.msra.mxu0 %v415
    %1245 = vmatpush.bf16.msra.mxu0 %v411
    %1246 = vmatpush.bf16.msra.mxu0 %v407
    %1247 = vmatpush.bf16.msra.mxu0 %v403
    %1248 = vmatmul.bf16.gmra.mxu0 %v1230
    %v1249 = vpop.f32.mrf.mxu0
    %v1250 = vadd.f32 0.0, %v1249
    %v1251 = vpop.f32.mrf.mxu0
    %1252 = vdwg.mxu0
    %1253 = vmatpush.bf16.msra.mxu0 %v432
    %1254 = vmatpush.bf16.msra.mxu0 %v428
    %1255 = vmatpush.bf16.msra.mxu0 %v424
    %1256 = vmatpush.bf16.msra.mxu0 %v420
    %1257 = vmatpush.bf16.msra.mxu0 %v416
    %1258 = vmatpush.bf16.msra.mxu0 %v412
    %1259 = vmatpush.bf16.msra.mxu0 %v408
    %1260 = vmatpush.bf16.msra.mxu0 %v404
    %1261 = vmatmul.bf16.gmra.mxu0 %v1230
    %v1262 = vpop.f32.mrf.mxu0
    %v1263 = vadd.f32 0.0, %v1262
    %v1264 = vpop.f32.mrf.mxu0
    %1265 = vdwg.mxu0
    %1266 = vmatpush.bf16.msra.mxu0 %v433
    %1267 = vmatpush.bf16.msra.mxu0 %v429
    %1268 = vmatpush.bf16.msra.mxu0 %v425
    %1269 = vmatpush.bf16.msra.mxu0 %v421
    %1270 = vmatpush.bf16.msra.mxu0 %v417
    %1271 = vmatpush.bf16.msra.mxu0 %v413
    %1272 = vmatpush.bf16.msra.mxu0 %v409
    %1273 = vmatpush.bf16.msra.mxu0 %v405
    %1274 = vmatmul.bf16.gmra.mxu0 %v1230
    %v1275 = vpop.f32.mrf.mxu0
    %v1276 = vadd.f32 0.0, %v1275
    %v1277 = vpop.f32.mrf.mxu0
    %1278 = vdwg.mxu0
    %1279 = vmatpush.bf16.msra.mxu0 %v434
    %1280 = vmatpush.bf16.msra.mxu0 %v430
    %1281 = vmatpush.bf16.msra.mxu0 %v426
    %1282 = vmatpush.bf16.msra.mxu0 %v422
    %1283 = vmatpush.bf16.msra.mxu0 %v418
    %1284 = vmatpush.bf16.msra.mxu0 %v414
    %1285 = vmatpush.bf16.msra.mxu0 %v410
    %1286 = vmatpush.bf16.msra.mxu0 %v406
    %1287 = vmatmul.bf16.gmra.mxu0 %v1230
    %v1288 = vpop.f32.mrf.mxu0
    %v1289 = vadd.f32 0.0, %v1288
    %v1290 = vpop.f32.mrf.mxu0
    %1291 = vdwg.mxu0
    %v1292 = vadd.f32 %v1236, %v1250
    %v1293 = vadd.f32 %v1237, %v1263
    %v1294 = vadd.f32 %v1238, %v1276
    %v1295 = vadd.f32 %v1239, %v1289
    %v1296 = vxor.u32 %v1292, 2147483648
    %v1297 = vxor.u32 %v1293, 2147483648
    %v1298 = vxor.u32 %v1294, 2147483648
    %v1299 = vmul.f32 %v1296, 1.442695
    %v1300 = vpow.pop %v1299
    %v1301 = vmul.f32 %v1297, 1.442695
    %v1302 = vpow.pop %v1301
    %v1303 = vmul.f32 %v1298, 1.442695
    %v1304 = vpow.pop %v1303
    %v1305 = vadd.f32 %v1300, 1.0
    %v1306 = vadd.f32 %v1302, 1.0
    %v1307 = vadd.f32 %v1304, 1.0
    %v1308 = vrcp.pop %v1305
    %v1309 = vmul.f32 %v1305, %v1308
    %v1310 = vsub.f32 1.0, %v1309
    %v1311 = vmul.f32 %v1308, %v1310
    %v1312 = vadd.f32 %v1308, %v1311
    %vm1313 = vweird.f32 %v1305
    %vm1314 = vweird.f32 %v1308
    %vm1315 = vmor %vm1313, %vm1314
    %v1316 = vsel %vm1315, %v1308, %v1312
    %v1317 = vand.u32 2147483647, %v1305
    %vm1318 = vcmp.eq.f32.partialorder %v1317, 8.507059e+37
    %v1319 = vand.u32 %v1305, 2147483648
    %v1320 = vor.u32 1.1754944e-38, %v1319
    %v1321 = vsel %vm1318, %v1320, %v1316
    %v1322 = vmul.f32 1.0, %v1321
    %v1323 = vrcp.pop %v1306
    %v1324 = vmul.f32 %v1306, %v1323
    %v1325 = vsub.f32 1.0, %v1324
    %v1326 = vmul.f32 %v1323, %v1325
    %v1327 = vadd.f32 %v1323, %v1326
    %vm1328 = vweird.f32 %v1306
    %vm1329 = vweird.f32 %v1323
    %vm1330 = vmor %vm1328, %vm1329
    %v1331 = vsel %vm1330, %v1323, %v1327
    %v1332 = vand.u32 2147483647, %v1306
    %vm1333 = vcmp.eq.f32.partialorder %v1332, 8.507059e+37
    %v1334 = vand.u32 %v1306, 2147483648
    %v1335 = vor.u32 1.1754944e-38, %v1334
    %v1336 = vsel %vm1333, %v1335, %v1331
    %v1337 = vmul.f32 1.0, %v1336
    %v1338 = vrcp.pop %v1307
    %v1339 = vmul.f32 %v1307, %v1338
    %v1340 = vsub.f32 1.0, %v1339
    %v1341 = vmul.f32 %v1338, %v1340
    %v1342 = vadd.f32 %v1338, %v1341
    %vm1343 = vweird.f32 %v1307
    %vm1344 = vweird.f32 %v1338
    %vm1345 = vmor %vm1343, %vm1344
    %v1346 = vsel %vm1345, %v1338, %v1342
    %v1347 = vand.u32 2147483647, %v1307
    %vm1348 = vcmp.eq.f32.partialorder %v1347, 8.507059e+37
    %v1349 = vand.u32 %v1307, 2147483648
    %v1350 = vor.u32 1.1754944e-38, %v1349
    %v1351 = vsel %vm1348, %v1350, %v1346
    %v1352 = vmul.f32 1.0, %v1351
    %v1353 = vtanh.pop %v1295
    %v1354 = vmul.f32 %v1337, %v1227
    %v1355 = vmul.f32 %v1322, %v1353
    %v1356 = vadd.f32 %v1354, %v1355
    %v1357 = vtanh.pop %v1356
    %v1358 = vmul.f32 %v1352, %v1357
    %v1359 = vpack.c.bf16 %v1358, %v1358
    %s1360 = scalar_lea.vmem %s4, 24
    %1361 = vst [vmem:[%s1360] sm:$0xf] %v1359
    %s1362 = smul.u32 7, 4
    %s1363 = smul.addr %s1362, 8
    %s1364 = scalar_lea.vmem [#allocation4], %s1363
    %v1365 = vld [vmem:[%s1364] sm:$0xff]
    %v1366 = vld [vmem:[%s1364 + $0x8] sm:$0xff]
    %v1367 = vld [vmem:[%s1364 + $0x10] sm:$0xff]
    %v1368 = vld [vmem:[%s1364 + $0x18] sm:$0xff]
    %1369 = vmatpush.bf16.msra.mxu0 %v431
    %1370 = vmatpush.bf16.msra.mxu0 %v427
    %1371 = vmatpush.bf16.msra.mxu0 %v423
    %1372 = vmatpush.bf16.msra.mxu0 %v419
    %1373 = vmatpush.bf16.msra.mxu0 %v415
    %1374 = vmatpush.bf16.msra.mxu0 %v411
    %1375 = vmatpush.bf16.msra.mxu0 %v407
    %1376 = vmatpush.bf16.msra.mxu0 %v403
    %1377 = vmatmul.bf16.gmra.mxu0 %v1359
    %v1378 = vpop.f32.mrf.mxu0
    %v1379 = vadd.f32 0.0, %v1378
    %v1380 = vpop.f32.mrf.mxu0
    %1381 = vdwg.mxu0
    %1382 = vmatpush.bf16.msra.mxu0 %v432
    %1383 = vmatpush.bf16.msra.mxu0 %v428
    %1384 = vmatpush.bf16.msra.mxu0 %v424
    %1385 = vmatpush.bf16.msra.mxu0 %v420
    %1386 = vmatpush.bf16.msra.mxu0 %v416
    %1387 = vmatpush.bf16.msra.mxu0 %v412
    %1388 = vmatpush.bf16.msra.mxu0 %v408
    %1389 = vmatpush.bf16.msra.mxu0 %v404
    %1390 = vmatmul.bf16.gmra.mxu0 %v1359
    %v1391 = vpop.f32.mrf.mxu0
    %v1392 = vadd.f32 0.0, %v1391
    %v1393 = vpop.f32.mrf.mxu0
    %1394 = vdwg.mxu0
    %1395 = vmatpush.bf16.msra.mxu0 %v433
    %1396 = vmatpush.bf16.msra.mxu0 %v429
    %1397 = vmatpush.bf16.msra.mxu0 %v425
    %1398 = vmatpush.bf16.msra.mxu0 %v421
    %1399 = vmatpush.bf16.msra.mxu0 %v417
    %1400 = vmatpush.bf16.msra.mxu0 %v413
    %1401 = vmatpush.bf16.msra.mxu0 %v409
    %1402 = vmatpush.bf16.msra.mxu0 %v405
    %1403 = vmatmul.bf16.gmra.mxu0 %v1359
    %v1404 = vpop.f32.mrf.mxu0
    %v1405 = vadd.f32 0.0, %v1404
    %v1406 = vpop.f32.mrf.mxu0
    %1407 = vdwg.mxu0
    %1408 = vmatpush.bf16.msra.mxu0 %v434
    %1409 = vmatpush.bf16.msra.mxu0 %v430
    %1410 = vmatpush.bf16.msra.mxu0 %v426
    %1411 = vmatpush.bf16.msra.mxu0 %v422
    %1412 = vmatpush.bf16.msra.mxu0 %v418
    %1413 = vmatpush.bf16.msra.mxu0 %v414
    %1414 = vmatpush.bf16.msra.mxu0 %v410
    %1415 = vmatpush.bf16.msra.mxu0 %v406
    %1416 = vmatmul.bf16.gmra.mxu0 %v1359
    %v1417 = vpop.f32.mrf.mxu0
    %v1418 = vadd.f32 0.0, %v1417
    %v1419 = vpop.f32.mrf.mxu0
    %1420 = vdwg.mxu0
    %v1421 = vadd.f32 %v1365, %v1379
    %v1422 = vadd.f32 %v1366, %v1392
    %v1423 = vadd.f32 %v1367, %v1405
    %v1424 = vadd.f32 %v1368, %v1418
    %v1425 = vxor.u32 %v1421, 2147483648
    %v1426 = vxor.u32 %v1422, 2147483648
    %v1427 = vxor.u32 %v1423, 2147483648
    %v1428 = vmul.f32 %v1425, 1.442695
    %v1429 = vpow.pop %v1428
    %v1430 = vmul.f32 %v1426, 1.442695
    %v1431 = vpow.pop %v1430
    %v1432 = vmul.f32 %v1427, 1.442695
    %v1433 = vpow.pop %v1432
    %v1434 = vadd.f32 %v1429, 1.0
    %v1435 = vadd.f32 %v1431, 1.0
    %v1436 = vadd.f32 %v1433, 1.0
    %v1437 = vrcp.pop %v1434
    %v1438 = vmul.f32 %v1434, %v1437
    %v1439 = vsub.f32 1.0, %v1438
    %v1440 = vmul.f32 %v1437, %v1439
    %v1441 = vadd.f32 %v1437, %v1440
    %vm1442 = vweird.f32 %v1434
    %vm1443 = vweird.f32 %v1437
    %vm1444 = vmor %vm1442, %vm1443
    %v1445 = vsel %vm1444, %v1437, %v1441
    %v1446 = vand.u32 2147483647, %v1434
    %vm1447 = vcmp.eq.f32.partialorder %v1446, 8.507059e+37
    %v1448 = vand.u32 %v1434, 2147483648
    %v1449 = vor.u32 1.1754944e-38, %v1448
    %v1450 = vsel %vm1447, %v1449, %v1445
    %v1451 = vmul.f32 1.0, %v1450
    %v1452 = vrcp.pop %v1435
    %v1453 = vmul.f32 %v1435, %v1452
    %v1454 = vsub.f32 1.0, %v1453
    %v1455 = vmul.f32 %v1452, %v1454
    %v1456 = vadd.f32 %v1452, %v1455
    %vm1457 = vweird.f32 %v1435
    %vm1458 = vweird.f32 %v1452
    %vm1459 = vmor %vm1457, %vm1458
    %v1460 = vsel %vm1459, %v1452, %v1456
    %v1461 = vand.u32 2147483647, %v1435
    %vm1462 = vcmp.eq.f32.partialorder %v1461, 8.507059e+37
    %v1463 = vand.u32 %v1435, 2147483648
    %v1464 = vor.u32 1.1754944e-38, %v1463
    %v1465 = vsel %vm1462, %v1464, %v1460
    %v1466 = vmul.f32 1.0, %v1465
    %v1467 = vrcp.pop %v1436
    %v1468 = vmul.f32 %v1436, %v1467
    %v1469 = vsub.f32 1.0, %v1468
    %v1470 = vmul.f32 %v1467, %v1469
    %v1471 = vadd.f32 %v1467, %v1470
    %vm1472 = vweird.f32 %v1436
    %vm1473 = vweird.f32 %v1467
    %vm1474 = vmor %vm1472, %vm1473
    %v1475 = vsel %vm1474, %v1467, %v1471
    %v1476 = vand.u32 2147483647, %v1436
    %vm1477 = vcmp.eq.f32.partialorder %v1476, 8.507059e+37
    %v1478 = vand.u32 %v1436, 2147483648
    %v1479 = vor.u32 1.1754944e-38, %v1478
    %v1480 = vsel %vm1477, %v1479, %v1475
    %v1481 = vmul.f32 1.0, %v1480
    %v1482 = vtanh.pop %v1424
    %v1483 = vmul.f32 %v1466, %v1356
    %v1484 = vmul.f32 %v1451, %v1482
    %v1485 = vadd.f32 %v1483, %v1484
    %v1486 = vtanh.pop %v1485
    %v1487 = vmul.f32 %v1481, %v1486
    %v1488 = vpack.c.bf16 %v1487, %v1487
    %s1489 = scalar_lea.vmem %s4, 28
    %1490 = vst [vmem:[%s1489] sm:$0xf] %v1488
    %1491 = vst [vmem:[#allocation2] sm:$0xff] %v1487
    %1492 = vst [vmem:[#allocation3] sm:$0xff] %v1485
    %1493 = vst [vmem:[%s5] sm:$0xff] %v1487
    // Predicated region
    $region26: #{lstm_forward.3} parent=1 // pred_check
      _
    $region27: #{lstm_forward.3} parent=1 // pred_check_branch
      %1495 = sbr.rel (0) target = $region29
    $region28: #{lstm_forward.3} parent=1 // pred_region
      _
    $region29: #{lstm_forward.3} parent=1 // pred_fallthru
      _
    // Predicated region
    $region30: #{lstm_forward.3} parent=1 // pred_check
      _
    $region31: #{lstm_forward.3} parent=1 // pred_check_branch
      %1497 = sbr.rel (0) target = $region33
    $region32: #{lstm_forward.3} parent=1 // pred_region
      _
    $region33: #{lstm_forward.3} parent=1 // pred_fallthru
      _
    // Predicated region
    $region34: #{lstm_forward.3} parent=1 // pred_check
      _
    $region35: #{lstm_forward.3} parent=1 // pred_check_branch
      %1499 = sbr.rel (0) target = $region37
    $region36: #{lstm_forward.3} parent=1 // pred_region
      _
    $region37: #{lstm_forward.3} parent=1 // pred_fallthru
      _
    // Predicated region
    $region38: #{lstm_forward.3} parent=1 // pred_check
      _
    $region39: #{lstm_forward.3} parent=1 // pred_check_branch
      %1501 = sbr.rel (0) target = $region41
    $region40: #{lstm_forward.3} parent=1 // pred_region
      _
    $region41: #{lstm_forward.3} parent=1 // pred_fallthru
      _
    %1502 = vsyncpa [#allocation6], 1

// kernel: lstm_forward.4
$region0: #{lstm_forward.4}
  #allocation0 [shape = 'u32[]', space=smem, size = 0x4, offset = 0x4, fixed_abs, tag = 'smem constant byte address 0x4 - core index']
  #allocation1 [shape = 'u32[72,128]{1,0:T(1,128)}', space=vmem, size = 0x9000, scoped, tag = 'internal scratch']
  #allocation2 [shape = 'f32[8,128]{1,0:T(8,128)}', space=vmem, size = 0x1000, scoped, tag = 'scratch operand']
  #allocation3 [shape = 'f32[8,128]{1,0:T(8,128)}', space=vmem, size = 0x1000, scoped, tag = 'scratch operand']
  #allocation4 [shape = 'f32[64,512]{1,0:T(8,128)}', space=vmem, size = 0x20000, scoped, tag = 'scratch operand']
  %s0 = inlined_call_operand.vmem [shape: bf16[64,128], index: 0, kind: input, shape index: {}]
  %s1 = inlined_call_operand.hbm [shape: bf16[128,512], index: 1, kind: input, shape index: {}]
  %s2 = inlined_call_operand.hbm [shape: bf16[128,512], index: 2, kind: input, shape index: {}]
  %s3 = inlined_call_operand.vmem [shape: f32[1,512], index: 3, kind: input, shape index: {}]
  %s4 = inlined_call_operand.hbm [shape: bf16[64,128], index: 4, kind: output, shape index: {0}]
  %s5 = inlined_call_operand.vmem [shape: f32[8,128], index: 5, kind: output, shape index: {1}]
  %6 = xla_tuple %s4, %s5
  %s7 = sld [smem:[#allocation0]]
  $region46: #{lstm_forward.4} parent=0
    _
  %s9 = ssub.s32 1, %s7
  %s10 = scalar_select 0, %s9, %s7
  $region1: #{lstm_forward.4} parent=0
    #allocation5 [shape = 'u8[131072]{0}', space=vmem, size = 0x20000, scoped, tag = 'input window, operand 1, single buffered']
    #allocation6 [shape = 's32[1]{0}', space=sflag, size = 0x4, scoped, tag = 'scoped memory for lstm_forward.4']
    #allocation7 [shape = 's32[1]{0}', space=sflag, size = 0x4, scoped, tag = 'scoped memory for lstm_forward.4']
    #allocation8 [shape = 'u8[131072]{0}', space=vmem, size = 0x20000, scoped, tag = 'input window, operand 2, single buffered']
    #allocation9 [shape = 's32[1]{0}', space=sflag, size = 0x4, scoped, tag = 'scoped memory for lstm_forward.4']
    #allocation10 [shape = 'u8[16384]{0}', space=vmem, size = 0x4000, scoped, tag = 'output window, operand 0, single buffered']
    %11 = vsyncpa [#allocation6], 0
    %12 = vsyncpa [#allocation9], 0
    %13 = vsyncpa [#allocation7], 0
    // Predicated region
    $region2: #{lstm_forward.4} parent=1 // pred_check
      _
    $region3: #{lstm_forward.4} parent=1 // pred_check_branch
      %15 = sbr.rel (0) target = $region5
    $region4: #{lstm_forward.4} parent=1 // pred_region
      _
    $region5: #{lstm_forward.4} parent=1 // pred_fallthru
      _
    // Predicated region
    $region6: #{lstm_forward.4} parent=1 // pred_check
      _
    $region7: #{lstm_forward.4} parent=1 // pred_check_branch
      %17 = sbr.rel (0) target = $region9
    $region8: #{lstm_forward.4} parent=1 // pred_region
      %19 = vsyncadd [#allocation6], 0
      %s20 = sshll.u32 %s1, 4
      %s21 = int_to_ptr.hbm [resolvable:$true] %s20
      %s22 = sshll.u32 [#allocation5], 4
      %s23 = int_to_ptr.vmem [resolvable:$true] %s22
      %28 = dma.hbm_to_vmem [thread:$0]  %s21, 4096, %s23, [#allocation6], 256, 256, 16
    $region9: #{lstm_forward.4} parent=1 // pred_fallthru
      _
    // Predicated region
    $region10: #{lstm_forward.4} parent=1 // pred_check
      _
    $region11: #{lstm_forward.4} parent=1 // pred_check_branch
      %30 = sbr.rel (0) target = $region13
    $region12: #{lstm_forward.4} parent=1 // pred_region
      %32 = vsyncadd [#allocation9], 0
      %s33 = sshll.u32 %s2, 4
      %s34 = int_to_ptr.hbm [resolvable:$true] %s33
      %s35 = sshll.u32 [#allocation8], 4
      %s36 = int_to_ptr.vmem [resolvable:$true] %s35
      %41 = dma.hbm_to_vmem [thread:$0]  %s34, 4096, %s36, [#allocation9], 256, 256, 16
    $region13: #{lstm_forward.4} parent=1 // pred_fallthru
      _
    // Predicated region
    $region14: #{lstm_forward.4} parent=1 // pred_check
      _
    $region15: #{lstm_forward.4} parent=1 // pred_check_branch
      %43 = sbr.rel (0) target = $region17
    $region16: #{lstm_forward.4} parent=1 // pred_region
      _
    $region17: #{lstm_forward.4} parent=1 // pred_fallthru
      _
    // Predicated region
    $region18: #{lstm_forward.4} parent=1 // pred_check
      _
    $region19: #{lstm_forward.4} parent=1 // pred_check_branch
      %45 = sbr.rel (0) target = $region21
    $region20: #{lstm_forward.4} parent=1 // pred_region
      %47 = dma.done [#allocation6], 4096
    $region21: #{lstm_forward.4} parent=1 // pred_fallthru
      _
    // Predicated region
    $region22: #{lstm_forward.4} parent=1 // pred_check
      _
    $region23: #{lstm_forward.4} parent=1 // pred_check_branch
      %49 = sbr.rel (0) target = $region25
    $region24: #{lstm_forward.4} parent=1 // pred_region
      %51 = dma.done [#allocation9], 4096
    $region25: #{lstm_forward.4} parent=1 // pred_fallthru
      _
    %p52 = scmp.eq.s32.totalorder 0, 0
    // Predicated region
    $region26: #{lstm_forward.4} parent=1 // pred_check
      %p53 = pneg %p52
    $region27: #{lstm_forward.4} parent=1 // pred_check_branch
      %55 = sbr.rel (%p53) target = $region29
    $region28: #{lstm_forward.4} parent=1 // pred_region
      %56 = vst [vmem:[#allocation2] sm:$0xff] 0.0
      %57 = vst [vmem:[#allocation3] sm:$0xff] 0.0
    $region29: #{lstm_forward.4} parent=1 // pred_fallthru
      _
    %v58 = vld [vmem:[%s0] sm:$0xf]
    %v59 = vld [vmem:[%s0 + $0x4] sm:$0xf]
    %v60 = vld [vmem:[%s0 + $0x8] sm:$0xf]
    %v61 = vld [vmem:[%s0 + $0xc] sm:$0xf]
    %v62 = vld [vmem:[%s0 + $0x10] sm:$0xf]
    %v63 = vld [vmem:[%s0 + $0x14] sm:$0xf]
    %v64 = vld [vmem:[%s0 + $0x18] sm:$0xf]
    %v65 = vld [vmem:[%s0 + $0x1c] sm:$0xf]
    %v66 = vld [vmem:[#allocation5] sm:$0xff]
    %v67 = vld [vmem:[#allocation5 + $0x8] sm:$0xff]
    %v68 = vld [vmem:[#allocation5 + $0x10] sm:$0xff]
    %v69 = vld [vmem:[#allocation5 + $0x18] sm:$0xff]
    %v70 = vld [vmem:[#allocation5 + $0x20] sm:$0xff]
    %v71 = vld [vmem:[#allocation5 + $0x28] sm:$0xff]
    %v72 = vld [vmem:[#allocation5 + $0x30] sm:$0xff]
    %v73 = vld [vmem:[#allocation5 + $0x38] sm:$0xff]
    %v74 = vld [vmem:[#allocation5 + $0x40] sm:$0xff]
    %v75 = vld [vmem:[#allocation5 + $0x48] sm:$0xff]
    %v76 = vld [vmem:[#allocation5 + $0x50] sm:$0xff]
    %v77 = vld [vmem:[#allocation5 + $0x58] sm:$0xff]
    %v78 = vld [vmem:[#allocation5 + $0x60] sm:$0xff]
    %v79 = vld [vmem:[#allocation5 + $0x68] sm:$0xff]
    %v80 = vld [vmem:[#allocation5 + $0x70] sm:$0xff]
    %v81 = vld [vmem:[#allocation5 + $0x78] sm:$0xff]
    %v82 = vld [vmem:[#allocation5 + $0x80] sm:$0xff]
    %v83 = vld [vmem:[#allocation5 + $0x88] sm:$0xff]
    %v84 = vld [vmem:[#allocation5 + $0x90] sm:$0xff]
    %v85 = vld [vmem:[#allocation5 + $0x98] sm:$0xff]
    %v86 = vld [vmem:[#allocation5 + $0xa0] sm:$0xff]
    %v87 = vld [vmem:[#allocation5 + $0xa8] sm:$0xff]
    %v88 = vld [vmem:[#allocation5 + $0xb0] sm:$0xff]
    %v89 = vld [vmem:[#allocation5 + $0xb8] sm:$0xff]
    %v90 = vld [vmem:[#allocation5 + $0xc0] sm:$0xff]
    %v91 = vld [vmem:[#allocation5 + $0xc8] sm:$0xff]
    %v92 = vld [vmem:[#allocation5 + $0xd0] sm:$0xff]
    %v93 = vld [vmem:[#allocation5 + $0xd8] sm:$0xff]
    %v94 = vld [vmem:[#allocation5 + $0xe0] sm:$0xff]
    %v95 = vld [vmem:[#allocation5 + $0xe8] sm:$0xff]
    %v96 = vld [vmem:[#allocation5 + $0xf0] sm:$0xff]
    %v97 = vld [vmem:[#allocation5 + $0xf8] sm:$0xff]
    %v98 = vld [vmem:[%s3] sm:$0xf]
    %v100 = vperm.slane %v98, 0
    %v101 = vperm.slane %v98, 1
    %v102 = vperm.slane %v98, 2
    %v103 = vperm.slane %v98, 3
    %v116 = vunpack.c.l.b16 %v58
    %v117 = vunpack.c.l.b16 %v59
    %v118 = vunpack.c.l.b16 %v60
    %v119 = vunpack.c.l.b16 %v61
    %v120 = vunpack.c.l.b16 %v62
    %v121 = vunpack.c.l.b16 %v63
    %v122 = vunpack.c.l.b16 %v64
    %v123 = vunpack.c.l.b16 %v65
    %v124 = vpack.c.b16 %v117, %v116
    %v125 = vpack.c.b16 %v119, %v118
    %v126 = vpack.c.b16 %v121, %v120
    %v127 = vpack.c.b16 %v123, %v122
    %v164 = vunpack.c.l.b16 %v66
    %v165 = vunpack.c.h.b16 %v66
    %v166 = vunpack.c.l.b16 %v67
    %v167 = vunpack.c.h.b16 %v67
    %v168 = vunpack.c.l.b16 %v68
    %v169 = vunpack.c.h.b16 %v68
    %v170 = vunpack.c.l.b16 %v69
    %v171 = vunpack.c.h.b16 %v69
    %v172 = vunpack.c.l.b16 %v70
    %v173 = vunpack.c.h.b16 %v70
    %v174 = vunpack.c.l.b16 %v71
    %v175 = vunpack.c.h.b16 %v71
    %v176 = vunpack.c.l.b16 %v72
    %v177 = vunpack.c.h.b16 %v72
    %v178 = vunpack.c.l.b16 %v73
    %v179 = vunpack.c.h.b16 %v73
    %v180 = vunpack.c.l.b16 %v74
    %v181 = vunpack.c.h.b16 %v74
    %v182 = vunpack.c.l.b16 %v75
    %v183 = vunpack.c.h.b16 %v75
    %v184 = vunpack.c.l.b16 %v76
    %v185 = vunpack.c.h.b16 %v76
    %v186 = vunpack.c.l.b16 %v77
    %v187 = vunpack.c.h.b16 %v77
    %v188 = vunpack.c.l.b16 %v78
    %v189 = vunpack.c.h.b16 %v78
    %v190 = vunpack.c.l.b16 %v79
    %v191 = vunpack.c.h.b16 %v79
    %v192 = vunpack.c.l.b16 %v80
    %v193 = vunpack.c.h.b16 %v80
    %v194 = vunpack.c.l.b16 %v81
    %v195 = vunpack.c.h.b16 %v81
    %v196 = vunpack.c.l.b16 %v82
    %v197 = vunpack.c.h.b16 %v82
    %v198 = vunpack.c.l.b16 %v83
    %v199 = vunpack.c.h.b16 %v83
    %v200 = vunpack.c.l.b16 %v84
    %v201 = vunpack.c.h.b16 %v84
    %v202 = vunpack.c.l.b16 %v85
    %v203 = vunpack.c.h.b16 %v85
    %v204 = vunpack.c.l.b16 %v86
    %v205 = vunpack.c.h.b16 %v86
    %v206 = vunpack.c.l.b16 %v87
    %v207 = vunpack.c.h.b16 %v87
    %v208 = vunpack.c.l.b16 %v88
    %v209 = vunpack.c.h.b16 %v88
    %v210 = vunpack.c.l.b16 %v89
    %v211 = vunpack.c.h.b16 %v89
    %v212 = vunpack.c.l.b16 %v90
    %v213 = vunpack.c.h.b16 %v90
    %v214 = vunpack.c.l.b16 %v91
    %v215 = vunpack.c.h.b16 %v91
    %v216 = vunpack.c.l.b16 %v92
    %v217 = vunpack.c.h.b16 %v92
    %v218 = vunpack.c.l.b16 %v93
    %v219 = vunpack.c.h.b16 %v93
    %v220 = vunpack.c.l.b16 %v94
    %v221 = vunpack.c.h.b16 %v94
    %v222 = vunpack.c.l.b16 %v95
    %v223 = vunpack.c.h.b16 %v95
    %v224 = vunpack.c.l.b16 %v96
    %v225 = vunpack.c.h.b16 %v96
    %v226 = vunpack.c.l.b16 %v97
    %v227 = vunpack.c.h.b16 %v97
    %v228 = vpack.c.b16 %v168, %v164
    %v229 = vpack.c.b16 %v169, %v165
    %v230 = vpack.c.b16 %v170, %v166
    %v231 = vpack.c.b16 %v171, %v167
    %v232 = vpack.c.b16 %v176, %v172
    %v233 = vpack.c.b16 %v177, %v173
    %v234 = vpack.c.b16 %v178, %v174
    %v235 = vpack.c.b16 %v179, %v175
    %v236 = vpack.c.b16 %v184, %v180
    %v237 = vpack.c.b16 %v185, %v181
    %v238 = vpack.c.b16 %v186, %v182
    %v239 = vpack.c.b16 %v187, %v183
    %v240 = vpack.c.b16 %v192, %v188
    %v241 = vpack.c.b16 %v193, %v189
    %v242 = vpack.c.b16 %v194, %v190
    %v243 = vpack.c.b16 %v195, %v191
    %v244 = vpack.c.b16 %v200, %v196
    %v245 = vpack.c.b16 %v201, %v197
    %v246 = vpack.c.b16 %v202, %v198
    %v247 = vpack.c.b16 %v203, %v199
    %v248 = vpack.c.b16 %v208, %v204
    %v249 = vpack.c.b16 %v209, %v205
    %v250 = vpack.c.b16 %v210, %v206
    %v251 = vpack.c.b16 %v211, %v207
    %v252 = vpack.c.b16 %v216, %v212
    %v253 = vpack.c.b16 %v217, %v213
    %v254 = vpack.c.b16 %v218, %v214
    %v255 = vpack.c.b16 %v219, %v215
    %v256 = vpack.c.b16 %v224, %v220
    %v257 = vpack.c.b16 %v225, %v221
    %v258 = vpack.c.b16 %v226, %v222
    %v259 = vpack.c.b16 %v227, %v223
    %292 = vmatpush.bf16.msra.mxu0 %v256
    %293 = vmatpush.bf16.msra.mxu0 %v252
    %294 = vmatpush.bf16.msra.mxu0 %v248
    %295 = vmatpush.bf16.msra.mxu0 %v244
    %296 = vmatpush.bf16.msra.mxu0 %v240
    %297 = vmatpush.bf16.msra.mxu0 %v236
    %298 = vmatpush.bf16.msra.mxu0 %v232
    %299 = vmatpush.bf16.msra.mxu0 %v228
    %300 = vmatmul.bf16.gmra.mxu0 %v124
    %v301 = vpop.f32.mrf.mxu0
    %v302 = vadd.f32 %v100, %v301
    %v303 = vpop.f32.mrf.mxu0
    %v304 = vadd.f32 %v100, %v303
    %305 = vmatmul.bf16.gmra.mxu0 %v125
    %v306 = vpop.f32.mrf.mxu0
    %v307 = vadd.f32 %v100, %v306
    %v308 = vpop.f32.mrf.mxu0
    %v309 = vadd.f32 %v100, %v308
    %310 = vmatmul.bf16.gmra.mxu0 %v126
    %v311 = vpop.f32.mrf.mxu0
    %v312 = vadd.f32 %v100, %v311
    %v313 = vpop.f32.mrf.mxu0
    %v314 = vadd.f32 %v100, %v313
    %315 = vmatmul.bf16.gmra.mxu0 %v127
    %v316 = vpop.f32.mrf.mxu0
    %v317 = vadd.f32 %v100, %v316
    %v318 = vpop.f32.mrf.mxu0
    %v319 = vadd.f32 %v100, %v318
    %320 = vdwg.mxu0
    %321 = vmatpush.bf16.msra.mxu0 %v257
    %322 = vmatpush.bf16.msra.mxu0 %v253
    %323 = vmatpush.bf16.msra.mxu0 %v249
    %324 = vmatpush.bf16.msra.mxu0 %v245
    %325 = vmatpush.bf16.msra.mxu0 %v241
    %326 = vmatpush.bf16.msra.mxu0 %v237
    %327 = vmatpush.bf16.msra.mxu0 %v233
    %328 = vmatpush.bf16.msra.mxu0 %v229
    %329 = vmatmul.bf16.gmra.mxu0 %v124
    %v330 = vpop.f32.mrf.mxu0
    %v331 = vadd.f32 %v101, %v330
    %v332 = vpop.f32.mrf.mxu0
    %v333 = vadd.f32 %v101, %v332
    %334 = vmatmul.bf16.gmra.mxu0 %v125
    %v335 = vpop.f32.mrf.mxu0
    %v336 = vadd.f32 %v101, %v335
    %v337 = vpop.f32.mrf.mxu0
    %v338 = vadd.f32 %v101, %v337
    %339 = vmatmul.bf16.gmra.mxu0 %v126
    %v340 = vpop.f32.mrf.mxu0
    %v341 = vadd.f32 %v101, %v340
    %v342 = vpop.f32.mrf.mxu0
    %v343 = vadd.f32 %v101, %v342
    %344 = vmatmul.bf16.gmra.mxu0 %v127
    %v345 = vpop.f32.mrf.mxu0
    %v346 = vadd.f32 %v101, %v345
    %v347 = vpop.f32.mrf.mxu0
    %v348 = vadd.f32 %v101, %v347
    %349 = vdwg.mxu0
    %350 = vmatpush.bf16.msra.mxu0 %v258
    %351 = vmatpush.bf16.msra.mxu0 %v254
    %352 = vmatpush.bf16.msra.mxu0 %v250
    %353 = vmatpush.bf16.msra.mxu0 %v246
    %354 = vmatpush.bf16.msra.mxu0 %v242
    %355 = vmatpush.bf16.msra.mxu0 %v238
    %356 = vmatpush.bf16.msra.mxu0 %v234
    %357 = vmatpush.bf16.msra.mxu0 %v230
    %358 = vmatmul.bf16.gmra.mxu0 %v124
    %v359 = vpop.f32.mrf.mxu0
    %v360 = vadd.f32 %v102, %v359
    %v361 = vpop.f32.mrf.mxu0
    %v362 = vadd.f32 %v102, %v361
    %363 = vmatmul.bf16.gmra.mxu0 %v125
    %v364 = vpop.f32.mrf.mxu0
    %v365 = vadd.f32 %v102, %v364
    %v366 = vpop.f32.mrf.mxu0
    %v367 = vadd.f32 %v102, %v366
    %368 = vmatmul.bf16.gmra.mxu0 %v126
    %v369 = vpop.f32.mrf.mxu0
    %v370 = vadd.f32 %v102, %v369
    %v371 = vpop.f32.mrf.mxu0
    %v372 = vadd.f32 %v102, %v371
    %373 = vmatmul.bf16.gmra.mxu0 %v127
    %v374 = vpop.f32.mrf.mxu0
    %v375 = vadd.f32 %v102, %v374
    %v376 = vpop.f32.mrf.mxu0
    %v377 = vadd.f32 %v102, %v376
    %378 = vdwg.mxu0
    %379 = vmatpush.bf16.msra.mxu0 %v259
    %380 = vmatpush.bf16.msra.mxu0 %v255
    %381 = vmatpush.bf16.msra.mxu0 %v251
    %382 = vmatpush.bf16.msra.mxu0 %v247
    %383 = vmatpush.bf16.msra.mxu0 %v243
    %384 = vmatpush.bf16.msra.mxu0 %v239
    %385 = vmatpush.bf16.msra.mxu0 %v235
    %386 = vmatpush.bf16.msra.mxu0 %v231
    %387 = vmatmul.bf16.gmra.mxu0 %v124
    %v388 = vpop.f32.mrf.mxu0
    %v389 = vadd.f32 %v103, %v388
    %v390 = vpop.f32.mrf.mxu0
    %v391 = vadd.f32 %v103, %v390
    %392 = vmatmul.bf16.gmra.mxu0 %v125
    %v393 = vpop.f32.mrf.mxu0
    %v394 = vadd.f32 %v103, %v393
    %v395 = vpop.f32.mrf.mxu0
    %v396 = vadd.f32 %v103, %v395
    %397 = vmatmul.bf16.gmra.mxu0 %v126
    %v398 = vpop.f32.mrf.mxu0
    %v399 = vadd.f32 %v103, %v398
    %v400 = vpop.f32.mrf.mxu0
    %v401 = vadd.f32 %v103, %v400
    %402 = vmatmul.bf16.gmra.mxu0 %v127
    %v403 = vpop.f32.mrf.mxu0
    %v404 = vadd.f32 %v103, %v403
    %v405 = vpop.f32.mrf.mxu0
    %v406 = vadd.f32 %v103, %v405
    %407 = vdwg.mxu0
    %408 = vst [vmem:[#allocation4] sm:$0xff] %v302
    %409 = vst [vmem:[#allocation4 + $0x8] sm:$0xff] %v331
    %410 = vst [vmem:[#allocation4 + $0x10] sm:$0xff] %v360
    %411 = vst [vmem:[#allocation4 + $0x18] sm:$0xff] %v389
    %412 = vst [vmem:[#allocation4 + $0x20] sm:$0xff] %v304
    %413 = vst [vmem:[#allocation4 + $0x28] sm:$0xff] %v333
    %414 = vst [vmem:[#allocation4 + $0x30] sm:$0xff] %v362
    %415 = vst [vmem:[#allocation4 + $0x38] sm:$0xff] %v391
    %416 = vst [vmem:[#allocation4 + $0x40] sm:$0xff] %v307
    %417 = vst [vmem:[#allocation4 + $0x48] sm:$0xff] %v336
    %418 = vst [vmem:[#allocation4 + $0x50] sm:$0xff] %v365
    %419 = vst [vmem:[#allocation4 + $0x58] sm:$0xff] %v394
    %420 = vst [vmem:[#allocation4 + $0x60] sm:$0xff] %v309
    %421 = vst [vmem:[#allocation4 + $0x68] sm:$0xff] %v338
    %422 = vst [vmem:[#allocation4 + $0x70] sm:$0xff] %v367
    %423 = vst [vmem:[#allocation4 + $0x78] sm:$0xff] %v396
    %424 = vst [vmem:[#allocation4 + $0x80] sm:$0xff] %v312
    %425 = vst [vmem:[#allocation4 + $0x88] sm:$0xff] %v341
    %426 = vst [vmem:[#allocation4 + $0x90] sm:$0xff] %v370
    %427 = vst [vmem:[#allocation4 + $0x98] sm:$0xff] %v399
    %428 = vst [vmem:[#allocation4 + $0xa0] sm:$0xff] %v314
    %429 = vst [vmem:[#allocation4 + $0xa8] sm:$0xff] %v343
    %430 = vst [vmem:[#allocation4 + $0xb0] sm:$0xff] %v372
    %431 = vst [vmem:[#allocation4 + $0xb8] sm:$0xff] %v401
    %432 = vst [vmem:[#allocation4 + $0xc0] sm:$0xff] %v317
    %433 = vst [vmem:[#allocation4 + $0xc8] sm:$0xff] %v346
    %434 = vst [vmem:[#allocation4 + $0xd0] sm:$0xff] %v375
    %435 = vst [vmem:[#allocation4 + $0xd8] sm:$0xff] %v404
    %436 = vst [vmem:[#allocation4 + $0xe0] sm:$0xff] %v319
    %437 = vst [vmem:[#allocation4 + $0xe8] sm:$0xff] %v348
    %438 = vst [vmem:[#allocation4 + $0xf0] sm:$0xff] %v377
    %439 = vst [vmem:[#allocation4 + $0xf8] sm:$0xff] %v406
    %v440 = vld [vmem:[#allocation8] sm:$0xff]
    %v441 = vld [vmem:[#allocation8 + $0x8] sm:$0xff]
    %v442 = vld [vmem:[#allocation8 + $0x10] sm:$0xff]
    %v443 = vld [vmem:[#allocation8 + $0x18] sm:$0xff]
    %v444 = vld [vmem:[#allocation8 + $0x20] sm:$0xff]
    %v445 = vld [vmem:[#allocation8 + $0x28] sm:$0xff]
    %v446 = vld [vmem:[#allocation8 + $0x30] sm:$0xff]
    %v447 = vld [vmem:[#allocation8 + $0x38] sm:$0xff]
    %v448 = vld [vmem:[#allocation8 + $0x40] sm:$0xff]
    %v449 = vld [vmem:[#allocation8 + $0x48] sm:$0xff]
    %v450 = vld [vmem:[#allocation8 + $0x50] sm:$0xff]
    %v451 = vld [vmem:[#allocation8 + $0x58] sm:$0xff]
    %v452 = vld [vmem:[#allocation8 + $0x60] sm:$0xff]
    %v453 = vld [vmem:[#allocation8 + $0x68] sm:$0xff]
    %v454 = vld [vmem:[#allocation8 + $0x70] sm:$0xff]
    %v455 = vld [vmem:[#allocation8 + $0x78] sm:$0xff]
    %v456 = vld [vmem:[#allocation8 + $0x80] sm:$0xff]
    %v457 = vld [vmem:[#allocation8 + $0x88] sm:$0xff]
    %v458 = vld [vmem:[#allocation8 + $0x90] sm:$0xff]
    %v459 = vld [vmem:[#allocation8 + $0x98] sm:$0xff]
    %v460 = vld [vmem:[#allocation8 + $0xa0] sm:$0xff]
    %v461 = vld [vmem:[#allocation8 + $0xa8] sm:$0xff]
    %v462 = vld [vmem:[#allocation8 + $0xb0] sm:$0xff]
    %v463 = vld [vmem:[#allocation8 + $0xb8] sm:$0xff]
    %v464 = vld [vmem:[#allocation8 + $0xc0] sm:$0xff]
    %v465 = vld [vmem:[#allocation8 + $0xc8] sm:$0xff]
    %v466 = vld [vmem:[#allocation8 + $0xd0] sm:$0xff]
    %v467 = vld [vmem:[#allocation8 + $0xd8] sm:$0xff]
    %v468 = vld [vmem:[#allocation8 + $0xe0] sm:$0xff]
    %v469 = vld [vmem:[#allocation8 + $0xe8] sm:$0xff]
    %v470 = vld [vmem:[#allocation8 + $0xf0] sm:$0xff]
    %v471 = vld [vmem:[#allocation8 + $0xf8] sm:$0xff]
    %v472 = vld [vmem:[#allocation2] sm:$0xff]
    %v473 = vld [vmem:[#allocation3] sm:$0xff]
    %s474 = smul.u32 0, 4
    %s475 = smul.addr %s474, 8
    %s476 = scalar_lea.vmem [#allocation4], %s475
    %v477 = vld [vmem:[%s476] sm:$0xff]
    %v478 = vld [vmem:[%s476 + $0x8] sm:$0xff]
    %v479 = vld [vmem:[%s476 + $0x10] sm:$0xff]
    %v480 = vld [vmem:[%s476 + $0x18] sm:$0xff]
    %v481 = vpack.c.bf16 %v472, %v472
    %v514 = vunpack.c.l.b16 %v440
    %v515 = vunpack.c.h.b16 %v440
    %v516 = vunpack.c.l.b16 %v441
    %v517 = vunpack.c.h.b16 %v441
    %v518 = vunpack.c.l.b16 %v442
    %v519 = vunpack.c.h.b16 %v442
    %v520 = vunpack.c.l.b16 %v443
    %v521 = vunpack.c.h.b16 %v443
    %v522 = vunpack.c.l.b16 %v444
    %v523 = vunpack.c.h.b16 %v444
    %v524 = vunpack.c.l.b16 %v445
    %v525 = vunpack.c.h.b16 %v445
    %v526 = vunpack.c.l.b16 %v446
    %v527 = vunpack.c.h.b16 %v446
    %v528 = vunpack.c.l.b16 %v447
    %v529 = vunpack.c.h.b16 %v447
    %v530 = vunpack.c.l.b16 %v448
    %v531 = vunpack.c.h.b16 %v448
    %v532 = vunpack.c.l.b16 %v449
    %v533 = vunpack.c.h.b16 %v449
    %v534 = vunpack.c.l.b16 %v450
    %v535 = vunpack.c.h.b16 %v450
    %v536 = vunpack.c.l.b16 %v451
    %v537 = vunpack.c.h.b16 %v451
    %v538 = vunpack.c.l.b16 %v452
    %v539 = vunpack.c.h.b16 %v452
    %v540 = vunpack.c.l.b16 %v453
    %v541 = vunpack.c.h.b16 %v453
    %v542 = vunpack.c.l.b16 %v454
    %v543 = vunpack.c.h.b16 %v454
    %v544 = vunpack.c.l.b16 %v455
    %v545 = vunpack.c.h.b16 %v455
    %v546 = vunpack.c.l.b16 %v456
    %v547 = vunpack.c.h.b16 %v456
    %v548 = vunpack.c.l.b16 %v457
    %v549 = vunpack.c.h.b16 %v457
    %v550 = vunpack.c.l.b16 %v458
    %v551 = vunpack.c.h.b16 %v458
    %v552 = vunpack.c.l.b16 %v459
    %v553 = vunpack.c.h.b16 %v459
    %v554 = vunpack.c.l.b16 %v460
    %v555 = vunpack.c.h.b16 %v460
    %v556 = vunpack.c.l.b16 %v461
    %v557 = vunpack.c.h.b16 %v461
    %v558 = vunpack.c.l.b16 %v462
    %v559 = vunpack.c.h.b16 %v462
    %v560 = vunpack.c.l.b16 %v463
    %v561 = vunpack.c.h.b16 %v463
    %v562 = vunpack.c.l.b16 %v464
    %v563 = vunpack.c.h.b16 %v464
    %v564 = vunpack.c.l.b16 %v465
    %v565 = vunpack.c.h.b16 %v465
    %v566 = vunpack.c.l.b16 %v466
    %v567 = vunpack.c.h.b16 %v466
    %v568 = vunpack.c.l.b16 %v467
    %v569 = vunpack.c.h.b16 %v467
    %v570 = vunpack.c.l.b16 %v468
    %v571 = vunpack.c.h.b16 %v468
    %v572 = vunpack.c.l.b16 %v469
    %v573 = vunpack.c.h.b16 %v469
    %v574 = vunpack.c.l.b16 %v470
    %v575 = vunpack.c.h.b16 %v470
    %v576 = vunpack.c.l.b16 %v471
    %v577 = vunpack.c.h.b16 %v471
    %v578 = vpack.c.b16 %v518, %v514
    %v579 = vpack.c.b16 %v519, %v515
    %v580 = vpack.c.b16 %v520, %v516
    %v581 = vpack.c.b16 %v521, %v517
    %v582 = vpack.c.b16 %v526, %v522
    %v583 = vpack.c.b16 %v527, %v523
    %v584 = vpack.c.b16 %v528, %v524
    %v585 = vpack.c.b16 %v529, %v525
    %v586 = vpack.c.b16 %v534, %v530
    %v587 = vpack.c.b16 %v535, %v531
    %v588 = vpack.c.b16 %v536, %v532
    %v589 = vpack.c.b16 %v537, %v533
    %v590 = vpack.c.b16 %v542, %v538
    %v591 = vpack.c.b16 %v543, %v539
    %v592 = vpack.c.b16 %v544, %v540
    %v593 = vpack.c.b16 %v545, %v541
    %v594 = vpack.c.b16 %v550, %v546
    %v595 = vpack.c.b16 %v551, %v547
    %v596 = vpack.c.b16 %v552, %v548
    %v597 = vpack.c.b16 %v553, %v549
    %v598 = vpack.c.b16 %v558, %v554
    %v599 = vpack.c.b16 %v559, %v555
    %v600 = vpack.c.b16 %v560, %v556
    %v601 = vpack.c.b16 %v561, %v557
    %v602 = vpack.c.b16 %v566, %v562
    %v603 = vpack.c.b16 %v567, %v563
    %v604 = vpack.c.b16 %v568, %v564
    %v605 = vpack.c.b16 %v569, %v565
    %v606 = vpack.c.b16 %v574, %v570
    %v607 = vpack.c.b16 %v575, %v571
    %v608 = vpack.c.b16 %v576, %v572
    %v609 = vpack.c.b16 %v577, %v573
    %642 = vmatpush.bf16.msra.mxu0 %v606
    %643 = vmatpush.bf16.msra.mxu0 %v602
    %644 = vmatpush.bf16.msra.mxu0 %v598
    %645 = vmatpush.bf16.msra.mxu0 %v594
    %646 = vmatpush.bf16.msra.mxu0 %v590
    %647 = vmatpush.bf16.msra.mxu0 %v586
    %648 = vmatpush.bf16.msra.mxu0 %v582
    %649 = vmatpush.bf16.msra.mxu0 %v578
    %650 = vmatmul.bf16.gmra.mxu0 %v481
    %v651 = vpop.f32.mrf.mxu0
    %v652 = vadd.f32 0.0, %v651
    %v653 = vpop.f32.mrf.mxu0
    %654 = vdwg.mxu0
    %655 = vmatpush.bf16.msra.mxu0 %v607
    %656 = vmatpush.bf16.msra.mxu0 %v603
    %657 = vmatpush.bf16.msra.mxu0 %v599
    %658 = vmatpush.bf16.msra.mxu0 %v595
    %659 = vmatpush.bf16.msra.mxu0 %v591
    %660 = vmatpush.bf16.msra.mxu0 %v587
    %661 = vmatpush.bf16.msra.mxu0 %v583
    %662 = vmatpush.bf16.msra.mxu0 %v579
    %663 = vmatmul.bf16.gmra.mxu0 %v481
    %v664 = vpop.f32.mrf.mxu0
    %v665 = vadd.f32 0.0, %v664
    %v666 = vpop.f32.mrf.mxu0
    %667 = vdwg.mxu0
    %668 = vmatpush.bf16.msra.mxu0 %v608
    %669 = vmatpush.bf16.msra.mxu0 %v604
    %670 = vmatpush.bf16.msra.mxu0 %v600
    %671 = vmatpush.bf16.msra.mxu0 %v596
    %672 = vmatpush.bf16.msra.mxu0 %v592
    %673 = vmatpush.bf16.msra.mxu0 %v588
    %674 = vmatpush.bf16.msra.mxu0 %v584
    %675 = vmatpush.bf16.msra.mxu0 %v580
    %676 = vmatmul.bf16.gmra.mxu0 %v481
    %v677 = vpop.f32.mrf.mxu0
    %v678 = vadd.f32 0.0, %v677
    %v679 = vpop.f32.mrf.mxu0
    %680 = vdwg.mxu0
    %681 = vmatpush.bf16.msra.mxu0 %v609
    %682 = vmatpush.bf16.msra.mxu0 %v605
    %683 = vmatpush.bf16.msra.mxu0 %v601
    %684 = vmatpush.bf16.msra.mxu0 %v597
    %685 = vmatpush.bf16.msra.mxu0 %v593
    %686 = vmatpush.bf16.msra.mxu0 %v589
    %687 = vmatpush.bf16.msra.mxu0 %v585
    %688 = vmatpush.bf16.msra.mxu0 %v581
    %689 = vmatmul.bf16.gmra.mxu0 %v481
    %v690 = vpop.f32.mrf.mxu0
    %v691 = vadd.f32 0.0, %v690
    %v692 = vpop.f32.mrf.mxu0
    %693 = vdwg.mxu0
    %v694 = vadd.f32 %v477, %v652
    %v695 = vadd.f32 %v478, %v665
    %v696 = vadd.f32 %v479, %v678
    %v697 = vadd.f32 %v480, %v691
    %v698 = vxor.u32 %v694, 2147483648
    %v699 = vxor.u32 %v695, 2147483648
    %v700 = vxor.u32 %v696, 2147483648
    %v701 = vmul.f32 %v698, 1.442695
    %v702 = vpow.pop %v701
    %v703 = vmul.f32 %v699, 1.442695
    %v704 = vpow.pop %v703
    %v705 = vmul.f32 %v700, 1.442695
    %v706 = vpow.pop %v705
    %v707 = vadd.f32 %v702, 1.0
    %v708 = vadd.f32 %v704, 1.0
    %v709 = vadd.f32 %v706, 1.0
    %v710 = vrcp.pop %v707
    %v711 = vmul.f32 %v707, %v710
    %v712 = vsub.f32 1.0, %v711
    %v713 = vmul.f32 %v710, %v712
    %v714 = vadd.f32 %v710, %v713
    %vm715 = vweird.f32 %v707
    %vm716 = vweird.f32 %v710
    %vm717 = vmor %vm715, %vm716
    %v718 = vsel %vm717, %v710, %v714
    %v719 = vand.u32 2147483647, %v707
    %vm720 = vcmp.eq.f32.partialorder %v719, 8.507059e+37
    %v721 = vand.u32 %v707, 2147483648
    %v722 = vor.u32 1.1754944e-38, %v721
    %v723 = vsel %vm720, %v722, %v718
    %v724 = vmul.f32 1.0, %v723
    %v725 = vrcp.pop %v708
    %v726 = vmul.f32 %v708, %v725
    %v727 = vsub.f32 1.0, %v726
    %v728 = vmul.f32 %v725, %v727
    %v729 = vadd.f32 %v725, %v728
    %vm730 = vweird.f32 %v708
    %vm731 = vweird.f32 %v725
    %vm732 = vmor %vm730, %vm731
    %v733 = vsel %vm732, %v725, %v729
    %v734 = vand.u32 2147483647, %v708
    %vm735 = vcmp.eq.f32.partialorder %v734, 8.507059e+37
    %v736 = vand.u32 %v708, 2147483648
    %v737 = vor.u32 1.1754944e-38, %v736
    %v738 = vsel %vm735, %v737, %v733
    %v739 = vmul.f32 1.0, %v738
    %v740 = vrcp.pop %v709
    %v741 = vmul.f32 %v709, %v740
    %v742 = vsub.f32 1.0, %v741
    %v743 = vmul.f32 %v740, %v742
    %v744 = vadd.f32 %v740, %v743
    %vm745 = vweird.f32 %v709
    %vm746 = vweird.f32 %v740
    %vm747 = vmor %vm745, %vm746
    %v748 = vsel %vm747, %v740, %v744
    %v749 = vand.u32 2147483647, %v709
    %vm750 = vcmp.eq.f32.partialorder %v749, 8.507059e+37
    %v751 = vand.u32 %v709, 2147483648
    %v752 = vor.u32 1.1754944e-38, %v751
    %v753 = vsel %vm750, %v752, %v748
    %v754 = vmul.f32 1.0, %v753
    %v755 = vtanh.pop %v697
    %v756 = vmul.f32 %v739, %v473
    %v757 = vmul.f32 %v724, %v755
    %v758 = vadd.f32 %v756, %v757
    %v759 = vtanh.pop %v758
    %v760 = vmul.f32 %v754, %v759
    %v761 = vpack.c.bf16 %v760, %v760
    %762 = vst [vmem:[#allocation10] sm:$0xf] %v761
    %s763 = smul.u32 1, 4
    %s764 = smul.addr %s763, 8
    %s765 = scalar_lea.vmem [#allocation4], %s764
    %v766 = vld [vmem:[%s765] sm:$0xff]
    %v767 = vld [vmem:[%s765 + $0x8] sm:$0xff]
    %v768 = vld [vmem:[%s765 + $0x10] sm:$0xff]
    %v769 = vld [vmem:[%s765 + $0x18] sm:$0xff]
    %770 = vmatpush.bf16.msra.mxu0 %v606
    %771 = vmatpush.bf16.msra.mxu0 %v602
    %772 = vmatpush.bf16.msra.mxu0 %v598
    %773 = vmatpush.bf16.msra.mxu0 %v594
    %774 = vmatpush.bf16.msra.mxu0 %v590
    %775 = vmatpush.bf16.msra.mxu0 %v586
    %776 = vmatpush.bf16.msra.mxu0 %v582
    %777 = vmatpush.bf16.msra.mxu0 %v578
    %778 = vmatmul.bf16.gmra.mxu0 %v761
    %v779 = vpop.f32.mrf.mxu0
    %v780 = vadd.f32 0.0, %v779
    %v781 = vpop.f32.mrf.mxu0
    %782 = vdwg.mxu0
    %783 = vmatpush.bf16.msra.mxu0 %v607
    %784 = vmatpush.bf16.msra.mxu0 %v603
    %785 = vmatpush.bf16.msra.mxu0 %v599
    %786 = vmatpush.bf16.msra.mxu0 %v595
    %787 = vmatpush.bf16.msra.mxu0 %v591
    %788 = vmatpush.bf16.msra.mxu0 %v587
    %789 = vmatpush.bf16.msra.mxu0 %v583
    %790 = vmatpush.bf16.msra.mxu0 %v579
    %791 = vmatmul.bf16.gmra.mxu0 %v761
    %v792 = vpop.f32.mrf.mxu0
    %v793 = vadd.f32 0.0, %v792
    %v794 = vpop.f32.mrf.mxu0
    %795 = vdwg.mxu0
    %796 = vmatpush.bf16.msra.mxu0 %v608
    %797 = vmatpush.bf16.msra.mxu0 %v604
    %798 = vmatpush.bf16.msra.mxu0 %v600
    %799 = vmatpush.bf16.msra.mxu0 %v596
    %800 = vmatpush.bf16.msra.mxu0 %v592
    %801 = vmatpush.bf16.msra.mxu0 %v588
    %802 = vmatpush.bf16.msra.mxu0 %v584
    %803 = vmatpush.bf16.msra.mxu0 %v580
    %804 = vmatmul.bf16.gmra.mxu0 %v761
    %v805 = vpop.f32.mrf.mxu0
    %v806 = vadd.f32 0.0, %v805
    %v807 = vpop.f32.mrf.mxu0
    %808 = vdwg.mxu0
    %809 = vmatpush.bf16.msra.mxu0 %v609
    %810 = vmatpush.bf16.msra.mxu0 %v605
    %811 = vmatpush.bf16.msra.mxu0 %v601
    %812 = vmatpush.bf16.msra.mxu0 %v597
    %813 = vmatpush.bf16.msra.mxu0 %v593
    %814 = vmatpush.bf16.msra.mxu0 %v589
    %815 = vmatpush.bf16.msra.mxu0 %v585
    %816 = vmatpush.bf16.msra.mxu0 %v581
    %817 = vmatmul.bf16.gmra.mxu0 %v761
    %v818 = vpop.f32.mrf.mxu0
    %v819 = vadd.f32 0.0, %v818
    %v820 = vpop.f32.mrf.mxu0
    %821 = vdwg.mxu0
    %v822 = vadd.f32 %v766, %v780
    %v823 = vadd.f32 %v767, %v793
    %v824 = vadd.f32 %v768, %v806
    %v825 = vadd.f32 %v769, %v819
    %v826 = vxor.u32 %v822, 2147483648
    %v827 = vxor.u32 %v823, 2147483648
    %v828 = vxor.u32 %v824, 2147483648
    %v829 = vmul.f32 %v826, 1.442695
    %v830 = vpow.pop %v829
    %v831 = vmul.f32 %v827, 1.442695
    %v832 = vpow.pop %v831
    %v833 = vmul.f32 %v828, 1.442695
    %v834 = vpow.pop %v833
    %v835 = vadd.f32 %v830, 1.0
    %v836 = vadd.f32 %v832, 1.0
    %v837 = vadd.f32 %v834, 1.0
    %v838 = vrcp.pop %v835
    %v839 = vmul.f32 %v835, %v838
    %v840 = vsub.f32 1.0, %v839
    %v841 = vmul.f32 %v838, %v840
    %v842 = vadd.f32 %v838, %v841
    %vm843 = vweird.f32 %v835
    %vm844 = vweird.f32 %v838
    %vm845 = vmor %vm843, %vm844
    %v846 = vsel %vm845, %v838, %v842
    %v847 = vand.u32 2147483647, %v835
    %vm848 = vcmp.eq.f32.partialorder %v847, 8.507059e+37
    %v849 = vand.u32 %v835, 2147483648
    %v850 = vor.u32 1.1754944e-38, %v849
    %v851 = vsel %vm848, %v850, %v846
    %v852 = vmul.f32 1.0, %v851
    %v853 = vrcp.pop %v836
    %v854 = vmul.f32 %v836, %v853
    %v855 = vsub.f32 1.0, %v854
    %v856 = vmul.f32 %v853, %v855
    %v857 = vadd.f32 %v853, %v856
    %vm858 = vweird.f32 %v836
    %vm859 = vweird.f32 %v853
    %vm860 = vmor %vm858, %vm859
    %v861 = vsel %vm860, %v853, %v857
    %v862 = vand.u32 2147483647, %v836
    %vm863 = vcmp.eq.f32.partialorder %v862, 8.507059e+37
    %v864 = vand.u32 %v836, 2147483648
    %v865 = vor.u32 1.1754944e-38, %v864
    %v866 = vsel %vm863, %v865, %v861
    %v867 = vmul.f32 1.0, %v866
    %v868 = vrcp.pop %v837
    %v869 = vmul.f32 %v837, %v868
    %v870 = vsub.f32 1.0, %v869
    %v871 = vmul.f32 %v868, %v870
    %v872 = vadd.f32 %v868, %v871
    %vm873 = vweird.f32 %v837
    %vm874 = vweird.f32 %v868
    %vm875 = vmor %vm873, %vm874
    %v876 = vsel %vm875, %v868, %v872
    %v877 = vand.u32 2147483647, %v837
    %vm878 = vcmp.eq.f32.partialorder %v877, 8.507059e+37
    %v879 = vand.u32 %v837, 2147483648
    %v880 = vor.u32 1.1754944e-38, %v879
    %v881 = vsel %vm878, %v880, %v876
    %v882 = vmul.f32 1.0, %v881
    %v883 = vtanh.pop %v825
    %v884 = vmul.f32 %v867, %v758
    %v885 = vmul.f32 %v852, %v883
    %v886 = vadd.f32 %v884, %v885
    %v887 = vtanh.pop %v886
    %v888 = vmul.f32 %v882, %v887
    %v889 = vpack.c.bf16 %v888, %v888
    %s890 = scalar_lea.vmem [#allocation10], 4
    %891 = vst [vmem:[%s890] sm:$0xf] %v889
    %s892 = smul.u32 2, 4
    %s893 = smul.addr %s892, 8
    %s894 = scalar_lea.vmem [#allocation4], %s893
    %v895 = vld [vmem:[%s894] sm:$0xff]
    %v896 = vld [vmem:[%s894 + $0x8] sm:$0xff]
    %v897 = vld [vmem:[%s894 + $0x10] sm:$0xff]
    %v898 = vld [vmem:[%s894 + $0x18] sm:$0xff]
    %899 = vmatpush.bf16.msra.mxu0 %v606
    %900 = vmatpush.bf16.msra.mxu0 %v602
    %901 = vmatpush.bf16.msra.mxu0 %v598
    %902 = vmatpush.bf16.msra.mxu0 %v594
    %903 = vmatpush.bf16.msra.mxu0 %v590
    %904 = vmatpush.bf16.msra.mxu0 %v586
    %905 = vmatpush.bf16.msra.mxu0 %v582
    %906 = vmatpush.bf16.msra.mxu0 %v578
    %907 = vmatmul.bf16.gmra.mxu0 %v889
    %v908 = vpop.f32.mrf.mxu0
    %v909 = vadd.f32 0.0, %v908
    %v910 = vpop.f32.mrf.mxu0
    %911 = vdwg.mxu0
    %912 = vmatpush.bf16.msra.mxu0 %v607
    %913 = vmatpush.bf16.msra.mxu0 %v603
    %914 = vmatpush.bf16.msra.mxu0 %v599
    %915 = vmatpush.bf16.msra.mxu0 %v595
    %916 = vmatpush.bf16.msra.mxu0 %v591
    %917 = vmatpush.bf16.msra.mxu0 %v587
    %918 = vmatpush.bf16.msra.mxu0 %v583
    %919 = vmatpush.bf16.msra.mxu0 %v579
    %920 = vmatmul.bf16.gmra.mxu0 %v889
    %v921 = vpop.f32.mrf.mxu0
    %v922 = vadd.f32 0.0, %v921
    %v923 = vpop.f32.mrf.mxu0
    %924 = vdwg.mxu0
    %925 = vmatpush.bf16.msra.mxu0 %v608
    %926 = vmatpush.bf16.msra.mxu0 %v604
    %927 = vmatpush.bf16.msra.mxu0 %v600
    %928 = vmatpush.bf16.msra.mxu0 %v596
    %929 = vmatpush.bf16.msra.mxu0 %v592
    %930 = vmatpush.bf16.msra.mxu0 %v588
    %931 = vmatpush.bf16.msra.mxu0 %v584
    %932 = vmatpush.bf16.msra.mxu0 %v580
    %933 = vmatmul.bf16.gmra.mxu0 %v889
    %v934 = vpop.f32.mrf.mxu0
    %v935 = vadd.f32 0.0, %v934
    %v936 = vpop.f32.mrf.mxu0
    %937 = vdwg.mxu0
    %938 = vmatpush.bf16.msra.mxu0 %v609
    %939 = vmatpush.bf16.msra.mxu0 %v605
    %940 = vmatpush.bf16.msra.mxu0 %v601
    %941 = vmatpush.bf16.msra.mxu0 %v597
    %942 = vmatpush.bf16.msra.mxu0 %v593
    %943 = vmatpush.bf16.msra.mxu0 %v589
    %944 = vmatpush.bf16.msra.mxu0 %v585
    %945 = vmatpush.bf16.msra.mxu0 %v581
    %946 = vmatmul.bf16.gmra.mxu0 %v889
    %v947 = vpop.f32.mrf.mxu0
    %v948 = vadd.f32 0.0, %v947
    %v949 = vpop.f32.mrf.mxu0
    %950 = vdwg.mxu0
    %v951 = vadd.f32 %v895, %v909
    %v952 = vadd.f32 %v896, %v922
    %v953 = vadd.f32 %v897, %v935
    %v954 = vadd.f32 %v898, %v948
    %v955 = vxor.u32 %v951, 2147483648
    %v956 = vxor.u32 %v952, 2147483648
    %v957 = vxor.u32 %v953, 2147483648
    %v958 = vmul.f32 %v955, 1.442695
    %v959 = vpow.pop %v958
    %v960 = vmul.f32 %v956, 1.442695
    %v961 = vpow.pop %v960
    %v962 = vmul.f32 %v957, 1.442695
    %v963 = vpow.pop %v962
    %v964 = vadd.f32 %v959, 1.0
    %v965 = vadd.f32 %v961, 1.0
    %v966 = vadd.f32 %v963, 1.0
    %v967 = vrcp.pop %v964
    %v968 = vmul.f32 %v964, %v967
    %v969 = vsub.f32 1.0, %v968
    %v970 = vmul.f32 %v967, %v969
    %v971 = vadd.f32 %v967, %v970
    %vm972 = vweird.f32 %v964
    %vm973 = vweird.f32 %v967
    %vm974 = vmor %vm972, %vm973
    %v975 = vsel %vm974, %v967, %v971
    %v976 = vand.u32 2147483647, %v964
    %vm977 = vcmp.eq.f32.partialorder %v976, 8.507059e+37
    %v978 = vand.u32 %v964, 2147483648
    %v979 = vor.u32 1.1754944e-38, %v978
    %v980 = vsel %vm977, %v979, %v975
    %v981 = vmul.f32 1.0, %v980
    %v982 = vrcp.pop %v965
    %v983 = vmul.f32 %v965, %v982
    %v984 = vsub.f32 1.0, %v983
    %v985 = vmul.f32 %v982, %v984
    %v986 = vadd.f32 %v982, %v985
    %vm987 = vweird.f32 %v965
    %vm988 = vweird.f32 %v982
    %vm989 = vmor %vm987, %vm988
    %v990 = vsel %vm989, %v982, %v986
    %v991 = vand.u32 2147483647, %v965
    %vm992 = vcmp.eq.f32.partialorder %v991, 8.507059e+37
    %v993 = vand.u32 %v965, 2147483648
    %v994 = vor.u32 1.1754944e-38, %v993
    %v995 = vsel %vm992, %v994, %v990
    %v996 = vmul.f32 1.0, %v995
    %v997 = vrcp.pop %v966
    %v998 = vmul.f32 %v966, %v997
    %v999 = vsub.f32 1.0, %v998
    %v1000 = vmul.f32 %v997, %v999
    %v1001 = vadd.f32 %v997, %v1000
    %vm1002 = vweird.f32 %v966
    %vm1003 = vweird.f32 %v997
    %vm1004 = vmor %vm1002, %vm1003
    %v1005 = vsel %vm1004, %v997, %v1001
    %v1006 = vand.u32 2147483647, %v966
    %vm1007 = vcmp.eq.f32.partialorder %v1006, 8.507059e+37
    %v1008 = vand.u32 %v966, 2147483648
    %v1009 = vor.u32 1.1754944e-38, %v1008
    %v1010 = vsel %vm1007, %v1009, %v1005
    %v1011 = vmul.f32 1.0, %v1010
    %v1012 = vtanh.pop %v954
    %v1013 = vmul.f32 %v996, %v886
    %v1014 = vmul.f32 %v981, %v1012
    %v1015 = vadd.f32 %v1013, %v1014
    %v1016 = vtanh.pop %v1015
    %v1017 = vmul.f32 %v1011, %v1016
    %v1018 = vpack.c.bf16 %v1017, %v1017
    %s1019 = scalar_lea.vmem [#allocation10], 8
    %1020 = vst [vmem:[%s1019] sm:$0xf] %v1018
    %s1021 = smul.u32 3, 4
    %s1022 = smul.addr %s1021, 8
    %s1023 = scalar_lea.vmem [#allocation4], %s1022
    %v1024 = vld [vmem:[%s1023] sm:$0xff]
    %v1025 = vld [vmem:[%s1023 + $0x8] sm:$0xff]
    %v1026 = vld [vmem:[%s1023 + $0x10] sm:$0xff]
    %v1027 = vld [vmem:[%s1023 + $0x18] sm:$0xff]
    %1028 = vmatpush.bf16.msra.mxu0 %v606
    %1029 = vmatpush.bf16.msra.mxu0 %v602
    %1030 = vmatpush.bf16.msra.mxu0 %v598
    %1031 = vmatpush.bf16.msra.mxu0 %v594
    %1032 = vmatpush.bf16.msra.mxu0 %v590
    %1033 = vmatpush.bf16.msra.mxu0 %v586
    %1034 = vmatpush.bf16.msra.mxu0 %v582
    %1035 = vmatpush.bf16.msra.mxu0 %v578
    %1036 = vmatmul.bf16.gmra.mxu0 %v1018
    %v1037 = vpop.f32.mrf.mxu0
    %v1038 = vadd.f32 0.0, %v1037
    %v1039 = vpop.f32.mrf.mxu0
    %1040 = vdwg.mxu0
    %1041 = vmatpush.bf16.msra.mxu0 %v607
    %1042 = vmatpush.bf16.msra.mxu0 %v603
    %1043 = vmatpush.bf16.msra.mxu0 %v599
    %1044 = vmatpush.bf16.msra.mxu0 %v595
    %1045 = vmatpush.bf16.msra.mxu0 %v591
    %1046 = vmatpush.bf16.msra.mxu0 %v587
    %1047 = vmatpush.bf16.msra.mxu0 %v583
    %1048 = vmatpush.bf16.msra.mxu0 %v579
    %1049 = vmatmul.bf16.gmra.mxu0 %v1018
    %v1050 = vpop.f32.mrf.mxu0
    %v1051 = vadd.f32 0.0, %v1050
    %v1052 = vpop.f32.mrf.mxu0
    %1053 = vdwg.mxu0
    %1054 = vmatpush.bf16.msra.mxu0 %v608
    %1055 = vmatpush.bf16.msra.mxu0 %v604
    %1056 = vmatpush.bf16.msra.mxu0 %v600
    %1057 = vmatpush.bf16.msra.mxu0 %v596
    %1058 = vmatpush.bf16.msra.mxu0 %v592
    %1059 = vmatpush.bf16.msra.mxu0 %v588
    %1060 = vmatpush.bf16.msra.mxu0 %v584
    %1061 = vmatpush.bf16.msra.mxu0 %v580
    %1062 = vmatmul.bf16.gmra.mxu0 %v1018
    %v1063 = vpop.f32.mrf.mxu0
    %v1064 = vadd.f32 0.0, %v1063
    %v1065 = vpop.f32.mrf.mxu0
    %1066 = vdwg.mxu0
    %1067 = vmatpush.bf16.msra.mxu0 %v609
    %1068 = vmatpush.bf16.msra.mxu0 %v605
    %1069 = vmatpush.bf16.msra.mxu0 %v601
    %1070 = vmatpush.bf16.msra.mxu0 %v597
    %1071 = vmatpush.bf16.msra.mxu0 %v593
    %1072 = vmatpush.bf16.msra.mxu0 %v589
    %1073 = vmatpush.bf16.msra.mxu0 %v585
    %1074 = vmatpush.bf16.msra.mxu0 %v581
    %1075 = vmatmul.bf16.gmra.mxu0 %v1018
    %v1076 = vpop.f32.mrf.mxu0
    %v1077 = vadd.f32 0.0, %v1076
    %v1078 = vpop.f32.mrf.mxu0
    %1079 = vdwg.mxu0
    %v1080 = vadd.f32 %v1024, %v1038
    %v1081 = vadd.f32 %v1025, %v1051
    %v1082 = vadd.f32 %v1026, %v1064
    %v1083 = vadd.f32 %v1027, %v1077
    %v1084 = vxor.u32 %v1080, 2147483648
    %v1085 = vxor.u32 %v1081, 2147483648
    %v1086 = vxor.u32 %v1082, 2147483648
    %v1087 = vmul.f32 %v1084, 1.442695
    %v1088 = vpow.pop %v1087
    %v1089 = vmul.f32 %v1085, 1.442695
    %v1090 = vpow.pop %v1089
    %v1091 = vmul.f32 %v1086, 1.442695
    %v1092 = vpow.pop %v1091
    %v1093 = vadd.f32 %v1088, 1.0
    %v1094 = vadd.f32 %v1090, 1.0
    %v1095 = vadd.f32 %v1092, 1.0
    %v1096 = vrcp.pop %v1093
    %v1097 = vmul.f32 %v1093, %v1096
    %v1098 = vsub.f32 1.0, %v1097
    %v1099 = vmul.f32 %v1096, %v1098
    %v1100 = vadd.f32 %v1096, %v1099
    %vm1101 = vweird.f32 %v1093
    %vm1102 = vweird.f32 %v1096
    %vm1103 = vmor %vm1101, %vm1102
    %v1104 = vsel %vm1103, %v1096, %v1100
    %v1105 = vand.u32 2147483647, %v1093
    %vm1106 = vcmp.eq.f32.partialorder %v1105, 8.507059e+37
    %v1107 = vand.u32 %v1093, 2147483648
    %v1108 = vor.u32 1.1754944e-38, %v1107
    %v1109 = vsel %vm1106, %v1108, %v1104
    %v1110 = vmul.f32 1.0, %v1109
    %v1111 = vrcp.pop %v1094
    %v1112 = vmul.f32 %v1094, %v1111
    %v1113 = vsub.f32 1.0, %v1112
    %v1114 = vmul.f32 %v1111, %v1113
    %v1115 = vadd.f32 %v1111, %v1114
    %vm1116 = vweird.f32 %v1094
    %vm1117 = vweird.f32 %v1111
    %vm1118 = vmor %vm1116, %vm1117
    %v1119 = vsel %vm1118, %v1111, %v1115
    %v1120 = vand.u32 2147483647, %v1094
    %vm1121 = vcmp.eq.f32.partialorder %v1120, 8.507059e+37
    %v1122 = vand.u32 %v1094, 2147483648
    %v1123 = vor.u32 1.1754944e-38, %v1122
    %v1124 = vsel %vm1121, %v1123, %v1119
    %v1125 = vmul.f32 1.0, %v1124
    %v1126 = vrcp.pop %v1095
    %v1127 = vmul.f32 %v1095, %v1126
    %v1128 = vsub.f32 1.0, %v1127
    %v1129 = vmul.f32 %v1126, %v1128
    %v1130 = vadd.f32 %v1126, %v1129
    %vm1131 = vweird.f32 %v1095
    %vm1132 = vweird.f32 %v1126
    %vm1133 = vmor %vm1131, %vm1132
    %v1134 = vsel %vm1133, %v1126, %v1130
    %v1135 = vand.u32 2147483647, %v1095
    %vm1136 = vcmp.eq.f32.partialorder %v1135, 8.507059e+37
    %v1137 = vand.u32 %v1095, 2147483648
    %v1138 = vor.u32 1.1754944e-38, %v1137
    %v1139 = vsel %vm1136, %v1138, %v1134
    %v1140 = vmul.f32 1.0, %v1139
    %v1141 = vtanh.pop %v1083
    %v1142 = vmul.f32 %v1125, %v1015
    %v1143 = vmul.f32 %v1110, %v1141
    %v1144 = vadd.f32 %v1142, %v1143
    %v1145 = vtanh.pop %v1144
    %v1146 = vmul.f32 %v1140, %v1145
    %v1147 = vpack.c.bf16 %v1146, %v1146
    %s1148 = scalar_lea.vmem [#allocation10], 12
    %1149 = vst [vmem:[%s1148] sm:$0xf] %v1147
    %s1150 = smul.u32 4, 4
    %s1151 = smul.addr %s1150, 8
    %s1152 = scalar_lea.vmem [#allocation4], %s1151
    %v1153 = vld [vmem:[%s1152] sm:$0xff]
    %v1154 = vld [vmem:[%s1152 + $0x8] sm:$0xff]
    %v1155 = vld [vmem:[%s1152 + $0x10] sm:$0xff]
    %v1156 = vld [vmem:[%s1152 + $0x18] sm:$0xff]
    %1157 = vmatpush.bf16.msra.mxu0 %v606
    %1158 = vmatpush.bf16.msra.mxu0 %v602
    %1159 = vmatpush.bf16.msra.mxu0 %v598
    %1160 = vmatpush.bf16.msra.mxu0 %v594
    %1161 = vmatpush.bf16.msra.mxu0 %v590
    %1162 = vmatpush.bf16.msra.mxu0 %v586
    %1163 = vmatpush.bf16.msra.mxu0 %v582
    %1164 = vmatpush.bf16.msra.mxu0 %v578
    %1165 = vmatmul.bf16.gmra.mxu0 %v1147
    %v1166 = vpop.f32.mrf.mxu0
    %v1167 = vadd.f32 0.0, %v1166
    %v1168 = vpop.f32.mrf.mxu0
    %1169 = vdwg.mxu0
    %1170 = vmatpush.bf16.msra.mxu0 %v607
    %1171 = vmatpush.bf16.msra.mxu0 %v603
    %1172 = vmatpush.bf16.msra.mxu0 %v599
    %1173 = vmatpush.bf16.msra.mxu0 %v595
    %1174 = vmatpush.bf16.msra.mxu0 %v591
    %1175 = vmatpush.bf16.msra.mxu0 %v587
    %1176 = vmatpush.bf16.msra.mxu0 %v583
    %1177 = vmatpush.bf16.msra.mxu0 %v579
    %1178 = vmatmul.bf16.gmra.mxu0 %v1147
    %v1179 = vpop.f32.mrf.mxu0
    %v1180 = vadd.f32 0.0, %v1179
    %v1181 = vpop.f32.mrf.mxu0
    %1182 = vdwg.mxu0
    %1183 = vmatpush.bf16.msra.mxu0 %v608
    %1184 = vmatpush.bf16.msra.mxu0 %v604
    %1185 = vmatpush.bf16.msra.mxu0 %v600
    %1186 = vmatpush.bf16.msra.mxu0 %v596
    %1187 = vmatpush.bf16.msra.mxu0 %v592
    %1188 = vmatpush.bf16.msra.mxu0 %v588
    %1189 = vmatpush.bf16.msra.mxu0 %v584
    %1190 = vmatpush.bf16.msra.mxu0 %v580
    %1191 = vmatmul.bf16.gmra.mxu0 %v1147
    %v1192 = vpop.f32.mrf.mxu0
    %v1193 = vadd.f32 0.0, %v1192
    %v1194 = vpop.f32.mrf.mxu0
    %1195 = vdwg.mxu0
    %1196 = vmatpush.bf16.msra.mxu0 %v609
    %1197 = vmatpush.bf16.msra.mxu0 %v605
    %1198 = vmatpush.bf16.msra.mxu0 %v601
    %1199 = vmatpush.bf16.msra.mxu0 %v597
    %1200 = vmatpush.bf16.msra.mxu0 %v593
    %1201 = vmatpush.bf16.msra.mxu0 %v589
    %1202 = vmatpush.bf16.msra.mxu0 %v585
    %1203 = vmatpush.bf16.msra.mxu0 %v581
    %1204 = vmatmul.bf16.gmra.mxu0 %v1147
    %v1205 = vpop.f32.mrf.mxu0
    %v1206 = vadd.f32 0.0, %v1205
    %v1207 = vpop.f32.mrf.mxu0
    %1208 = vdwg.mxu0
    %v1209 = vadd.f32 %v1153, %v1167
    %v1210 = vadd.f32 %v1154, %v1180
    %v1211 = vadd.f32 %v1155, %v1193
    %v1212 = vadd.f32 %v1156, %v1206
    %v1213 = vxor.u32 %v1209, 2147483648
    %v1214 = vxor.u32 %v1210, 2147483648
    %v1215 = vxor.u32 %v1211, 2147483648
    %v1216 = vmul.f32 %v1213, 1.442695
    %v1217 = vpow.pop %v1216
    %v1218 = vmul.f32 %v1214, 1.442695
    %v1219 = vpow.pop %v1218
    %v1220 = vmul.f32 %v1215, 1.442695
    %v1221 = vpow.pop %v1220
    %v1222 = vadd.f32 %v1217, 1.0
    %v1223 = vadd.f32 %v1219, 1.0
    %v1224 = vadd.f32 %v1221, 1.0
    %v1225 = vrcp.pop %v1222
    %v1226 = vmul.f32 %v1222, %v1225
    %v1227 = vsub.f32 1.0, %v1226
    %v1228 = vmul.f32 %v1225, %v1227
    %v1229 = vadd.f32 %v1225, %v1228
    %vm1230 = vweird.f32 %v1222
    %vm1231 = vweird.f32 %v1225
    %vm1232 = vmor %vm1230, %vm1231
    %v1233 = vsel %vm1232, %v1225, %v1229
    %v1234 = vand.u32 2147483647, %v1222
    %vm1235 = vcmp.eq.f32.partialorder %v1234, 8.507059e+37
    %v1236 = vand.u32 %v1222, 2147483648
    %v1237 = vor.u32 1.1754944e-38, %v1236
    %v1238 = vsel %vm1235, %v1237, %v1233
    %v1239 = vmul.f32 1.0, %v1238
    %v1240 = vrcp.pop %v1223
    %v1241 = vmul.f32 %v1223, %v1240
    %v1242 = vsub.f32 1.0, %v1241
    %v1243 = vmul.f32 %v1240, %v1242
    %v1244 = vadd.f32 %v1240, %v1243
    %vm1245 = vweird.f32 %v1223
    %vm1246 = vweird.f32 %v1240
    %vm1247 = vmor %vm1245, %vm1246
    %v1248 = vsel %vm1247, %v1240, %v1244
    %v1249 = vand.u32 2147483647, %v1223
    %vm1250 = vcmp.eq.f32.partialorder %v1249, 8.507059e+37
    %v1251 = vand.u32 %v1223, 2147483648
    %v1252 = vor.u32 1.1754944e-38, %v1251
    %v1253 = vsel %vm1250, %v1252, %v1248
    %v1254 = vmul.f32 1.0, %v1253
    %v1255 = vrcp.pop %v1224
    %v1256 = vmul.f32 %v1224, %v1255
    %v1257 = vsub.f32 1.0, %v1256
    %v1258 = vmul.f32 %v1255, %v1257
    %v1259 = vadd.f32 %v1255, %v1258
    %vm1260 = vweird.f32 %v1224
    %vm1261 = vweird.f32 %v1255
    %vm1262 = vmor %vm1260, %vm1261
    %v1263 = vsel %vm1262, %v1255, %v1259
    %v1264 = vand.u32 2147483647, %v1224
    %vm1265 = vcmp.eq.f32.partialorder %v1264, 8.507059e+37
    %v1266 = vand.u32 %v1224, 2147483648
    %v1267 = vor.u32 1.1754944e-38, %v1266
    %v1268 = vsel %vm1265, %v1267, %v1263
    %v1269 = vmul.f32 1.0, %v1268
    %v1270 = vtanh.pop %v1212
    %v1271 = vmul.f32 %v1254, %v1144
    %v1272 = vmul.f32 %v1239, %v1270
    %v1273 = vadd.f32 %v1271, %v1272
    %v1274 = vtanh.pop %v1273
    %v1275 = vmul.f32 %v1269, %v1274
    %v1276 = vpack.c.bf16 %v1275, %v1275
    %s1277 = scalar_lea.vmem [#allocation10], 16
    %1278 = vst [vmem:[%s1277] sm:$0xf] %v1276
    %s1279 = smul.u32 5, 4
    %s1280 = smul.addr %s1279, 8
    %s1281 = scalar_lea.vmem [#allocation4], %s1280
    %v1282 = vld [vmem:[%s1281] sm:$0xff]
    %v1283 = vld [vmem:[%s1281 + $0x8] sm:$0xff]
    %v1284 = vld [vmem:[%s1281 + $0x10] sm:$0xff]
    %v1285 = vld [vmem:[%s1281 + $0x18] sm:$0xff]
    %1286 = vmatpush.bf16.msra.mxu0 %v606
    %1287 = vmatpush.bf16.msra.mxu0 %v602
    %1288 = vmatpush.bf16.msra.mxu0 %v598
    %1289 = vmatpush.bf16.msra.mxu0 %v594
    %1290 = vmatpush.bf16.msra.mxu0 %v590
    %1291 = vmatpush.bf16.msra.mxu0 %v586
    %1292 = vmatpush.bf16.msra.mxu0 %v582
    %1293 = vmatpush.bf16.msra.mxu0 %v578
    %1294 = vmatmul.bf16.gmra.mxu0 %v1276
    %v1295 = vpop.f32.mrf.mxu0
    %v1296 = vadd.f32 0.0, %v1295
    %v1297 = vpop.f32.mrf.mxu0
    %1298 = vdwg.mxu0
    %1299 = vmatpush.bf16.msra.mxu0 %v607
    %1300 = vmatpush.bf16.msra.mxu0 %v603
    %1301 = vmatpush.bf16.msra.mxu0 %v599
    %1302 = vmatpush.bf16.msra.mxu0 %v595
    %1303 = vmatpush.bf16.msra.mxu0 %v591
    %1304 = vmatpush.bf16.msra.mxu0 %v587
    %1305 = vmatpush.bf16.msra.mxu0 %v583
    %1306 = vmatpush.bf16.msra.mxu0 %v579
    %1307 = vmatmul.bf16.gmra.mxu0 %v1276
    %v1308 = vpop.f32.mrf.mxu0
    %v1309 = vadd.f32 0.0, %v1308
    %v1310 = vpop.f32.mrf.mxu0
    %1311 = vdwg.mxu0
    %1312 = vmatpush.bf16.msra.mxu0 %v608
    %1313 = vmatpush.bf16.msra.mxu0 %v604
    %1314 = vmatpush.bf16.msra.mxu0 %v600
    %1315 = vmatpush.bf16.msra.mxu0 %v596
    %1316 = vmatpush.bf16.msra.mxu0 %v592
    %1317 = vmatpush.bf16.msra.mxu0 %v588
    %1318 = vmatpush.bf16.msra.mxu0 %v584
    %1319 = vmatpush.bf16.msra.mxu0 %v580
    %1320 = vmatmul.bf16.gmra.mxu0 %v1276
    %v1321 = vpop.f32.mrf.mxu0
    %v1322 = vadd.f32 0.0, %v1321
    %v1323 = vpop.f32.mrf.mxu0
    %1324 = vdwg.mxu0
    %1325 = vmatpush.bf16.msra.mxu0 %v609
    %1326 = vmatpush.bf16.msra.mxu0 %v605
    %1327 = vmatpush.bf16.msra.mxu0 %v601
    %1328 = vmatpush.bf16.msra.mxu0 %v597
    %1329 = vmatpush.bf16.msra.mxu0 %v593
    %1330 = vmatpush.bf16.msra.mxu0 %v589
    %1331 = vmatpush.bf16.msra.mxu0 %v585
    %1332 = vmatpush.bf16.msra.mxu0 %v581
    %1333 = vmatmul.bf16.gmra.mxu0 %v1276
    %v1334 = vpop.f32.mrf.mxu0
    %v1335 = vadd.f32 0.0, %v1334
    %v1336 = vpop.f32.mrf.mxu0
    %1337 = vdwg.mxu0
    %v1338 = vadd.f32 %v1282, %v1296
    %v1339 = vadd.f32 %v1283, %v1309
    %v1340 = vadd.f32 %v1284, %v1322
    %v1341 = vadd.f32 %v1285, %v1335
    %v1342 = vxor.u32 %v1338, 2147483648
    %v1343 = vxor.u32 %v1339, 2147483648
    %v1344 = vxor.u32 %v1340, 2147483648
    %v1345 = vmul.f32 %v1342, 1.442695
    %v1346 = vpow.pop %v1345
    %v1347 = vmul.f32 %v1343, 1.442695
    %v1348 = vpow.pop %v1347
    %v1349 = vmul.f32 %v1344, 1.442695
    %v1350 = vpow.pop %v1349
    %v1351 = vadd.f32 %v1346, 1.0
    %v1352 = vadd.f32 %v1348, 1.0
    %v1353 = vadd.f32 %v1350, 1.0
    %v1354 = vrcp.pop %v1351
    %v1355 = vmul.f32 %v1351, %v1354
    %v1356 = vsub.f32 1.0, %v1355
    %v1357 = vmul.f32 %v1354, %v1356
    %v1358 = vadd.f32 %v1354, %v1357
    %vm1359 = vweird.f32 %v1351
    %vm1360 = vweird.f32 %v1354
    %vm1361 = vmor %vm1359, %vm1360
    %v1362 = vsel %vm1361, %v1354, %v1358
    %v1363 = vand.u32 2147483647, %v1351
    %vm1364 = vcmp.eq.f32.partialorder %v1363, 8.507059e+37
    %v1365 = vand.u32 %v1351, 2147483648
    %v1366 = vor.u32 1.1754944e-38, %v1365
    %v1367 = vsel %vm1364, %v1366, %v1362
    %v1368 = vmul.f32 1.0, %v1367
    %v1369 = vrcp.pop %v1352
    %v1370 = vmul.f32 %v1352, %v1369
    %v1371 = vsub.f32 1.0, %v1370
    %v1372 = vmul.f32 %v1369, %v1371
    %v1373 = vadd.f32 %v1369, %v1372
    %vm1374 = vweird.f32 %v1352
    %vm1375 = vweird.f32 %v1369
    %vm1376 = vmor %vm1374, %vm1375
    %v1377 = vsel %vm1376, %v1369, %v1373
    %v1378 = vand.u32 2147483647, %v1352
    %vm1379 = vcmp.eq.f32.partialorder %v1378, 8.507059e+37
    %v1380 = vand.u32 %v1352, 2147483648
    %v1381 = vor.u32 1.1754944e-38, %v1380
    %v1382 = vsel %vm1379, %v1381, %v1377
    %v1383 = vmul.f32 1.0, %v1382
    %v1384 = vrcp.pop %v1353
    %v1385 = vmul.f32 %v1353, %v1384
    %v1386 = vsub.f32 1.0, %v1385
    %v1387 = vmul.f32 %v1384, %v1386
    %v1388 = vadd.f32 %v1384, %v1387
    %vm1389 = vweird.f32 %v1353
    %vm1390 = vweird.f32 %v1384
    %vm1391 = vmor %vm1389, %vm1390
    %v1392 = vsel %vm1391, %v1384, %v1388
    %v1393 = vand.u32 2147483647, %v1353
    %vm1394 = vcmp.eq.f32.partialorder %v1393, 8.507059e+37
    %v1395 = vand.u32 %v1353, 2147483648
    %v1396 = vor.u32 1.1754944e-38, %v1395
    %v1397 = vsel %vm1394, %v1396, %v1392
    %v1398 = vmul.f32 1.0, %v1397
    %v1399 = vtanh.pop %v1341
    %v1400 = vmul.f32 %v1383, %v1273
    %v1401 = vmul.f32 %v1368, %v1399
    %v1402 = vadd.f32 %v1400, %v1401
    %v1403 = vtanh.pop %v1402
    %v1404 = vmul.f32 %v1398, %v1403
    %v1405 = vpack.c.bf16 %v1404, %v1404
    %s1406 = scalar_lea.vmem [#allocation10], 20
    %1407 = vst [vmem:[%s1406] sm:$0xf] %v1405
    %s1408 = smul.u32 6, 4
    %s1409 = smul.addr %s1408, 8
    %s1410 = scalar_lea.vmem [#allocation4], %s1409
    %v1411 = vld [vmem:[%s1410] sm:$0xff]
    %v1412 = vld [vmem:[%s1410 + $0x8] sm:$0xff]
    %v1413 = vld [vmem:[%s1410 + $0x10] sm:$0xff]
    %v1414 = vld [vmem:[%s1410 + $0x18] sm:$0xff]
    %1415 = vmatpush.bf16.msra.mxu0 %v606
    %1416 = vmatpush.bf16.msra.mxu0 %v602
    %1417 = vmatpush.bf16.msra.mxu0 %v598
    %1418 = vmatpush.bf16.msra.mxu0 %v594
    %1419 = vmatpush.bf16.msra.mxu0 %v590
    %1420 = vmatpush.bf16.msra.mxu0 %v586
    %1421 = vmatpush.bf16.msra.mxu0 %v582
    %1422 = vmatpush.bf16.msra.mxu0 %v578
    %1423 = vmatmul.bf16.gmra.mxu0 %v1405
    %v1424 = vpop.f32.mrf.mxu0
    %v1425 = vadd.f32 0.0, %v1424
    %v1426 = vpop.f32.mrf.mxu0
    %1427 = vdwg.mxu0
    %1428 = vmatpush.bf16.msra.mxu0 %v607
    %1429 = vmatpush.bf16.msra.mxu0 %v603
    %1430 = vmatpush.bf16.msra.mxu0 %v599
    %1431 = vmatpush.bf16.msra.mxu0 %v595
    %1432 = vmatpush.bf16.msra.mxu0 %v591
    %1433 = vmatpush.bf16.msra.mxu0 %v587
    %1434 = vmatpush.bf16.msra.mxu0 %v583
    %1435 = vmatpush.bf16.msra.mxu0 %v579
    %1436 = vmatmul.bf16.gmra.mxu0 %v1405
    %v1437 = vpop.f32.mrf.mxu0
    %v1438 = vadd.f32 0.0, %v1437
    %v1439 = vpop.f32.mrf.mxu0
    %1440 = vdwg.mxu0
    %1441 = vmatpush.bf16.msra.mxu0 %v608
    %1442 = vmatpush.bf16.msra.mxu0 %v604
    %1443 = vmatpush.bf16.msra.mxu0 %v600
    %1444 = vmatpush.bf16.msra.mxu0 %v596
    %1445 = vmatpush.bf16.msra.mxu0 %v592
    %1446 = vmatpush.bf16.msra.mxu0 %v588
    %1447 = vmatpush.bf16.msra.mxu0 %v584
    %1448 = vmatpush.bf16.msra.mxu0 %v580
    %1449 = vmatmul.bf16.gmra.mxu0 %v1405
    %v1450 = vpop.f32.mrf.mxu0
    %v1451 = vadd.f32 0.0, %v1450
    %v1452 = vpop.f32.mrf.mxu0
    %1453 = vdwg.mxu0
    %1454 = vmatpush.bf16.msra.mxu0 %v609
    %1455 = vmatpush.bf16.msra.mxu0 %v605
    %1456 = vmatpush.bf16.msra.mxu0 %v601
    %1457 = vmatpush.bf16.msra.mxu0 %v597
    %1458 = vmatpush.bf16.msra.mxu0 %v593
    %1459 = vmatpush.bf16.msra.mxu0 %v589
    %1460 = vmatpush.bf16.msra.mxu0 %v585
    %1461 = vmatpush.bf16.msra.mxu0 %v581
    %1462 = vmatmul.bf16.gmra.mxu0 %v1405
    %v1463 = vpop.f32.mrf.mxu0
    %v1464 = vadd.f32 0.0, %v1463
    %v1465 = vpop.f32.mrf.mxu0
    %1466 = vdwg.mxu0
    %v1467 = vadd.f32 %v1411, %v1425
    %v1468 = vadd.f32 %v1412, %v1438
    %v1469 = vadd.f32 %v1413, %v1451
    %v1470 = vadd.f32 %v1414, %v1464
    %v1471 = vxor.u32 %v1467, 2147483648
    %v1472 = vxor.u32 %v1468, 2147483648
    %v1473 = vxor.u32 %v1469, 2147483648
    %v1474 = vmul.f32 %v1471, 1.442695
    %v1475 = vpow.pop %v1474
    %v1476 = vmul.f32 %v1472, 1.442695
    %v1477 = vpow.pop %v1476
    %v1478 = vmul.f32 %v1473, 1.442695
    %v1479 = vpow.pop %v1478
    %v1480 = vadd.f32 %v1475, 1.0
    %v1481 = vadd.f32 %v1477, 1.0
    %v1482 = vadd.f32 %v1479, 1.0
    %v1483 = vrcp.pop %v1480
    %v1484 = vmul.f32 %v1480, %v1483
    %v1485 = vsub.f32 1.0, %v1484
    %v1486 = vmul.f32 %v1483, %v1485
    %v1487 = vadd.f32 %v1483, %v1486
    %vm1488 = vweird.f32 %v1480
    %vm1489 = vweird.f32 %v1483
    %vm1490 = vmor %vm1488, %vm1489
    %v1491 = vsel %vm1490, %v1483, %v1487
    %v1492 = vand.u32 2147483647, %v1480
    %vm1493 = vcmp.eq.f32.partialorder %v1492, 8.507059e+37
    %v1494 = vand.u32 %v1480, 2147483648
    %v1495 = vor.u32 1.1754944e-38, %v1494
    %v1496 = vsel %vm1493, %v1495, %v1491
    %v1497 = vmul.f32 1.0, %v1496
    %v1498 = vrcp.pop %v1481
    %v1499 = vmul.f32 %v1481, %v1498
    %v1500 = vsub.f32 1.0, %v1499
    %v1501 = vmul.f32 %v1498, %v1500
    %v1502 = vadd.f32 %v1498, %v1501
    %vm1503 = vweird.f32 %v1481
    %vm1504 = vweird.f32 %v1498
    %vm1505 = vmor %vm1503, %vm1504
    %v1506 = vsel %vm1505, %v1498, %v1502
    %v1507 = vand.u32 2147483647, %v1481
    %vm1508 = vcmp.eq.f32.partialorder %v1507, 8.507059e+37
    %v1509 = vand.u32 %v1481, 2147483648
    %v1510 = vor.u32 1.1754944e-38, %v1509
    %v1511 = vsel %vm1508, %v1510, %v1506
    %v1512 = vmul.f32 1.0, %v1511
    %v1513 = vrcp.pop %v1482
    %v1514 = vmul.f32 %v1482, %v1513
    %v1515 = vsub.f32 1.0, %v1514
    %v1516 = vmul.f32 %v1513, %v1515
    %v1517 = vadd.f32 %v1513, %v1516
    %vm1518 = vweird.f32 %v1482
    %vm1519 = vweird.f32 %v1513
    %vm1520 = vmor %vm1518, %vm1519
    %v1521 = vsel %vm1520, %v1513, %v1517
    %v1522 = vand.u32 2147483647, %v1482
    %vm1523 = vcmp.eq.f32.partialorder %v1522, 8.507059e+37
    %v1524 = vand.u32 %v1482, 2147483648
    %v1525 = vor.u32 1.1754944e-38, %v1524
    %v1526 = vsel %vm1523, %v1525, %v1521
    %v1527 = vmul.f32 1.0, %v1526
    %v1528 = vtanh.pop %v1470
    %v1529 = vmul.f32 %v1512, %v1402
    %v1530 = vmul.f32 %v1497, %v1528
    %v1531 = vadd.f32 %v1529, %v1530
    %v1532 = vtanh.pop %v1531
    %v1533 = vmul.f32 %v1527, %v1532
    %v1534 = vpack.c.bf16 %v1533, %v1533
    %s1535 = scalar_lea.vmem [#allocation10], 24
    %1536 = vst [vmem:[%s1535] sm:$0xf] %v1534
    %s1537 = smul.u32 7, 4
    %s1538 = smul.addr %s1537, 8
    %s1539 = scalar_lea.vmem [#allocation4], %s1538
    %v1540 = vld [vmem:[%s1539] sm:$0xff]
    %v1541 = vld [vmem:[%s1539 + $0x8] sm:$0xff]
    %v1542 = vld [vmem:[%s1539 + $0x10] sm:$0xff]
    %v1543 = vld [vmem:[%s1539 + $0x18] sm:$0xff]
    %1544 = vmatpush.bf16.msra.mxu0 %v606
    %1545 = vmatpush.bf16.msra.mxu0 %v602
    %1546 = vmatpush.bf16.msra.mxu0 %v598
    %1547 = vmatpush.bf16.msra.mxu0 %v594
    %1548 = vmatpush.bf16.msra.mxu0 %v590
    %1549 = vmatpush.bf16.msra.mxu0 %v586
    %1550 = vmatpush.bf16.msra.mxu0 %v582
    %1551 = vmatpush.bf16.msra.mxu0 %v578
    %1552 = vmatmul.bf16.gmra.mxu0 %v1534
    %v1553 = vpop.f32.mrf.mxu0
    %v1554 = vadd.f32 0.0, %v1553
    %v1555 = vpop.f32.mrf.mxu0
    %1556 = vdwg.mxu0
    %1557 = vmatpush.bf16.msra.mxu0 %v607
    %1558 = vmatpush.bf16.msra.mxu0 %v603
    %1559 = vmatpush.bf16.msra.mxu0 %v599
    %1560 = vmatpush.bf16.msra.mxu0 %v595
    %1561 = vmatpush.bf16.msra.mxu0 %v591
    %1562 = vmatpush.bf16.msra.mxu0 %v587
    %1563 = vmatpush.bf16.msra.mxu0 %v583
    %1564 = vmatpush.bf16.msra.mxu0 %v579
    %1565 = vmatmul.bf16.gmra.mxu0 %v1534
    %v1566 = vpop.f32.mrf.mxu0
    %v1567 = vadd.f32 0.0, %v1566
    %v1568 = vpop.f32.mrf.mxu0
    %1569 = vdwg.mxu0
    %1570 = vmatpush.bf16.msra.mxu0 %v608
    %1571 = vmatpush.bf16.msra.mxu0 %v604
    %1572 = vmatpush.bf16.msra.mxu0 %v600
    %1573 = vmatpush.bf16.msra.mxu0 %v596
    %1574 = vmatpush.bf16.msra.mxu0 %v592
    %1575 = vmatpush.bf16.msra.mxu0 %v588
    %1576 = vmatpush.bf16.msra.mxu0 %v584
    %1577 = vmatpush.bf16.msra.mxu0 %v580
    %1578 = vmatmul.bf16.gmra.mxu0 %v1534
    %v1579 = vpop.f32.mrf.mxu0
    %v1580 = vadd.f32 0.0, %v1579
    %v1581 = vpop.f32.mrf.mxu0
    %1582 = vdwg.mxu0
    %1583 = vmatpush.bf16.msra.mxu0 %v609
    %1584 = vmatpush.bf16.msra.mxu0 %v605
    %1585 = vmatpush.bf16.msra.mxu0 %v601
    %1586 = vmatpush.bf16.msra.mxu0 %v597
    %1587 = vmatpush.bf16.msra.mxu0 %v593
    %1588 = vmatpush.bf16.msra.mxu0 %v589
    %1589 = vmatpush.bf16.msra.mxu0 %v585
    %1590 = vmatpush.bf16.msra.mxu0 %v581
    %1591 = vmatmul.bf16.gmra.mxu0 %v1534
    %v1592 = vpop.f32.mrf.mxu0
    %v1593 = vadd.f32 0.0, %v1592
    %v1594 = vpop.f32.mrf.mxu0
    %1595 = vdwg.mxu0
    %v1596 = vadd.f32 %v1540, %v1554
    %v1597 = vadd.f32 %v1541, %v1567
    %v1598 = vadd.f32 %v1542, %v1580
    %v1599 = vadd.f32 %v1543, %v1593
    %v1600 = vxor.u32 %v1596, 2147483648
    %v1601 = vxor.u32 %v1597, 2147483648
    %v1602 = vxor.u32 %v1598, 2147483648
    %v1603 = vmul.f32 %v1600, 1.442695
    %v1604 = vpow.pop %v1603
    %v1605 = vmul.f32 %v1601, 1.442695
    %v1606 = vpow.pop %v1605
    %v1607 = vmul.f32 %v1602, 1.442695
    %v1608 = vpow.pop %v1607
    %v1609 = vadd.f32 %v1604, 1.0
    %v1610 = vadd.f32 %v1606, 1.0
    %v1611 = vadd.f32 %v1608, 1.0
    %v1612 = vrcp.pop %v1609
    %v1613 = vmul.f32 %v1609, %v1612
    %v1614 = vsub.f32 1.0, %v1613
    %v1615 = vmul.f32 %v1612, %v1614
    %v1616 = vadd.f32 %v1612, %v1615
    %vm1617 = vweird.f32 %v1609
    %vm1618 = vweird.f32 %v1612
    %vm1619 = vmor %vm1617, %vm1618
    %v1620 = vsel %vm1619, %v1612, %v1616
    %v1621 = vand.u32 2147483647, %v1609
    %vm1622 = vcmp.eq.f32.partialorder %v1621, 8.507059e+37
    %v1623 = vand.u32 %v1609, 2147483648
    %v1624 = vor.u32 1.1754944e-38, %v1623
    %v1625 = vsel %vm1622, %v1624, %v1620
    %v1626 = vmul.f32 1.0, %v1625
    %v1627 = vrcp.pop %v1610
    %v1628 = vmul.f32 %v1610, %v1627
    %v1629 = vsub.f32 1.0, %v1628
    %v1630 = vmul.f32 %v1627, %v1629
    %v1631 = vadd.f32 %v1627, %v1630
    %vm1632 = vweird.f32 %v1610
    %vm1633 = vweird.f32 %v1627
    %vm1634 = vmor %vm1632, %vm1633
    %v1635 = vsel %vm1634, %v1627, %v1631
    %v1636 = vand.u32 2147483647, %v1610
    %vm1637 = vcmp.eq.f32.partialorder %v1636, 8.507059e+37
    %v1638 = vand.u32 %v1610, 2147483648
    %v1639 = vor.u32 1.1754944e-38, %v1638
    %v1640 = vsel %vm1637, %v1639, %v1635
    %v1641 = vmul.f32 1.0, %v1640
    %v1642 = vrcp.pop %v1611
    %v1643 = vmul.f32 %v1611, %v1642
    %v1644 = vsub.f32 1.0, %v1643
    %v1645 = vmul.f32 %v1642, %v1644
    %v1646 = vadd.f32 %v1642, %v1645
    %vm1647 = vweird.f32 %v1611
    %vm1648 = vweird.f32 %v1642
    %vm1649 = vmor %vm1647, %vm1648
    %v1650 = vsel %vm1649, %v1642, %v1646
    %v1651 = vand.u32 2147483647, %v1611
    %vm1652 = vcmp.eq.f32.partialorder %v1651, 8.507059e+37
    %v1653 = vand.u32 %v1611, 2147483648
    %v1654 = vor.u32 1.1754944e-38, %v1653
    %v1655 = vsel %vm1652, %v1654, %v1650
    %v1656 = vmul.f32 1.0, %v1655
    %v1657 = vtanh.pop %v1599
    %v1658 = vmul.f32 %v1641, %v1531
    %v1659 = vmul.f32 %v1626, %v1657
    %v1660 = vadd.f32 %v1658, %v1659
    %v1661 = vtanh.pop %v1660
    %v1662 = vmul.f32 %v1656, %v1661
    %v1663 = vpack.c.bf16 %v1662, %v1662
    %s1664 = scalar_lea.vmem [#allocation10], 28
    %1665 = vst [vmem:[%s1664] sm:$0xf] %v1663
    %1666 = vst [vmem:[#allocation2] sm:$0xff] %v1662
    %1667 = vst [vmem:[#allocation3] sm:$0xff] %v1660
    %1668 = vst [vmem:[%s5] sm:$0xff] %v1662
    // Predicated region
    $region30: #{lstm_forward.4} parent=1 // pred_check
      _
    $region31: #{lstm_forward.4} parent=1 // pred_check_branch
      %1670 = sbr.rel (0) target = $region33
    $region32: #{lstm_forward.4} parent=1 // pred_region
      %1672 = vsyncadd [#allocation7], 0
      %s1673 = sshll.u32 [#allocation10], 4
      %s1674 = int_to_ptr.vmem [resolvable:$true] %s1673
      %s1675 = sshll.u32 %s4, 4
      %s1676 = int_to_ptr.hbm [resolvable:$true] %s1675
      %1681 = dma.vmem_to_hbm [thread:$0]  %s1674, 512, %s1676, [#allocation7], 64, 64, 4
    $region33: #{lstm_forward.4} parent=1 // pred_fallthru
      _
    // Predicated region
    $region34: #{lstm_forward.4} parent=1 // pred_check
      _
    $region35: #{lstm_forward.4} parent=1 // pred_check_branch
      %1683 = sbr.rel (0) target = $region37
    $region36: #{lstm_forward.4} parent=1 // pred_region
      _
    $region37: #{lstm_forward.4} parent=1 // pred_fallthru
      _
    // Predicated region
    $region38: #{lstm_forward.4} parent=1 // pred_check
      _
    $region39: #{lstm_forward.4} parent=1 // pred_check_branch
      %1685 = sbr.rel (0) target = $region41
    $region40: #{lstm_forward.4} parent=1 // pred_region
      %1687 = dma.done [#allocation7], 512
    $region41: #{lstm_forward.4} parent=1 // pred_fallthru
      _
    // Predicated region
    $region42: #{lstm_forward.4} parent=1 // pred_check
      _
    $region43: #{lstm_forward.4} parent=1 // pred_check_branch
      %1689 = sbr.rel (0) target = $region45
    $region44: #{lstm_forward.4} parent=1 // pred_region
      _
    $region45: #{lstm_forward.4} parent=1 // pred_fallthru
      _
    %1690 = vsyncpa [#allocation6], 1
    %1691 = vsyncpa [#allocation9], 1
    %1692 = vsyncpa [#allocation7], 1

</llo_original>
